<compile_context>
chip_gen: v6e
topology: v6e:2x2x1
jax: 0.10.0
libtpu: 0.0.40
codegen_flags: <defaults>
</compile_context>

<pallas_src>
import math
from functools import partial

import jax
import jax.numpy as jnp
from jax import lax
from jax.experimental import pallas as pl
from jax.experimental.pallas import tpu as pltpu

NEG_SLOPE = 0.01            # F.leaky_relu default negative slope
LN_EPS = 1e-5               # torch.nn.LayerNorm default eps
NEG_INF = float("-inf")
# MXU operand dtypes (f32 accumulation everywhere).  bf16 halves weight /
# activation DMA bytes and doubles MXU rate on v6e/v7x; flip both to
# jnp.float32 for exact reference numerics.
MXU_DTYPE = jnp.bfloat16
WEIGHT_DTYPE = jnp.bfloat16


# ---------------------------------------------------------------------------
# Row/column-tiled linear (+ optional fused activation)
# ---------------------------------------------------------------------------
def _linear_kernel(x_ref, w_ref, b_ref, o_ref, *, activation):
    y = jnp.dot(x_ref[...].astype(MXU_DTYPE), w_ref[...].astype(MXU_DTYPE),
                preferred_element_type=jnp.float32) + b_ref[...]
    if activation == "gelu":
        # TODO(synk): BART's ACT2FN['gelu'] is erf-gelu; tanh approximation used
        # here for robust Mosaic lowering (ulp-level difference).
        y = jax.nn.gelu(y, approximate=True)
    o_ref[...] = y


def pallas_linear(x, w, b, activation="none", block_rows=512, block_cols=2048):
    """y = act(x @ w + b).  w is stored as (din, dout) == torch weight.T."""
    shp = x.shape
    x2 = x.reshape(-1, shp[-1])
    n, din = x2.shape
    dout = w.shape[1]
    bm = n if n <= block_rows else block_rows
    bn = dout if dout <= block_cols else block_cols
    y = pl.pallas_call(
        partial(_linear_kernel, activation=activation),
        out_shape=jax.ShapeDtypeStruct((n, dout), jnp.float32),
        grid=(pl.cdiv(n, bm), pl.cdiv(dout, bn)),
        in_specs=[pl.BlockSpec((bm, din), lambda i, j: (i, 0)),
                  pl.BlockSpec((din, bn), lambda i, j: (0, j)),
                  pl.BlockSpec((1, bn), lambda i, j: (0, j))],
        out_specs=pl.BlockSpec((bm, bn), lambda i, j: (i, j)),
        compiler_params=pltpu.CompilerParams(
            dimension_semantics=("parallel", "parallel")),
    )(x2, w, b.reshape(1, -1))
    return y.reshape(shp[:-1] + (dout,))


# ---------------------------------------------------------------------------
# LayerNorm kernels (dedicated LN + fused residual-add LN)
# ---------------------------------------------------------------------------
def _ln_kernel(x_ref, g_ref, b_ref, o_ref, *, eps):
    y = x_ref[...]
    mu = jnp.mean(y, axis=-1, keepdims=True)
    d = y - mu
    var = jnp.mean(d * d, axis=-1, keepdims=True)
    o_ref[...] = d * lax.rsqrt(var + eps) * g_ref[...] + b_ref[...]


def _add_ln_kernel(x_ref, r_ref, g_ref, b_ref, o_ref, *, eps):
    y = x_ref[...] + r_ref[...]
    mu = jnp.mean(y, axis=-1, keepdims=True)
    d = y - mu
    var = jnp.mean(d * d, axis=-1, keepdims=True)
    o_ref[...] = d * lax.rsqrt(var + eps) * g_ref[...] + b_ref[...]


def pallas_layernorm(x, gamma, beta, eps=LN_EPS, block_rows=512):
    shp = x.shape
    x2 = x.reshape(-1, shp[-1])
    n, d = x2.shape
    bm = n if n <= block_rows else block_rows
    y = pl.pallas_call(
        partial(_ln_kernel, eps=eps),
        out_shape=jax.ShapeDtypeStruct((n, d), jnp.float32),
        grid=(pl.cdiv(n, bm),),
        in_specs=[pl.BlockSpec((bm, d), lambda i: (i, 0)),
                  pl.BlockSpec((1, d), lambda i: (0, 0)),
                  pl.BlockSpec((1, d), lambda i: (0, 0))],
        out_specs=pl.BlockSpec((bm, d), lambda i: (i, 0)),
        compiler_params=pltpu.CompilerParams(dimension_semantics=("parallel",)),
    )(x2, gamma.reshape(1, -1), beta.reshape(1, -1))
    return y.reshape(shp)


def pallas_add_layernorm(x, residual, gamma, beta, eps=LN_EPS, block_rows=512):
    shp = x.shape
    x2 = x.reshape(-1, shp[-1])
    r2 = residual.reshape(-1, shp[-1])
    n, d = x2.shape
    bm = n if n <= block_rows else block_rows
    y = pl.pallas_call(
        partial(_add_ln_kernel, eps=eps),
        out_shape=jax.ShapeDtypeStruct((n, d), jnp.float32),
        grid=(pl.cdiv(n, bm),),
        in_specs=[pl.BlockSpec((bm, d), lambda i: (i, 0)),
                  pl.BlockSpec((bm, d), lambda i: (i, 0)),
                  pl.BlockSpec((1, d), lambda i: (0, 0)),
                  pl.BlockSpec((1, d), lambda i: (0, 0))],
        out_specs=pl.BlockSpec((bm, d), lambda i: (i, 0)),
        compiler_params=pltpu.CompilerParams(dimension_semantics=("parallel",)),
    )(x2, r2, gamma.reshape(1, -1), beta.reshape(1, -1))
    return y.reshape(shp)


# ---------------------------------------------------------------------------
# Decoder self-attention kernel (per batch x q-tile, heads packed,
# single lane-dense (TQ, E) context store)
# ---------------------------------------------------------------------------
def _self_attn_kernel(q_ref, k_ref, v_ref, kpm_ref, o_ref, p_ref=None,
                      *, num_heads, causal):
    tq = q_ref.shape[2]
    s_len = k_ref.shape[2]

    # Combined additive mask built once per program (hoisted out of head loop).
    neg = jnp.where(kpm_ref[0] > 0.0, NEG_INF, 0.0)                   # (1, S)
    if causal:
        row = (lax.broadcasted_iota(jnp.int32, (tq, s_len), 0)
               + pl.program_id(1) * tq)
        col = lax.broadcasted_iota(jnp.int32, (tq, s_len), 1)
        mask = jnp.where(col > row, NEG_INF, 0.0) + neg               # (TQ, S)
    else:
        mask = neg

    outs = []
    # TODO(synk): for large head counts switch to lax.fori_loop over heads with
    # a (TQ, E) VMEM scratch to bound per-head live ranges.
    for h in range(num_heads):
        # scaling already folded into the q weights at parameter-prep time
        s = lax.dot_general(q_ref[0, h], k_ref[0, h],
                            (((1,), (1,)), ((), ())),
                            preferred_element_type=jnp.float32)       # (TQ, S)
        s = s + mask
        m = jnp.maximum(jnp.max(s, axis=-1, keepdims=True), -1e30)    # NaN guard
        ex = jnp.exp(s - m)
        denom = jnp.maximum(jnp.sum(ex, axis=-1, keepdims=True), 1e-30)
        p = ex * pl.reciprocal(denom, approx=True)
        if p_ref is not None:
            p_ref[0, h] = p
        outs.append(jnp.dot(p.astype(v_ref.dtype), v_ref[0, h],
                            preferred_element_type=jnp.float32))
    o_ref[0] = jnp.concatenate(outs, axis=-1)        # one lane-dense store


def pallas_self_attention(q_h, k_h, v_h, kpm, causal, output_attentions=False,
                          block_q=256):
    B, H, T, D = q_h.shape
    S = k_h.shape[2]
    E = H * D
    TQ = T if T <= block_q else block_q
    grid = (B, pl.cdiv(T, TQ))
    kernel = partial(_self_attn_kernel, num_heads=H, causal=causal)
    in_specs = [pl.BlockSpec((1, H, TQ, D), lambda b, t: (b, 0, t, 0)),
                pl.BlockSpec((1, H, S, D), lambda b, t: (b, 0, 0, 0)),
                pl.BlockSpec((1, H, S, D), lambda b, t: (b, 0, 0, 0)),
                pl.BlockSpec((1, 1, S), lambda b, t: (b, 0, 0))]
    ctx_spec = pl.BlockSpec((1, TQ, E), lambda b, t: (b, t, 0))
    cparams = pltpu.CompilerParams(
        dimension_semantics=("parallel", "parallel"))
    if output_attentions:
        ctx, probs = pl.pallas_call(
            kernel,
            out_shape=(jax.ShapeDtypeStruct((B, T, E), jnp.float32),
                       jax.ShapeDtypeStruct((B, H, T, S), jnp.float32)),
            grid=grid, in_specs=in_specs,
            out_specs=(ctx_spec,
                       pl.BlockSpec((1, H, TQ, S), lambda b, t: (b, 0, t, 0))),
            compiler_params=cparams,
        )(q_h, k_h, v_h, kpm)
        return ctx, probs
    ctx = pl.pallas_call(
        kernel,
        out_shape=jax.ShapeDtypeStruct((B, T, E), jnp.float32),
        grid=grid, in_specs=in_specs, out_specs=ctx_spec,
        compiler_params=cparams,
    )(q_h, k_h, v_h, kpm)
    return ctx, None


# ---------------------------------------------------------------------------
# HGAT cross-attention kernel: rank-1 score (ai + bj) arrives precomputed,
# kernel only streams V|E (per batch x q-tile, heads packed)
# ---------------------------------------------------------------------------
def _hgat_attn_kernel(ai_ref, bj_ref, ve_ref, kpm_ref, o_ref, *, num_heads):
    neg = jnp.where(kpm_ref[0] > 0.0, NEG_INF, 0.0)                   # (1, S)
    outs = []
    for h in range(num_heads):
        s = ai_ref[0, h] + bj_ref[0, h]                # (TQ,1)+(1,S) -> (TQ,S)
        s = jnp.where(s >= 0.0, s, NEG_SLOPE * s)      # leaky_relu
        s = s + neg                                    # key padding mask
        m = jnp.maximum(jnp.max(s, axis=-1, keepdims=True), -1e30)
        ex = jnp.exp(s - m)
        denom = jnp.maximum(jnp.sum(ex, axis=-1, keepdims=True), 1e-30)
        p = ex * pl.reciprocal(denom, approx=True)
        outs.append(jnp.dot(p.astype(ve_ref.dtype), ve_ref[0, h],
                            preferred_element_type=jnp.float32))
    o_ref[0] = jnp.concatenate(outs, axis=-1)          # one lane-dense store


def pallas_hgat_attention(ai, bj, ve, kpm, block_q=256):
    B, H, T, _ = ai.shape
    S, D = ve.shape[2], ve.shape[3]
    E = H * D
    TQ = T if T <= block_q else block_q
    return pl.pallas_call(
        partial(_hgat_attn_kernel, num_heads=H),
        out_shape=jax.ShapeDtypeStruct((B, T, E), jnp.float32),
        grid=(B, pl.cdiv(T, TQ)),
        in_specs=[pl.BlockSpec((1, H, TQ, 1), lambda b, t: (b, 0, t, 0)),
                  pl.BlockSpec((1, H, 1, S), lambda b, t: (b, 0, 0, 0)),
                  pl.BlockSpec((1, H, S, D), lambda b, t: (b, 0, 0, 0)),
                  pl.BlockSpec((1, 1, S), lambda b, t: (b, 0, 0))],
        out_specs=pl.BlockSpec((1, TQ, E), lambda b, t: (b, t, 0)),
        compiler_params=pltpu.CompilerParams(
            dimension_semantics=("parallel", "parallel")),
    )(ai, bj, ve, kpm)


# ---------------------------------------------------------------------------
# Module-level glue (layout plumbing only; all compute is in Pallas)
# ---------------------------------------------------------------------------
def to_heads(x, num_heads):
    """(L, B, E) -> (B, H, L, D); matches torch _shape(...) grouped per batch."""
    L, B, E = x.shape
    D = E // num_heads
    return jnp.transpose(x.reshape(L, B, num_heads, D), (1, 2, 0, 3))


def self_attention(params, query, key_padding_mask, causal, num_heads,
                   output_attentions=False):
    """BART SelfAttention, self path, fresh cache, eval mode (dropout = 0)."""
    T, B, E = query.shape
    H = num_heads

    qkv = pallas_linear(query, params["qkv_w"], params["qkv_b"])       # (T,B,3E)
    q, k, v = qkv[..., :E], qkv[..., E:2 * E], qkv[..., 2 * E:]
    q_h, k_h, v_h = to_heads(q, H), to_heads(k, H), to_heads(v, H)     # (B,H,T,D)

    kpm = (jnp.zeros((B, 1, T), jnp.float32) if key_padding_mask is None
           else key_padding_mask.astype(jnp.float32).reshape(B, 1, T))

    ctx, probs = pallas_self_attention(
        q_h.astype(MXU_DTYPE), k_h.astype(MXU_DTYPE), v_h.astype(MXU_DTYPE),
        kpm, causal, output_attentions=output_attentions)

    attn_out = jnp.transpose(ctx, (1, 0, 2))                           # (T,B,E)
    attn_out = pallas_linear(attn_out, params["out_w"], params["out_b"])

    cache = {"prev_key": k_h, "prev_value": v_h,
             "prev_key_padding_mask": key_padding_mask}
    return attn_out, (probs if output_attentions else None), cache


def hgat_cross_attention(params, query, entity, key, key_padding_mask, num_heads):
    """KGBART HGATSelfAttention, encoder_decoder path, fresh cache, eval mode."""
    T, B, E = query.shape
    Le, S = entity.shape[0], key.shape[0]
    assert Le == T and S == T, "reference layer requires tgt == entity == src len"
    H = num_heads
    D = E // H
    half = E // 2

    # TODO(synk): the reference's external-graph branch (exent_proj/exrel_proj,
    # attn_fc softmax over ex_* and `we = torch.bmm(...)`) is dead code that
    # fails its own shape asserts and never reaches the output; omitted.

    # Rank-1 GAT score folded into the projections: the extra output columns
    # deliver ai/bj precomputed; q_proj's main columns are not needed at all
    # (they only fed the score in the reference).
    ai_q = pallas_linear(query, params["ai_q_w"], params["ai_q_b"])    # (T,B,H)
    kva = pallas_linear(key, params["kva_w"], params["kva_b"])         # (S,B,E+H)
    ea = pallas_linear(entity, params["ea_w"], params["ea_b"])         # (T,B,half+2H)

    k = kva[..., :half]
    v = kva[..., half:E]
    bj_k = kva[..., E:]
    e = ea[..., :half]
    ai_e = ea[..., half:half + H]
    bj_e = ea[..., half + H:]

    ai = ai_q + ai_e                                     # (T,B,H), incl. attn_fc bias
    bj = bj_k + bj_e                                     # (S,B,H)
    ai_bh = jnp.transpose(ai, (1, 2, 0))[..., None]      # (B,H,T,1)
    bj_bh = jnp.transpose(bj, (1, 2, 0))[:, :, None, :]  # (B,H,1,S)

    ve_h = to_heads(jnp.concatenate([v, e], axis=-1), H).astype(MXU_DTYPE)

    kpm = (jnp.zeros((B, 1, S), jnp.float32) if key_padding_mask is None
           else key_padding_mask.astype(jnp.float32).reshape(B, 1, S))

    ctx = pallas_hgat_attention(ai_bh, bj_bh, ve_h, kpm)               # (B,T,E)
    attn_out = jnp.transpose(ctx, (1, 0, 2))                           # (T,B,E)
    attn_out = pallas_linear(attn_out, params["out_w"], params["out_b"])

    cache = {"prev_key": k.reshape(B, H, -1, D),
             "prev_value": v.reshape(B, H, -1, D),
             "prev_key_padding_mask": None}
    return attn_out, cache


def decoder_gat_layer_forward(params, x, entity_input, encoder_hidden_states,
                              encoder_attn_mask=None, causal_mask=None,
                              decoder_padding_mask=None, *, num_heads,
                              normalize_before=False, output_attentions=False):
    """DecoderGATLayer.forward (eval mode: all dropouts are identity)."""
    # TODO(synk): a non-None causal_mask is interpreted as "apply standard
    # future masking" (generated in-kernel via iota); arbitrary additive masks
    # are not streamed.
    causal = causal_mask is not None
    layer_state = {}

    # -------- decoder self-attention block --------
    residual = x
    h = (pallas_layernorm(x, params["self_attn_ln"]["g"], params["self_attn_ln"]["b"])
         if normalize_before else x)
    attn_out, self_attn_weights, self_cache = self_attention(
        params["self_attn"], h, key_padding_mask=decoder_padding_mask,
        causal=causal, num_heads=num_heads, output_attentions=output_attentions)
    layer_state["self"] = self_cache
    if normalize_before:
        x = residual + attn_out
    else:
        x = pallas_add_layernorm(attn_out, residual,
                                 params["self_attn_ln"]["g"],
                                 params["self_attn_ln"]["b"])

    # -------- knowledge-graph GAT cross-attention block --------
    residual = x
    h = (pallas_layernorm(x, params["encoder_attn_ln"]["g"],
                          params["encoder_attn_ln"]["b"])
         if normalize_before else x)
    gat_out, gat_cache = hgat_cross_attention(
        params["gat"], h, entity_input, encoder_hidden_states,
        key_padding_mask=encoder_attn_mask, num_heads=num_heads)
    layer_state["encoder_decoder"] = gat_cache
    if normalize_before:
        x = residual + gat_out
    else:
        x = pallas_add_layernorm(gat_out, residual,
                                 params["encoder_attn_ln"]["g"],
                                 params["encoder_attn_ln"]["b"])

    # -------- feed-forward block --------
    residual = x
    h = (pallas_layernorm(x, params["final_ln"]["g"], params["final_ln"]["b"])
         if normalize_before else x)
    h = pallas_linear(h, params["fc1"]["w"], params["fc1"]["b"], activation="gelu")
    h = pallas_linear(h, params["fc2"]["w"], params["fc2"]["b"])
    if normalize_before:
        x = residual + h
    else:
        x = pallas_add_layernorm(h, residual,
                                 params["final_ln"]["g"], params["final_ln"]["b"])

    return x, self_attn_weights, layer_state


# ---------------------------------------------------------------------------
# Parameters: torch-like raw init + one-time preparation (fusion, score
# folding, scaling fold, bf16 weight storage)
# ---------------------------------------------------------------------------
def _init_linear(key, din, dout):
    kw, kb = jax.random.split(key)
    bound = 1.0 / math.sqrt(din)
    return {"w": jax.random.uniform(kw, (din, dout), jnp.float32, -bound, bound),
            "b": jax.random.uniform(kb, (dout,), jnp.float32, -bound, bound)}


def init_params(key, embed_dim, num_heads, ffn_dim):
    assert embed_dim % num_heads == 0 and embed_dim % 2 == 0
    D = embed_dim // num_heads
    half = embed_dim // 2
    ks = jax.random.split(key, 12)
    self_attn = {"q_proj": _init_linear(ks[0], embed_dim, embed_dim),
                 "k_proj": _init_linear(ks[1], embed_dim, embed_dim),
                 "v_proj": _init_linear(ks[2], embed_dim, embed_dim),
                 "out_proj": _init_linear(ks[3], embed_dim, embed_dim)}
    gat = {"q_proj": _init_linear(ks[4], embed_dim, half),
           "k_proj": _init_linear(ks[5], embed_dim, half),
           "v_proj": _init_linear(ks[6], embed_dim, half),
           "e_proj": _init_linear(ks[7], embed_dim, half),
           "out_proj": _init_linear(ks[8], embed_dim, embed_dim),
           "attn_fc": _init_linear(ks[9], 3 * D, 1)}
    ones = jnp.ones((embed_dim,), jnp.float32)
    zeros = jnp.zeros((embed_dim,), jnp.float32)
    return {"self_attn": self_attn, "gat": gat,
            "self_attn_ln": {"g": ones, "b": zeros},
            "encoder_attn_ln": {"g": ones, "b": zeros},
            "final_ln": {"g": ones, "b": zeros},
            "fc1": _init_linear(ks[10], embed_dim, ffn_dim),
            "fc2": _init_linear(ks[11], ffn_dim, embed_dim)}


def prepare_params(raw, num_heads):
    """Fuse projections, fold softmax scaling and the GAT rank-1 score, store
    linear weights bf16 (halved HBM/DMA, biases stay f32)."""
    E = raw["self_attn"]["q_proj"]["w"].shape[0]
    H = num_heads
    D = E // H
    half = E // 2
    scaling = D ** -0.5

    sa = raw["self_attn"]
    qkv_w = jnp.concatenate([sa["q_proj"]["w"] * scaling,
                             sa["k_proj"]["w"], sa["v_proj"]["w"]], axis=1)
    qkv_b = jnp.concatenate([sa["q_proj"]["b"] * scaling,
                             sa["k_proj"]["b"], sa["v_proj"]["b"]], axis=0)

    g = raw["gat"]
    wfc = g["attn_fc"]["w"][:, 0]                       # (3D,) = [w_qe; w_ke; w_edge]
    b_fc = g["attn_fc"]["b"][0]
    w_qe, w_ke, w_ed = wfc[:D], wfc[D:2 * D], wfc[2 * D:]
    eyeH = jnp.eye(H, dtype=jnp.float32)
    A = jnp.kron(eyeH, w_qe[:, None])                   # (E, H): per-head w_qe
    Bm = jnp.kron(eyeH, w_ke[:, None])                  # (E, H): per-head w_ke
    Ce = jnp.kron(eyeH, w_ed[:, None])                  # (E, H): per-head w_edge

    qw, qb = g["q_proj"]["w"], g["q_proj"]["b"]
    kw, kb = g["k_proj"]["w"], g["k_proj"]["b"]
    vw, vb = g["v_proj"]["w"], g["v_proj"]["b"]
    ew, eb = g["e_proj"]["w"], g["e_proj"]["b"]

    # ai[b,h,i] = qe_h[i].w_qe + ent_h[i].w_edge + b_fc
    # bj[b,h,j] = ke_h[j].w_ke - ent_h[j].w_edge
    ai_q_w = qw @ A[:half]                              # (E, H)
    ai_q_b = qb @ A[:half] + b_fc
    kva_w = jnp.concatenate([kw, vw, kw @ Bm[:half]], axis=1)            # (E, E+H)
    kva_b = jnp.concatenate([kb, vb, kb @ Bm[:half]], axis=0)
    ea_w = jnp.concatenate([ew, ew @ A[half:] + Ce, ew @ Bm[half:] - Ce],
                           axis=1)                                       # (E, half+2H)
    ea_b = jnp.concatenate([eb, eb @ A[half:], eb @ Bm[half:]], axis=0)

    def wcast(w):
        return w.astype(WEIGHT_DTYPE)

    return {
        "self_attn": {"qkv_w": wcast(qkv_w), "qkv_b": qkv_b,
                      "out_w": wcast(sa["out_proj"]["w"]),
                      "out_b": sa["out_proj"]["b"]},
        "gat": {"ai_q_w": wcast(ai_q_w), "ai_q_b": ai_q_b,
                "kva_w": wcast(kva_w), "kva_b": kva_b,
                "ea_w": wcast(ea_w), "ea_b": ea_b,
                "out_w": wcast(g["out_proj"]["w"]),
                "out_b": g["out_proj"]["b"]},
        "self_attn_ln": raw["self_attn_ln"],
        "encoder_attn_ln": raw["encoder_attn_ln"],
        "final_ln": raw["final_ln"],
        "fc1": {"w": wcast(raw["fc1"]["w"]), "b": raw["fc1"]["b"]},
        "fc2": {"w": wcast(raw["fc2"]["w"]), "b": raw["fc2"]["b"]},
    }


if __name__ == "__main__":
    EMBED_DIM = 32
    NUM_HEADS = 2   # reference's attn_fc (3*head_dim) usage implies head_dim == E/2
    SEQ = 8         # decoder len == entity len == encoder len (only consistent config)
    BATCH = 2
    FFN_DIM = 64

    root = jax.random.PRNGKey(0)
    kp, kx, ke_, kh = jax.random.split(root, 4)
    raw_params = init_params(kp, EMBED_DIM, NUM_HEADS, FFN_DIM)
    params = prepare_params(raw_params, NUM_HEADS)

    x = jax.random.normal(kx, (SEQ, BATCH, EMBED_DIM), jnp.float32)
    entity = jax.random.normal(ke_, (SEQ, BATCH, EMBED_DIM), jnp.float32)
    enc_hidden = jax.random.normal(kh, (SEQ, BATCH, EMBED_DIM), jnp.float32)

    causal = jnp.where(jnp.triu(jnp.ones((SEQ, SEQ), bool), k=1),
                       -jnp.inf, 0.0).astype(jnp.float32)
    dec_pad = jnp.zeros((BATCH, SEQ), jnp.float32).at[1, SEQ - 1].set(1.0)
    enc_pad = jnp.zeros((BATCH, SEQ), jnp.float32).at[0, SEQ - 1].set(1.0)

    fwd = jax.jit(partial(decoder_gat_layer_forward, num_heads=NUM_HEADS,
                          output_attentions=True))
    out, self_attn_weights, layer_state = fwd(
        params, x, entity, enc_hidden,
        encoder_attn_mask=enc_pad, causal_mask=causal,
        decoder_padding_mask=dec_pad)

    jax.block_until_ready(out)
    jax.block_until_ready(self_attn_weights)
    assert out.shape == (SEQ, BATCH, EMBED_DIM)
    assert self_attn_weights.shape == (BATCH, NUM_HEADS, SEQ, SEQ)
    assert bool(jnp.all(jnp.isfinite(out)))
    print("KERNEL_OK")
</pallas_src>

<mosaic_0001>
module attributes {stable_mosaic.version = 11 : i64} {
  func.func @_linear_kernel(%arg0: i32, %arg1: i32, %arg2: memref<16x32xf32, #tpu.memory_space<vmem>>, %arg3: memref<32x96xbf16, #tpu.memory_space<vmem>>, %arg4: memref<1x96xf32, #tpu.memory_space<vmem>>, %arg5: memref<16x96xf32, #tpu.memory_space<vmem>>) attributes {dimension_semantics = [#tpu.dimension_semantics<parallel>, #tpu.dimension_semantics<parallel>], iteration_bounds = array<i64: 1, 1>, scalar_prefetch = 0 : i64, scratch_operands = 0 : i64, tpu.core_type = #tpu.core_type<tc>, window_params = [{transform_indices = @transform_0, window_bounds = array<i64: 16, 32>}, {transform_indices = @transform_1, window_bounds = array<i64: 32, 96>}, {transform_indices = @transform_2, window_bounds = array<i64: 1, 96>}, {transform_indices = @transform_3, window_bounds = array<i64: 16, 96>}]} {
    %c0 = arith.constant 0 : index
    %c0_0 = arith.constant 0 : index
    %0 = vector.load %arg2[%c0, %c0_0] : memref<16x32xf32, #tpu.memory_space<vmem>>, vector<16x32xf32>
    %1 = arith.truncf %0 : vector<16x32xf32> to vector<16x32xbf16>
    %c0_1 = arith.constant 0 : index
    %c0_2 = arith.constant 0 : index
    %2 = vector.load %arg3[%c0_1, %c0_2] : memref<32x96xbf16, #tpu.memory_space<vmem>>, vector<32x96xbf16>
    %cst = arith.constant dense<0.000000e+00> : vector<16x96xf32>
    %3 = tpu.matmul %1, %2, %cst {dimension_numbers = #tpu.dot_dimension_numbers<[1], [0], [0], [1], [0, 0, 1, 1], [], []>} : vector<16x32xbf16>, vector<32x96xbf16>, vector<16x96xf32> -> vector<16x96xf32>
    %c0_3 = arith.constant 0 : index
    %c0_4 = arith.constant 0 : index
    %4 = vector.load %arg4[%c0_3, %c0_4] : memref<1x96xf32, #tpu.memory_space<vmem>>, vector<1x96xf32>
    %5 = vector.broadcast %4 : vector<1x96xf32> to vector<16x96xf32>
    %6 = arith.addf %3, %5 : vector<16x96xf32>
    %c0_5 = arith.constant 0 : index
    %c0_6 = arith.constant 0 : index
    %7 = vector.load %arg5[%c0_5, %c0_6] : memref<16x96xf32, #tpu.memory_space<vmem>>, vector<16x96xf32>
    tpu.vector_store %arg5[%c0_5, %c0_6], %6 {strides = array<i32>} : memref<16x96xf32, #tpu.memory_space<vmem>>, vector<16x96xf32>,
    return
  }
  func.func @transform_0(%arg0: i32, %arg1: i32) -> (i32, i32) {
    %c0_i32 = arith.constant 0 : i32
    %c0_i32_0 = arith.constant 0 : i32
    return %arg0, %c0_i32 : i32, i32
  }
  func.func @transform_1(%arg0: i32, %arg1: i32) -> (i32, i32) {
    %c0_i32 = arith.constant 0 : i32
    %c0_i32_0 = arith.constant 0 : i32
    return %c0_i32, %arg1 : i32, i32
  }
  func.func @transform_2(%arg0: i32, %arg1: i32) -> (i32, i32) {
    %c0_i32 = arith.constant 0 : i32
    %c0_i32_0 = arith.constant 0 : i32
    return %c0_i32, %arg1 : i32, i32
  }
  func.func @transform_3(%arg0: i32, %arg1: i32) -> (i32, i32) {
    %c0_i32 = arith.constant 0 : i32
    return %arg0, %arg1 : i32, i32
  }
}

module attributes {stable_mosaic.version = 11 : i64} {
  func.func @_self_attn_kernel(%arg0: i32, %arg1: i32, %arg2: memref<1x2x8x16xbf16, #tpu.memory_space<vmem>>, %arg3: memref<1x2x8x16xbf16, #tpu.memory_space<vmem>>, %arg4: memref<1x2x8x16xbf16, #tpu.memory_space<vmem>>, %arg5: memref<1x1x8xf32, #tpu.memory_space<vmem>>, %arg6: memref<1x8x32xf32, #tpu.memory_space<vmem>>, %arg7: memref<1x2x8x8xf32, #tpu.memory_space<vmem>>) attributes {dimension_semantics = [#tpu.dimension_semantics<parallel>, #tpu.dimension_semantics<parallel>], iteration_bounds = array<i64: 2, 1>, scalar_prefetch = 0 : i64, scratch_operands = 0 : i64, tpu.core_type = #tpu.core_type<tc>, window_params = [{transform_indices = @transform_0, window_bounds = array<i64: 1, 2, 8, 16>}, {transform_indices = @transform_1, window_bounds = array<i64: 1, 2, 8, 16>}, {transform_indices = @transform_2, window_bounds = array<i64: 1, 2, 8, 16>}, {transform_indices = @transform_3, window_bounds = array<i64: 1, 1, 8>}, {transform_indices = @transform_4, window_bounds = array<i64: 1, 8, 32>}, {transform_indices = @transform_5, window_bounds = array<i64: 1, 2, 8, 8>}]} {
    %c0 = arith.constant 0 : index
    %c0_0 = arith.constant 0 : index
    %c0_1 = arith.constant 0 : index
    %0 = vector.load %arg5[%c0, %c0_0, %c0_1] : memref<1x1x8xf32, #tpu.memory_space<vmem>>, vector<1x1x8xf32>
    %1 = vector.shape_cast %0 : vector<1x1x8xf32> to vector<1x8xf32>
    %cst = arith.constant 0.000000e+00 : f32
    %2 = vector.broadcast %cst : f32 to vector<1x8xf32>
    %3 = arith.cmpf ogt, %1, %2 : vector<1x8xf32>
    %cst_2 = arith.constant 0xFF800000 : f32
    %cst_3 = arith.constant 0.000000e+00 : f32
    %4 = vector.broadcast %cst_2 : f32 to vector<1x8xf32>
    %5 = vector.broadcast %cst_3 : f32 to vector<1x8xf32>
    %6 = arith.select %3, %4, %5 : vector<1x8xi1>, vector<1x8xf32>
    %7 = tpu.iota {dimensions = array<i32: 0>} : vector<8x8xi32>
    %c8_i32 = arith.constant 8 : i32
    %8 = arith.muli %arg1, %c8_i32 : i32
    %9 = vector.broadcast %8 : i32 to vector<8x8xi32>
    %10 = arith.addi %7, %9 : vector<8x8xi32>
    %11 = tpu.iota {dimensions = array<i32: 1>} : vector<8x8xi32>
    %12 = arith.cmpi sgt, %11, %10 : vector<8x8xi32>
    %cst_4 = arith.constant 0xFF800000 : f32
    %cst_5 = arith.constant 0.000000e+00 : f32
    %13 = vector.broadcast %cst_4 : f32 to vector<8x8xf32>
    %14 = vector.broadcast %cst_5 : f32 to vector<8x8xf32>
    %15 = arith.select %12, %13, %14 : vector<8x8xi1>, vector<8x8xf32>
    %16 = vector.broadcast %6 : vector<1x8xf32> to vector<8x8xf32>
    %17 = arith.addf %15, %16 : vector<8x8xf32>
    %c0_6 = arith.constant 0 : index
    %c0_7 = arith.constant 0 : index
    %c0_8 = arith.constant 0 : index
    %c0_9 = arith.constant 0 : index
    %18 = vector.load %arg2[%c0_6, %c0_7, %c0_8, %c0_9] : memref<1x2x8x16xbf16, #tpu.memory_space<vmem>>, vector<1x1x8x16xbf16>
    %19 = vector.shape_cast %18 : vector<1x1x8x16xbf16> to vector<8x16xbf16>
    %c0_10 = arith.constant 0 : index
    %c0_11 = arith.constant 0 : index
    %c0_12 = arith.constant 0 : index
    %c0_13 = arith.constant 0 : index
    %20 = vector.load %arg3[%c0_10, %c0_11, %c0_12, %c0_13] : memref<1x2x8x16xbf16, #tpu.memory_space<vmem>>, vector<1x1x8x16xbf16>
    %21 = vector.shape_cast %20 : vector<1x1x8x16xbf16> to vector<8x16xbf16>
    %cst_14 = arith.constant dense<0.000000e+00> : vector<8x8xf32>
    %22 = tpu.matmul %19, %21, %cst_14 {dimension_numbers = #tpu.dot_dimension_numbers<[1], [1], [0], [0], [0, 0, 1, 0], [], []>} : vector<8x16xbf16>, vector<8x16xbf16>, vector<8x8xf32> -> vector<8x8xf32>
    %23 = arith.addf %22, %17 : vector<8x8xf32>
    %cst_15 = arith.constant dense<0xFF800000> : vector<8xf32>
    %24 = vector.multi_reduction <maximumf>, %23, %cst_15 [1] : vector<8x8xf32> to vector<8xf32>
    %25 = vector.shape_cast %24 : vector<8xf32> to vector<8x1xf32>
    %cst_16 = arith.constant -1.000000e+30 : f32
    %26 = vector.broadcast %cst_16 : f32 to vector<8x1xf32>
    %27 = arith.maximumf %25, %26 : vector<8x1xf32>
    %28 = vector.broadcast %27 : vector<8x1xf32> to vector<8x8xf32>
    %29 = arith.subf %23, %28 : vector<8x8xf32>
    %30 = math.exp %29 : vector<8x8xf32>
    %cst_17 = arith.constant dense<0.000000e+00> : vector<8xf32>
    %31 = vector.multi_reduction <add>, %30, %cst_17 [1] : vector<8x8xf32> to vector<8xf32>
    %32 = vector.shape_cast %31 : vector<8xf32> to vector<8x1xf32>
    %cst_18 = arith.constant 1.000000e-30 : f32
    %33 = vector.broadcast %cst_18 : f32 to vector<8x1xf32>
    %34 = arith.maximumf %32, %33 : vector<8x1xf32>
    %35 = tpu.reciprocal %34 {approx = true} : vector<8x1xf32> -> vector<8x1xf32>
    %36 = vector.broadcast %35 : vector<8x1xf32> to vector<8x8xf32>
    %37 = arith.mulf %30, %36 : vector<8x8xf32>
    %c0_19 = arith.constant 0 : index
    %c0_20 = arith.constant 0 : index
    %c0_21 = arith.constant 0 : index
    %c0_22 = arith.constant 0 : index
    %38 = vector.load %arg7[%c0_19, %c0_20, %c0_21, %c0_22] : memref<1x2x8x8xf32, #tpu.memory_space<vmem>>, vector<1x1x8x8xf32>
    %39 = vector.shape_cast %38 : vector<1x1x8x8xf32> to vector<8x8xf32>
    %40 = vector.shape_cast %37 : vector<8x8xf32> to vector<1x1x8x8xf32>
    tpu.vector_store %arg7[%c0_19, %c0_20, %c0_21, %c0_22], %40 {strides = array<i32>} : memref<1x2x8x8xf32, #tpu.memory_space<vmem>>, vector<1x1x8x8xf32>,
    %41 = arith.truncf %37 : vector<8x8xf32> to vector<8x8xbf16>
    %c0_23 = arith.constant 0 : index
    %c0_24 = arith.constant 0 : index
    %c0_25 = arith.constant 0 : index
    %c0_26 = arith.constant 0 : index
    %42 = vector.load %arg4[%c0_23, %c0_24, %c0_25, %c0_26] : memref<1x2x8x16xbf16, #tpu.memory_space<vmem>>, vector<1x1x8x16xbf16>
    %43 = vector.shape_cast %42 : vector<1x1x8x16xbf16> to vector<8x16xbf16>
    %cst_27 = arith.constant dense<0.000000e+00> : vector<8x16xf32>
    %44 = tpu.matmul %41, %43, %cst_27 {dimension_numbers = #tpu.dot_dimension_numbers<[1], [0], [0], [1], [0, 0, 1, 1], [], []>} : vector<8x8xbf16>, vector<8x16xbf16>, vector<8x16xf32> -> vector<8x16xf32>
    %c0_28 = arith.constant 0 : index
    %c1 = arith.constant 1 : index
    %c0_29 = arith.constant 0 : index
    %c0_30 = arith.constant 0 : index
    %45 = vector.load %arg2[%c0_28, %c1, %c0_29, %c0_30] : memref<1x2x8x16xbf16, #tpu.memory_space<vmem>>, vector<1x1x8x16xbf16>
    %46 = vector.shape_cast %45 : vector<1x1x8x16xbf16> to vector<8x16xbf16>
    %c0_31 = arith.constant 0 : index
    %c1_32 = arith.constant 1 : index
    %c0_33 = arith.constant 0 : index
    %c0_34 = arith.constant 0 : index
    %47 = vector.load %arg3[%c0_31, %c1_32, %c0_33, %c0_34] : memref<1x2x8x16xbf16, #tpu.memory_space<vmem>>, vector<1x1x8x16xbf16>
    %48 = vector.shape_cast %47 : vector<1x1x8x16xbf16> to vector<8x16xbf16>
    %cst_35 = arith.constant dense<0.000000e+00> : vector<8x8xf32>
    %49 = tpu.matmul %46, %48, %cst_35 {dimension_numbers = #tpu.dot_dimension_numbers<[1], [1], [0], [0], [0, 0, 1, 0], [], []>} : vector<8x16xbf16>, vector<8x16xbf16>, vector<8x8xf32> -> vector<8x8xf32>
    %50 = arith.addf %49, %17 : vector<8x8xf32>
    %cst_36 = arith.constant dense<0xFF800000> : vector<8xf32>
    %51 = vector.multi_reduction <maximumf>, %50, %cst_36 [1] : vector<8x8xf32> to vector<8xf32>
    %52 = vector.shape_cast %51 : vector<8xf32> to vector<8x1xf32>
    %cst_37 = arith.constant -1.000000e+30 : f32
    %53 = vector.broadcast %cst_37 : f32 to vector<8x1xf32>
    %54 = arith.maximumf %52, %53 : vector<8x1xf32>
    %55 = vector.broadcast %54 : vector<8x1xf32> to vector<8x8xf32>
    %56 = arith.subf %50, %55 : vector<8x8xf32>
    %57 = math.exp %56 : vector<8x8xf32>
    %cst_38 = arith.constant dense<0.000000e+00> : vector<8xf32>
    %58 = vector.multi_reduction <add>, %57, %cst_38 [1] : vector<8x8xf32> to vector<8xf32>
    %59 = vector.shape_cast %58 : vector<8xf32> to vector<8x1xf32>
    %cst_39 = arith.constant 1.000000e-30 : f32
    %60 = vector.broadcast %cst_39 : f32 to vector<8x1xf32>
    %61 = arith.maximumf %59, %60 : vector<8x1xf32>
    %62 = tpu.reciprocal %61 {approx = true} : vector<8x1xf32> -> vector<8x1xf32>
    %63 = vector.broadcast %62 : vector<8x1xf32> to vector<8x8xf32>
    %64 = arith.mulf %57, %63 : vector<8x8xf32>
    %c0_40 = arith.constant 0 : index
    %c1_41 = arith.constant 1 : index
    %c0_42 = arith.constant 0 : index
    %c0_43 = arith.constant 0 : index
    %65 = vector.load %arg7[%c0_40, %c1_41, %c0_42, %c0_43] : memref<1x2x8x8xf32, #tpu.memory_space<vmem>>, vector<1x1x8x8xf32>
    %66 = vector.shape_cast %65 : vector<1x1x8x8xf32> to vector<8x8xf32>
    %67 = vector.shape_cast %64 : vector<8x8xf32> to vector<1x1x8x8xf32>
    tpu.vector_store %arg7[%c0_40, %c1_41, %c0_42, %c0_43], %67 {strides = array<i32>} : memref<1x2x8x8xf32, #tpu.memory_space<vmem>>, vector<1x1x8x8xf32>,
    %68 = arith.truncf %64 : vector<8x8xf32> to vector<8x8xbf16>
    %c0_44 = arith.constant 0 : index
    %c1_45 = arith.constant 1 : index
    %c0_46 = arith.constant 0 : index
    %c0_47 = arith.constant 0 : index
    %69 = vector.load %arg4[%c0_44, %c1_45, %c0_46, %c0_47] : memref<1x2x8x16xbf16, #tpu.memory_space<vmem>>, vector<1x1x8x16xbf16>
    %70 = vector.shape_cast %69 : vector<1x1x8x16xbf16> to vector<8x16xbf16>
    %cst_48 = arith.constant dense<0.000000e+00> : vector<8x16xf32>
    %71 = tpu.matmul %68, %70, %cst_48 {dimension_numbers = #tpu.dot_dimension_numbers<[1], [0], [0], [1], [0, 0, 1, 1], [], []>} : vector<8x8xbf16>, vector<8x16xbf16>, vector<8x16xf32> -> vector<8x16xf32>
    %72 = tpu.concatenate %44, %71 in 1 : vector<8x16xf32>, vector<8x16xf32> -> vector<8x32xf32>
    %c0_49 = arith.constant 0 : index
    %c0_50 = arith.constant 0 : index
    %c0_51 = arith.constant 0 : index
    %73 = vector.load %arg6[%c0_49, %c0_50, %c0_51] : memref<1x8x32xf32, #tpu.memory_space<vmem>>, vector<1x8x32xf32>
    %74 = vector.shape_cast %73 : vector<1x8x32xf32> to vector<8x32xf32>
    %75 = vector.shape_cast %72 : vector<8x32xf32> to vector<1x8x32xf32>
    tpu.vector_store %arg6[%c0_49, %c0_50, %c0_51], %75 {strides = array<i32>} : memref<1x8x32xf32, #tpu.memory_space<vmem>>, vector<1x8x32xf32>,
    return
  }
  func.func @transform_0(%arg0: i32, %arg1: i32) -> (i32, i32, i32, i32) {
    %c0_i32 = arith.constant 0 : i32
    %c0_i32_0 = arith.constant 0 : i32
    %c0_i32_1 = arith.constant 0 : i32
    return %arg0, %c0_i32, %arg1, %c0_i32_0 : i32, i32, i32, i32
  }
  func.func @transform_1(%arg0: i32, %arg1: i32) -> (i32, i32, i32, i32) {
    %c0_i32 = arith.constant 0 : i32
    %c0_i32_0 = arith.constant 0 : i32
    %c0_i32_1 = arith.constant 0 : i32
    %c0_i32_2 = arith.constant 0 : i32
    return %arg0, %c0_i32, %c0_i32_0, %c0_i32_1 : i32, i32, i32, i32
  }
  func.func @transform_2(%arg0: i32, %arg1: i32) -> (i32, i32, i32, i32) {
    %c0_i32 = arith.constant 0 : i32
    %c0_i32_0 = arith.constant 0 : i32
    %c0_i32_1 = arith.constant 0 : i32
    %c0_i32_2 = arith.constant 0 : i32
    return %arg0, %c0_i32, %c0_i32_0, %c0_i32_1 : i32, i32, i32, i32
  }
  func.func @transform_3(%arg0: i32, %arg1: i32) -> (i32, i32, i32) {
    %c0_i32 = arith.constant 0 : i32
    %c0_i32_0 = arith.constant 0 : i32
    %c0_i32_1 = arith.constant 0 : i32
    return %arg0, %c0_i32, %c0_i32_0 : i32, i32, i32
  }
  func.func @transform_4(%arg0: i32, %arg1: i32) -> (i32, i32, i32) {
    %c0_i32 = arith.constant 0 : i32
    %c0_i32_0 = arith.constant 0 : i32
    return %arg0, %arg1, %c0_i32 : i32, i32, i32
  }
  func.func @transform_5(%arg0: i32, %arg1: i32) -> (i32, i32, i32, i32) {
    %c0_i32 = arith.constant 0 : i32
    %c0_i32_0 = arith.constant 0 : i32
    %c0_i32_1 = arith.constant 0 : i32
    return %arg0, %c0_i32, %arg1, %c0_i32_0 : i32, i32, i32, i32
  }
}

module attributes {stable_mosaic.version = 11 : i64} {
  func.func @_linear_kernel(%arg0: i32, %arg1: i32, %arg2: memref<16x32xf32, #tpu.memory_space<vmem>>, %arg3: memref<32x32xbf16, #tpu.memory_space<vmem>>, %arg4: memref<1x32xf32, #tpu.memory_space<vmem>>, %arg5: memref<16x32xf32, #tpu.memory_space<vmem>>) attributes {dimension_semantics = [#tpu.dimension_semantics<parallel>, #tpu.dimension_semantics<parallel>], iteration_bounds = array<i64: 1, 1>, scalar_prefetch = 0 : i64, scratch_operands = 0 : i64, tpu.core_type = #tpu.core_type<tc>, window_params = [{transform_indices = @transform_0, window_bounds = array<i64: 16, 32>}, {transform_indices = @transform_1, window_bounds = array<i64: 32, 32>}, {transform_indices = @transform_2, window_bounds = array<i64: 1, 32>}, {transform_indices = @transform_3, window_bounds = array<i64: 16, 32>}]} {
    %c0 = arith.constant 0 : index
    %c0_0 = arith.constant 0 : index
    %0 = vector.load %arg2[%c0, %c0_0] : memref<16x32xf32, #tpu.memory_space<vmem>>, vector<16x32xf32>
    %1 = arith.truncf %0 : vector<16x32xf32> to vector<16x32xbf16>
    %c0_1 = arith.constant 0 : index
    %c0_2 = arith.constant 0 : index
    %2 = vector.load %arg3[%c0_1, %c0_2] : memref<32x32xbf16, #tpu.memory_space<vmem>>, vector<32x32xbf16>
    %cst = arith.constant dense<0.000000e+00> : vector<16x32xf32>
    %3 = tpu.matmul %1, %2, %cst {dimension_numbers = #tpu.dot_dimension_numbers<[1], [0], [0], [1], [0, 0, 1, 1], [], []>} : vector<16x32xbf16>, vector<32x32xbf16>, vector<16x32xf32> -> vector<16x32xf32>
    %c0_3 = arith.constant 0 : index
    %c0_4 = arith.constant 0 : index
    %4 = vector.load %arg4[%c0_3, %c0_4] : memref<1x32xf32, #tpu.memory_space<vmem>>, vector<1x32xf32>
    %5 = vector.broadcast %4 : vector<1x32xf32> to vector<16x32xf32>
    %6 = arith.addf %3, %5 : vector<16x32xf32>
    %c0_5 = arith.constant 0 : index
    %c0_6 = arith.constant 0 : index
    %7 = vector.load %arg5[%c0_5, %c0_6] : memref<16x32xf32, #tpu.memory_space<vmem>>, vector<16x32xf32>
    tpu.vector_store %arg5[%c0_5, %c0_6], %6 {strides = array<i32>} : memref<16x32xf32, #tpu.memory_space<vmem>>, vector<16x32xf32>,
    return
  }
  func.func @transform_0(%arg0: i32, %arg1: i32) -> (i32, i32) {
    %c0_i32 = arith.constant 0 : i32
    %c0_i32_0 = arith.constant 0 : i32
    return %arg0, %c0_i32 : i32, i32
  }
  func.func @transform_1(%arg0: i32, %arg1: i32) -> (i32, i32) {
    %c0_i32 = arith.constant 0 : i32
    %c0_i32_0 = arith.constant 0 : i32
    return %c0_i32, %arg1 : i32, i32
  }
  func.func @transform_2(%arg0: i32, %arg1: i32) -> (i32, i32) {
    %c0_i32 = arith.constant 0 : i32
    %c0_i32_0 = arith.constant 0 : i32
    return %c0_i32, %arg1 : i32, i32
  }
  func.func @transform_3(%arg0: i32, %arg1: i32) -> (i32, i32) {
    %c0_i32 = arith.constant 0 : i32
    return %arg0, %arg1 : i32, i32
  }
}

module attributes {stable_mosaic.version = 11 : i64} {
  func.func @_add_ln_kernel(%arg0: i32, %arg1: memref<16x32xf32, #tpu.memory_space<vmem>>, %arg2: memref<16x32xf32, #tpu.memory_space<vmem>>, %arg3: memref<1x32xf32, #tpu.memory_space<vmem>>, %arg4: memref<1x32xf32, #tpu.memory_space<vmem>>, %arg5: memref<16x32xf32, #tpu.memory_space<vmem>>) attributes {dimension_semantics = [#tpu.dimension_semantics<parallel>], iteration_bounds = array<i64: 1>, scalar_prefetch = 0 : i64, scratch_operands = 0 : i64, tpu.core_type = #tpu.core_type<tc>, window_params = [{transform_indices = @transform_0, window_bounds = array<i64: 16, 32>}, {transform_indices = @transform_1, window_bounds = array<i64: 16, 32>}, {pipeline_mode = #tpu.pipeline_mode<synchronous>, transform_indices = @transform_2, window_bounds = array<i64: 1, 32>}, {pipeline_mode = #tpu.pipeline_mode<synchronous>, transform_indices = @transform_3, window_bounds = array<i64: 1, 32>}, {transform_indices = @transform_4, window_bounds = array<i64: 16, 32>}]} {
    %c0 = arith.constant 0 : index
    %c0_0 = arith.constant 0 : index
    %0 = vector.load %arg1[%c0, %c0_0] : memref<16x32xf32, #tpu.memory_space<vmem>>, vector<16x32xf32>
    %c0_1 = arith.constant 0 : index
    %c0_2 = arith.constant 0 : index
    %1 = vector.load %arg2[%c0_1, %c0_2] : memref<16x32xf32, #tpu.memory_space<vmem>>, vector<16x32xf32>
    %2 = arith.addf %0, %1 : vector<16x32xf32>
    %cst = arith.constant dense<0.000000e+00> : vector<16xf32>
    %3 = vector.multi_reduction <add>, %2, %cst [1] : vector<16x32xf32> to vector<16xf32>
    %4 = vector.shape_cast %3 : vector<16xf32> to vector<16x1xf32>
    %cst_3 = arith.constant 3.200000e+01 : f32
    %5 = vector.broadcast %cst_3 : f32 to vector<16x1xf32>
    %6 = arith.divf %4, %5 : vector<16x1xf32>
    %7 = vector.broadcast %6 : vector<16x1xf32> to vector<16x32xf32>
    %8 = arith.subf %2, %7 : vector<16x32xf32>
    %9 = arith.mulf %8, %8 : vector<16x32xf32>
    %cst_4 = arith.constant dense<0.000000e+00> : vector<16xf32>
    %10 = vector.multi_reduction <add>, %9, %cst_4 [1] : vector<16x32xf32> to vector<16xf32>
    %11 = vector.shape_cast %10 : vector<16xf32> to vector<16x1xf32>
    %cst_5 = arith.constant 3.200000e+01 : f32
    %12 = vector.broadcast %cst_5 : f32 to vector<16x1xf32>
    %13 = arith.divf %11, %12 : vector<16x1xf32>
    %cst_6 = arith.constant 9.99999974E-6 : f32
    %14 = vector.broadcast %cst_6 : f32 to vector<16x1xf32>
    %15 = arith.addf %13, %14 : vector<16x1xf32>
    %16 = math.rsqrt %15 : vector<16x1xf32>
    %17 = vector.broadcast %16 : vector<16x1xf32> to vector<16x32xf32>
    %18 = arith.mulf %8, %17 : vector<16x32xf32>
    %c0_7 = arith.constant 0 : index
    %c0_8 = arith.constant 0 : index
    %19 = vector.load %arg3[%c0_7, %c0_8] : memref<1x32xf32, #tpu.memory_space<vmem>>, vector<1x32xf32>
    %20 = vector.broadcast %19 : vector<1x32xf32> to vector<16x32xf32>
    %21 = arith.mulf %18, %20 : vector<16x32xf32>
    %c0_9 = arith.constant 0 : index
    %c0_10 = arith.constant 0 : index
    %22 = vector.load %arg4[%c0_9, %c0_10] : memref<1x32xf32, #tpu.memory_space<vmem>>, vector<1x32xf32>
    %23 = vector.broadcast %22 : vector<1x32xf32> to vector<16x32xf32>
    %24 = arith.addf %21, %23 : vector<16x32xf32>
    %c0_11 = arith.constant 0 : index
    %c0_12 = arith.constant 0 : index
    %25 = vector.load %arg5[%c0_11, %c0_12] : memref<16x32xf32, #tpu.memory_space<vmem>>, vector<16x32xf32>
    tpu.vector_store %arg5[%c0_11, %c0_12], %24 {strides = array<i32>} : memref<16x32xf32, #tpu.memory_space<vmem>>, vector<16x32xf32>,
    return
  }
  func.func @transform_0(%arg0: i32) -> (i32, i32) {
    %c0_i32 = arith.constant 0 : i32
    %c0_i32_0 = arith.constant 0 : i32
    return %arg0, %c0_i32 : i32, i32
  }
  func.func @transform_1(%arg0: i32) -> (i32, i32) {
    %c0_i32 = arith.constant 0 : i32
    %c0_i32_0 = arith.constant 0 : i32
    return %arg0, %c0_i32 : i32, i32
  }
  func.func @transform_2(%arg0: i32) -> (i32, i32) {
    %c0_i32 = arith.constant 0 : i32
    %c0_i32_0 = arith.constant 0 : i32
    %c0_i32_1 = arith.constant 0 : i32
    return %c0_i32, %c0_i32_0 : i32, i32
  }
  func.func @transform_3(%arg0: i32) -> (i32, i32) {
    %c0_i32 = arith.constant 0 : i32
    %c0_i32_0 = arith.constant 0 : i32
    %c0_i32_1 = arith.constant 0 : i32
    return %c0_i32, %c0_i32_0 : i32, i32
  }
  func.func @transform_4(%arg0: i32) -> (i32, i32) {
    %c0_i32 = arith.constant 0 : i32
    %c0_i32_0 = arith.constant 0 : i32
    return %arg0, %c0_i32 : i32, i32
  }
}

module attributes {stable_mosaic.version = 11 : i64} {
  func.func @_linear_kernel(%arg0: i32, %arg1: i32, %arg2: memref<16x32xf32, #tpu.memory_space<vmem>>, %arg3: memref<32x2xbf16, #tpu.memory_space<vmem>>, %arg4: memref<1x2xf32, #tpu.memory_space<vmem>>, %arg5: memref<16x2xf32, #tpu.memory_space<vmem>>) attributes {dimension_semantics = [#tpu.dimension_semantics<parallel>, #tpu.dimension_semantics<parallel>], iteration_bounds = array<i64: 1, 1>, scalar_prefetch = 0 : i64, scratch_operands = 0 : i64, tpu.core_type = #tpu.core_type<tc>, window_params = [{transform_indices = @transform_0, window_bounds = array<i64: 16, 32>}, {transform_indices = @transform_1, window_bounds = array<i64: 32, 2>}, {transform_indices = @transform_2, window_bounds = array<i64: 1, 2>}, {transform_indices = @transform_3, window_bounds = array<i64: 16, 2>}]} {
    %c0 = arith.constant 0 : index
    %c0_0 = arith.constant 0 : index
    %0 = vector.load %arg2[%c0, %c0_0] : memref<16x32xf32, #tpu.memory_space<vmem>>, vector<16x32xf32>
    %1 = arith.truncf %0 : vector<16x32xf32> to vector<16x32xbf16>
    %c0_1 = arith.constant 0 : index
    %c0_2 = arith.constant 0 : index
    %2 = vector.load %arg3[%c0_1, %c0_2] : memref<32x2xbf16, #tpu.memory_space<vmem>>, vector<32x2xbf16>
    %cst = arith.constant dense<0.000000e+00> : vector<16x2xf32>
    %3 = tpu.matmul %1, %2, %cst {dimension_numbers = #tpu.dot_dimension_numbers<[1], [0], [0], [1], [0, 0, 1, 1], [], []>} : vector<16x32xbf16>, vector<32x2xbf16>, vector<16x2xf32> -> vector<16x2xf32>
    %c0_3 = arith.constant 0 : index
    %c0_4 = arith.constant 0 : index
    %4 = vector.load %arg4[%c0_3, %c0_4] : memref<1x2xf32, #tpu.memory_space<vmem>>, vector<1x2xf32>
    %5 = vector.broadcast %4 : vector<1x2xf32> to vector<16x2xf32>
    %6 = arith.addf %3, %5 : vector<16x2xf32>
    %c0_5 = arith.constant 0 : index
    %c0_6 = arith.constant 0 : index
    %7 = vector.load %arg5[%c0_5, %c0_6] : memref<16x2xf32, #tpu.memory_space<vmem>>, vector<16x2xf32>
    tpu.vector_store %arg5[%c0_5, %c0_6], %6 {strides = array<i32>} : memref<16x2xf32, #tpu.memory_space<vmem>>, vector<16x2xf32>,
    return
  }
  func.func @transform_0(%arg0: i32, %arg1: i32) -> (i32, i32) {
    %c0_i32 = arith.constant 0 : i32
    %c0_i32_0 = arith.constant 0 : i32
    return %arg0, %c0_i32 : i32, i32
  }
  func.func @transform_1(%arg0: i32, %arg1: i32) -> (i32, i32) {
    %c0_i32 = arith.constant 0 : i32
    %c0_i32_0 = arith.constant 0 : i32
    return %c0_i32, %arg1 : i32, i32
  }
  func.func @transform_2(%arg0: i32, %arg1: i32) -> (i32, i32) {
    %c0_i32 = arith.constant 0 : i32
    %c0_i32_0 = arith.constant 0 : i32
    return %c0_i32, %arg1 : i32, i32
  }
  func.func @transform_3(%arg0: i32, %arg1: i32) -> (i32, i32) {
    %c0_i32 = arith.constant 0 : i32
    return %arg0, %arg1 : i32, i32
  }
}

module attributes {stable_mosaic.version = 11 : i64} {
  func.func @_linear_kernel(%arg0: i32, %arg1: i32, %arg2: memref<16x32xf32, #tpu.memory_space<vmem>>, %arg3: memref<32x20xbf16, #tpu.memory_space<vmem>>, %arg4: memref<1x20xf32, #tpu.memory_space<vmem>>, %arg5: memref<16x20xf32, #tpu.memory_space<vmem>>) attributes {dimension_semantics = [#tpu.dimension_semantics<parallel>, #tpu.dimension_semantics<parallel>], iteration_bounds = array<i64: 1, 1>, scalar_prefetch = 0 : i64, scratch_operands = 0 : i64, tpu.core_type = #tpu.core_type<tc>, window_params = [{transform_indices = @transform_0, window_bounds = array<i64: 16, 32>}, {transform_indices = @transform_1, window_bounds = array<i64: 32, 20>}, {transform_indices = @transform_2, window_bounds = array<i64: 1, 20>}, {transform_indices = @transform_3, window_bounds = array<i64: 16, 20>}]} {
    %c0 = arith.constant 0 : index
    %c0_0 = arith.constant 0 : index
    %0 = vector.load %arg2[%c0, %c0_0] : memref<16x32xf32, #tpu.memory_space<vmem>>, vector<16x32xf32>
    %1 = arith.truncf %0 : vector<16x32xf32> to vector<16x32xbf16>
    %c0_1 = arith.constant 0 : index
    %c0_2 = arith.constant 0 : index
    %2 = vector.load %arg3[%c0_1, %c0_2] : memref<32x20xbf16, #tpu.memory_space<vmem>>, vector<32x20xbf16>
    %cst = arith.constant dense<0.000000e+00> : vector<16x20xf32>
    %3 = tpu.matmul %1, %2, %cst {dimension_numbers = #tpu.dot_dimension_numbers<[1], [0], [0], [1], [0, 0, 1, 1], [], []>} : vector<16x32xbf16>, vector<32x20xbf16>, vector<16x20xf32> -> vector<16x20xf32>
    %c0_3 = arith.constant 0 : index
    %c0_4 = arith.constant 0 : index
    %4 = vector.load %arg4[%c0_3, %c0_4] : memref<1x20xf32, #tpu.memory_space<vmem>>, vector<1x20xf32>
    %5 = vector.broadcast %4 : vector<1x20xf32> to vector<16x20xf32>
    %6 = arith.addf %3, %5 : vector<16x20xf32>
    %c0_5 = arith.constant 0 : index
    %c0_6 = arith.constant 0 : index
    %7 = vector.load %arg5[%c0_5, %c0_6] : memref<16x20xf32, #tpu.memory_space<vmem>>, vector<16x20xf32>
    tpu.vector_store %arg5[%c0_5, %c0_6], %6 {strides = array<i32>} : memref<16x20xf32, #tpu.memory_space<vmem>>, vector<16x20xf32>,
    return
  }
  func.func @transform_0(%arg0: i32, %arg1: i32) -> (i32, i32) {
    %c0_i32 = arith.constant 0 : i32
    %c0_i32_0 = arith.constant 0 : i32
    return %arg0, %c0_i32 : i32, i32
  }
  func.func @transform_1(%arg0: i32, %arg1: i32) -> (i32, i32) {
    %c0_i32 = arith.constant 0 : i32
    %c0_i32_0 = arith.constant 0 : i32
    return %c0_i32, %arg1 : i32, i32
  }
  func.func @transform_2(%arg0: i32, %arg1: i32) -> (i32, i32) {
    %c0_i32 = arith.constant 0 : i32
    %c0_i32_0 = arith.constant 0 : i32
    return %c0_i32, %arg1 : i32, i32
  }
  func.func @transform_3(%arg0: i32, %arg1: i32) -> (i32, i32) {
    %c0_i32 = arith.constant 0 : i32
    return %arg0, %arg1 : i32, i32
  }
}

module attributes {stable_mosaic.version = 11 : i64} {
  func.func @_linear_kernel(%arg0: i32, %arg1: i32, %arg2: memref<16x32xf32, #tpu.memory_space<vmem>>, %arg3: memref<32x34xbf16, #tpu.memory_space<vmem>>, %arg4: memref<1x34xf32, #tpu.memory_space<vmem>>, %arg5: memref<16x34xf32, #tpu.memory_space<vmem>>) attributes {dimension_semantics = [#tpu.dimension_semantics<parallel>, #tpu.dimension_semantics<parallel>], iteration_bounds = array<i64: 1, 1>, scalar_prefetch = 0 : i64, scratch_operands = 0 : i64, tpu.core_type = #tpu.core_type<tc>, window_params = [{transform_indices = @transform_0, window_bounds = array<i64: 16, 32>}, {transform_indices = @transform_1, window_bounds = array<i64: 32, 34>}, {transform_indices = @transform_2, window_bounds = array<i64: 1, 34>}, {transform_indices = @transform_3, window_bounds = array<i64: 16, 34>}]} {
    %c0 = arith.constant 0 : index
    %c0_0 = arith.constant 0 : index
    %0 = vector.load %arg2[%c0, %c0_0] : memref<16x32xf32, #tpu.memory_space<vmem>>, vector<16x32xf32>
    %1 = arith.truncf %0 : vector<16x32xf32> to vector<16x32xbf16>
    %c0_1 = arith.constant 0 : index
    %c0_2 = arith.constant 0 : index
    %2 = vector.load %arg3[%c0_1, %c0_2] : memref<32x34xbf16, #tpu.memory_space<vmem>>, vector<32x34xbf16>
    %cst = arith.constant dense<0.000000e+00> : vector<16x34xf32>
    %3 = tpu.matmul %1, %2, %cst {dimension_numbers = #tpu.dot_dimension_numbers<[1], [0], [0], [1], [0, 0, 1, 1], [], []>} : vector<16x32xbf16>, vector<32x34xbf16>, vector<16x34xf32> -> vector<16x34xf32>
    %c0_3 = arith.constant 0 : index
    %c0_4 = arith.constant 0 : index
    %4 = vector.load %arg4[%c0_3, %c0_4] : memref<1x34xf32, #tpu.memory_space<vmem>>, vector<1x34xf32>
    %5 = vector.broadcast %4 : vector<1x34xf32> to vector<16x34xf32>
    %6 = arith.addf %3, %5 : vector<16x34xf32>
    %c0_5 = arith.constant 0 : index
    %c0_6 = arith.constant 0 : index
    %7 = vector.load %arg5[%c0_5, %c0_6] : memref<16x34xf32, #tpu.memory_space<vmem>>, vector<16x34xf32>
    tpu.vector_store %arg5[%c0_5, %c0_6], %6 {strides = array<i32>} : memref<16x34xf32, #tpu.memory_space<vmem>>, vector<16x34xf32>,
    return
  }
  func.func @transform_0(%arg0: i32, %arg1: i32) -> (i32, i32) {
    %c0_i32 = arith.constant 0 : i32
    %c0_i32_0 = arith.constant 0 : i32
    return %arg0, %c0_i32 : i32, i32
  }
  func.func @transform_1(%arg0: i32, %arg1: i32) -> (i32, i32) {
    %c0_i32 = arith.constant 0 : i32
    %c0_i32_0 = arith.constant 0 : i32
    return %c0_i32, %arg1 : i32, i32
  }
  func.func @transform_2(%arg0: i32, %arg1: i32) -> (i32, i32) {
    %c0_i32 = arith.constant 0 : i32
    %c0_i32_0 = arith.constant 0 : i32
    return %c0_i32, %arg1 : i32, i32
  }
  func.func @transform_3(%arg0: i32, %arg1: i32) -> (i32, i32) {
    %c0_i32 = arith.constant 0 : i32
    return %arg0, %arg1 : i32, i32
  }
}

module attributes {stable_mosaic.version = 11 : i64} {
  func.func @_linear_kernel(%arg0: i32, %arg1: i32, %arg2: memref<16x32xf32, #tpu.memory_space<vmem>>, %arg3: memref<32x64xbf16, #tpu.memory_space<vmem>>, %arg4: memref<1x64xf32, #tpu.memory_space<vmem>>, %arg5: memref<16x64xf32, #tpu.memory_space<vmem>>) attributes {dimension_semantics = [#tpu.dimension_semantics<parallel>, #tpu.dimension_semantics<parallel>], iteration_bounds = array<i64: 1, 1>, scalar_prefetch = 0 : i64, scratch_operands = 0 : i64, tpu.core_type = #tpu.core_type<tc>, window_params = [{transform_indices = @transform_0, window_bounds = array<i64: 16, 32>}, {transform_indices = @transform_1, window_bounds = array<i64: 32, 64>}, {transform_indices = @transform_2, window_bounds = array<i64: 1, 64>}, {transform_indices = @transform_3, window_bounds = array<i64: 16, 64>}]} {
    %c0 = arith.constant 0 : index
    %c0_0 = arith.constant 0 : index
    %0 = vector.load %arg2[%c0, %c0_0] : memref<16x32xf32, #tpu.memory_space<vmem>>, vector<16x32xf32>
    %1 = arith.truncf %0 : vector<16x32xf32> to vector<16x32xbf16>
    %c0_1 = arith.constant 0 : index
    %c0_2 = arith.constant 0 : index
    %2 = vector.load %arg3[%c0_1, %c0_2] : memref<32x64xbf16, #tpu.memory_space<vmem>>, vector<32x64xbf16>
    %cst = arith.constant dense<0.000000e+00> : vector<16x64xf32>
    %3 = tpu.matmul %1, %2, %cst {dimension_numbers = #tpu.dot_dimension_numbers<[1], [0], [0], [1], [0, 0, 1, 1], [], []>} : vector<16x32xbf16>, vector<32x64xbf16>, vector<16x64xf32> -> vector<16x64xf32>
    %c0_3 = arith.constant 0 : index
    %c0_4 = arith.constant 0 : index
    %4 = vector.load %arg4[%c0_3, %c0_4] : memref<1x64xf32, #tpu.memory_space<vmem>>, vector<1x64xf32>
    %5 = vector.broadcast %4 : vector<1x64xf32> to vector<16x64xf32>
    %6 = arith.addf %3, %5 : vector<16x64xf32>
    %7 = arith.mulf %6, %6 : vector<16x64xf32>
    %8 = arith.mulf %6, %7 : vector<16x64xf32>
    %cst_5 = arith.constant 4.471500e-02 : f32
    %9 = vector.broadcast %cst_5 : f32 to vector<16x64xf32>
    %10 = arith.mulf %9, %8 : vector<16x64xf32>
    %11 = arith.addf %6, %10 : vector<16x64xf32>
    %cst_6 = arith.constant 0.797884583 : f32
    %12 = vector.broadcast %cst_6 : f32 to vector<16x64xf32>
    %13 = arith.mulf %12, %11 : vector<16x64xf32>
    %14 = math.tanh %13 : vector<16x64xf32>
    %cst_7 = arith.constant 1.000000e+00 : f32
    %15 = vector.broadcast %cst_7 : f32 to vector<16x64xf32>
    %16 = arith.addf %15, %14 : vector<16x64xf32>
    %cst_8 = arith.constant 5.000000e-01 : f32
    %17 = vector.broadcast %cst_8 : f32 to vector<16x64xf32>
    %18 = arith.mulf %17, %16 : vector<16x64xf32>
    %19 = arith.mulf %6, %18 : vector<16x64xf32>
    %c0_9 = arith.constant 0 : index
    %c0_10 = arith.constant 0 : index
    %20 = vector.load %arg5[%c0_9, %c0_10] : memref<16x64xf32, #tpu.memory_space<vmem>>, vector<16x64xf32>
    tpu.vector_store %arg5[%c0_9, %c0_10], %19 {strides = array<i32>} : memref<16x64xf32, #tpu.memory_space<vmem>>, vector<16x64xf32>,
    return
  }
  func.func @transform_0(%arg0: i32, %arg1: i32) -> (i32, i32) {
    %c0_i32 = arith.constant 0 : i32
    %c0_i32_0 = arith.constant 0 : i32
    return %arg0, %c0_i32 : i32, i32
  }
  func.func @transform_1(%arg0: i32, %arg1: i32) -> (i32, i32) {
    %c0_i32 = arith.constant 0 : i32
    %c0_i32_0 = arith.constant 0 : i32
    return %c0_i32, %arg1 : i32, i32
  }
  func.func @transform_2(%arg0: i32, %arg1: i32) -> (i32, i32) {
    %c0_i32 = arith.constant 0 : i32
    %c0_i32_0 = arith.constant 0 : i32
    return %c0_i32, %arg1 : i32, i32
  }
  func.func @transform_3(%arg0: i32, %arg1: i32) -> (i32, i32) {
    %c0_i32 = arith.constant 0 : i32
    return %arg0, %arg1 : i32, i32
  }
}

module attributes {stable_mosaic.version = 11 : i64} {
  func.func @_hgat_attn_kernel(%arg0: i32, %arg1: i32, %arg2: memref<1x2x8x1xf32, #tpu.memory_space<vmem>>, %arg3: memref<1x2x1x8xf32, #tpu.memory_space<vmem>>, %arg4: memref<1x2x8x16xbf16, #tpu.memory_space<vmem>>, %arg5: memref<1x1x8xf32, #tpu.memory_space<vmem>>, %arg6: memref<1x8x32xf32, #tpu.memory_space<vmem>>) attributes {dimension_semantics = [#tpu.dimension_semantics<parallel>, #tpu.dimension_semantics<parallel>], iteration_bounds = array<i64: 2, 1>, scalar_prefetch = 0 : i64, scratch_operands = 0 : i64, tpu.core_type = #tpu.core_type<tc>, window_params = [{transform_indices = @transform_0, window_bounds = array<i64: 1, 2, 8, 1>}, {transform_indices = @transform_1, window_bounds = array<i64: 1, 2, 1, 8>}, {transform_indices = @transform_2, window_bounds = array<i64: 1, 2, 8, 16>}, {transform_indices = @transform_3, window_bounds = array<i64: 1, 1, 8>}, {transform_indices = @transform_4, window_bounds = array<i64: 1, 8, 32>}]} {
    %c0 = arith.constant 0 : index
    %c0_0 = arith.constant 0 : index
    %c0_1 = arith.constant 0 : index
    %0 = vector.load %arg5[%c0, %c0_0, %c0_1] : memref<1x1x8xf32, #tpu.memory_space<vmem>>, vector<1x1x8xf32>
    %1 = vector.shape_cast %0 : vector<1x1x8xf32> to vector<1x8xf32>
    %cst = arith.constant 0.000000e+00 : f32
    %2 = vector.broadcast %cst : f32 to vector<1x8xf32>
    %3 = arith.cmpf ogt, %1, %2 : vector<1x8xf32>
    %cst_2 = arith.constant 0xFF800000 : f32
    %cst_3 = arith.constant 0.000000e+00 : f32
    %4 = vector.broadcast %cst_2 : f32 to vector<1x8xf32>
    %5 = vector.broadcast %cst_3 : f32 to vector<1x8xf32>
    %6 = arith.select %3, %4, %5 : vector<1x8xi1>, vector<1x8xf32>
    %c0_4 = arith.constant 0 : index
    %c0_5 = arith.constant 0 : index
    %c0_6 = arith.constant 0 : index
    %c0_7 = arith.constant 0 : index
    %7 = vector.load %arg2[%c0_4, %c0_5, %c0_6, %c0_7] : memref<1x2x8x1xf32, #tpu.memory_space<vmem>>, vector<1x1x8x1xf32>
    %8 = vector.shape_cast %7 : vector<1x1x8x1xf32> to vector<8x1xf32>
    %c0_8 = arith.constant 0 : index
    %c0_9 = arith.constant 0 : index
    %c0_10 = arith.constant 0 : index
    %c0_11 = arith.constant 0 : index
    %9 = vector.load %arg3[%c0_8, %c0_9, %c0_10, %c0_11] : memref<1x2x1x8xf32, #tpu.memory_space<vmem>>, vector<1x1x1x8xf32>
    %10 = vector.shape_cast %9 : vector<1x1x1x8xf32> to vector<1x8xf32>
    %11 = vector.broadcast %8 : vector<8x1xf32> to vector<8x8xf32>
    %12 = vector.broadcast %10 : vector<1x8xf32> to vector<8x8xf32>
    %13 = arith.addf %11, %12 : vector<8x8xf32>
    %cst_12 = arith.constant 0.000000e+00 : f32
    %14 = vector.broadcast %cst_12 : f32 to vector<8x8xf32>
    %15 = arith.cmpf oge, %13, %14 : vector<8x8xf32>
    %cst_13 = arith.constant 0.00999999977 : f32
    %16 = vector.broadcast %cst_13 : f32 to vector<8x8xf32>
    %17 = arith.mulf %16, %13 : vector<8x8xf32>
    %18 = arith.select %15, %13, %17 : vector<8x8xi1>, vector<8x8xf32>
    %19 = vector.broadcast %6 : vector<1x8xf32> to vector<8x8xf32>
    %20 = arith.addf %18, %19 : vector<8x8xf32>
    %cst_14 = arith.constant dense<0xFF800000> : vector<8xf32>
    %21 = vector.multi_reduction <maximumf>, %20, %cst_14 [1] : vector<8x8xf32> to vector<8xf32>
    %22 = vector.shape_cast %21 : vector<8xf32> to vector<8x1xf32>
    %cst_15 = arith.constant -1.000000e+30 : f32
    %23 = vector.broadcast %cst_15 : f32 to vector<8x1xf32>
    %24 = arith.maximumf %22, %23 : vector<8x1xf32>
    %25 = vector.broadcast %24 : vector<8x1xf32> to vector<8x8xf32>
    %26 = arith.subf %20, %25 : vector<8x8xf32>
    %27 = math.exp %26 : vector<8x8xf32>
    %cst_16 = arith.constant dense<0.000000e+00> : vector<8xf32>
    %28 = vector.multi_reduction <add>, %27, %cst_16 [1] : vector<8x8xf32> to vector<8xf32>
    %29 = vector.shape_cast %28 : vector<8xf32> to vector<8x1xf32>
    %cst_17 = arith.constant 1.000000e-30 : f32
    %30 = vector.broadcast %cst_17 : f32 to vector<8x1xf32>
    %31 = arith.maximumf %29, %30 : vector<8x1xf32>
    %32 = tpu.reciprocal %31 {approx = true} : vector<8x1xf32> -> vector<8x1xf32>
    %33 = vector.broadcast %32 : vector<8x1xf32> to vector<8x8xf32>
    %34 = arith.mulf %27, %33 : vector<8x8xf32>
    %35 = arith.truncf %34 : vector<8x8xf32> to vector<8x8xbf16>
    %c0_18 = arith.constant 0 : index
    %c0_19 = arith.constant 0 : index
    %c0_20 = arith.constant 0 : index
    %c0_21 = arith.constant 0 : index
    %36 = vector.load %arg4[%c0_18, %c0_19, %c0_20, %c0_21] : memref<1x2x8x16xbf16, #tpu.memory_space<vmem>>, vector<1x1x8x16xbf16>
    %37 = vector.shape_cast %36 : vector<1x1x8x16xbf16> to vector<8x16xbf16>
    %cst_22 = arith.constant dense<0.000000e+00> : vector<8x16xf32>
    %38 = tpu.matmul %35, %37, %cst_22 {dimension_numbers = #tpu.dot_dimension_numbers<[1], [0], [0], [1], [0, 0, 1, 1], [], []>} : vector<8x8xbf16>, vector<8x16xbf16>, vector<8x16xf32> -> vector<8x16xf32>
    %c0_23 = arith.constant 0 : index
    %c1 = arith.constant 1 : index
    %c0_24 = arith.constant 0 : index
    %c0_25 = arith.constant 0 : index
    %39 = vector.load %arg2[%c0_23, %c1, %c0_24, %c0_25] : memref<1x2x8x1xf32, #tpu.memory_space<vmem>>, vector<1x1x8x1xf32>
    %40 = vector.shape_cast %39 : vector<1x1x8x1xf32> to vector<8x1xf32>
    %c0_26 = arith.constant 0 : index
    %c1_27 = arith.constant 1 : index
    %c0_28 = arith.constant 0 : index
    %c0_29 = arith.constant 0 : index
    %41 = vector.load %arg3[%c0_26, %c1_27, %c0_28, %c0_29] : memref<1x2x1x8xf32, #tpu.memory_space<vmem>>, vector<1x1x1x8xf32>
    %42 = vector.shape_cast %41 : vector<1x1x1x8xf32> to vector<1x8xf32>
    %43 = vector.broadcast %40 : vector<8x1xf32> to vector<8x8xf32>
    %44 = vector.broadcast %42 : vector<1x8xf32> to vector<8x8xf32>
    %45 = arith.addf %43, %44 : vector<8x8xf32>
    %cst_30 = arith.constant 0.000000e+00 : f32
    %46 = vector.broadcast %cst_30 : f32 to vector<8x8xf32>
    %47 = arith.cmpf oge, %45, %46 : vector<8x8xf32>
    %cst_31 = arith.constant 0.00999999977 : f32
    %48 = vector.broadcast %cst_31 : f32 to vector<8x8xf32>
    %49 = arith.mulf %48, %45 : vector<8x8xf32>
    %50 = arith.select %47, %45, %49 : vector<8x8xi1>, vector<8x8xf32>
    %51 = vector.broadcast %6 : vector<1x8xf32> to vector<8x8xf32>
    %52 = arith.addf %50, %51 : vector<8x8xf32>
    %cst_32 = arith.constant dense<0xFF800000> : vector<8xf32>
    %53 = vector.multi_reduction <maximumf>, %52, %cst_32 [1] : vector<8x8xf32> to vector<8xf32>
    %54 = vector.shape_cast %53 : vector<8xf32> to vector<8x1xf32>
    %cst_33 = arith.constant -1.000000e+30 : f32
    %55 = vector.broadcast %cst_33 : f32 to vector<8x1xf32>
    %56 = arith.maximumf %54, %55 : vector<8x1xf32>
    %57 = vector.broadcast %56 : vector<8x1xf32> to vector<8x8xf32>
    %58 = arith.subf %52, %57 : vector<8x8xf32>
    %59 = math.exp %58 : vector<8x8xf32>
    %cst_34 = arith.constant dense<0.000000e+00> : vector<8xf32>
    %60 = vector.multi_reduction <add>, %59, %cst_34 [1] : vector<8x8xf32> to vector<8xf32>
    %61 = vector.shape_cast %60 : vector<8xf32> to vector<8x1xf32>
    %cst_35 = arith.constant 1.000000e-30 : f32
    %62 = vector.broadcast %cst_35 : f32 to vector<8x1xf32>
    %63 = arith.maximumf %61, %62 : vector<8x1xf32>
    %64 = tpu.reciprocal %63 {approx = true} : vector<8x1xf32> -> vector<8x1xf32>
    %65 = vector.broadcast %64 : vector<8x1xf32> to vector<8x8xf32>
    %66 = arith.mulf %59, %65 : vector<8x8xf32>
    %67 = arith.truncf %66 : vector<8x8xf32> to vector<8x8xbf16>
    %c0_36 = arith.constant 0 : index
    %c1_37 = arith.constant 1 : index
    %c0_38 = arith.constant 0 : index
    %c0_39 = arith.constant 0 : index
    %68 = vector.load %arg4[%c0_36, %c1_37, %c0_38, %c0_39] : memref<1x2x8x16xbf16, #tpu.memory_space<vmem>>, vector<1x1x8x16xbf16>
    %69 = vector.shape_cast %68 : vector<1x1x8x16xbf16> to vector<8x16xbf16>
    %cst_40 = arith.constant dense<0.000000e+00> : vector<8x16xf32>
    %70 = tpu.matmul %67, %69, %cst_40 {dimension_numbers = #tpu.dot_dimension_numbers<[1], [0], [0], [1], [0, 0, 1, 1], [], []>} : vector<8x8xbf16>, vector<8x16xbf16>, vector<8x16xf32> -> vector<8x16xf32>
    %71 = tpu.concatenate %38, %70 in 1 : vector<8x16xf32>, vector<8x16xf32> -> vector<8x32xf32>
    %c0_41 = arith.constant 0 : index
    %c0_42 = arith.constant 0 : index
    %c0_43 = arith.constant 0 : index
    %72 = vector.load %arg6[%c0_41, %c0_42, %c0_43] : memref<1x8x32xf32, #tpu.memory_space<vmem>>, vector<1x8x32xf32>
    %73 = vector.shape_cast %72 : vector<1x8x32xf32> to vector<8x32xf32>
    %74 = vector.shape_cast %71 : vector<8x32xf32> to vector<1x8x32xf32>
    tpu.vector_store %arg6[%c0_41, %c0_42, %c0_43], %74 {strides = array<i32>} : memref<1x8x32xf32, #tpu.memory_space<vmem>>, vector<1x8x32xf32>,
    return
  }
  func.func @transform_0(%arg0: i32, %arg1: i32) -> (i32, i32, i32, i32) {
    %c0_i32 = arith.constant 0 : i32
    %c0_i32_0 = arith.constant 0 : i32
    %c0_i32_1 = arith.constant 0 : i32
    return %arg0, %c0_i32, %arg1, %c0_i32_0 : i32, i32, i32, i32
  }
  func.func @transform_1(%arg0: i32, %arg1: i32) -> (i32, i32, i32, i32) {
    %c0_i32 = arith.constant 0 : i32
    %c0_i32_0 = arith.constant 0 : i32
    %c0_i32_1 = arith.constant 0 : i32
    %c0_i32_2 = arith.constant 0 : i32
    return %arg0, %c0_i32, %c0_i32_0, %c0_i32_1 : i32, i32, i32, i32
  }
  func.func @transform_2(%arg0: i32, %arg1: i32) -> (i32, i32, i32, i32) {
    %c0_i32 = arith.constant 0 : i32
    %c0_i32_0 = arith.constant 0 : i32
    %c0_i32_1 = arith.constant 0 : i32
    %c0_i32_2 = arith.constant 0 : i32
    return %arg0, %c0_i32, %c0_i32_0, %c0_i32_1 : i32, i32, i32, i32
  }
  func.func @transform_3(%arg0: i32, %arg1: i32) -> (i32, i32, i32) {
    %c0_i32 = arith.constant 0 : i32
    %c0_i32_0 = arith.constant 0 : i32
    %c0_i32_1 = arith.constant 0 : i32
    return %arg0, %c0_i32, %c0_i32_0 : i32, i32, i32
  }
  func.func @transform_4(%arg0: i32, %arg1: i32) -> (i32, i32, i32) {
    %c0_i32 = arith.constant 0 : i32
    %c0_i32_0 = arith.constant 0 : i32
    return %arg0, %arg1, %c0_i32 : i32, i32, i32
  }
}

module attributes {stable_mosaic.version = 11 : i64} {
  func.func @_linear_kernel(%arg0: i32, %arg1: i32, %arg2: memref<16x64xf32, #tpu.memory_space<vmem>>, %arg3: memref<64x32xbf16, #tpu.memory_space<vmem>>, %arg4: memref<1x32xf32, #tpu.memory_space<vmem>>, %arg5: memref<16x32xf32, #tpu.memory_space<vmem>>) attributes {dimension_semantics = [#tpu.dimension_semantics<parallel>, #tpu.dimension_semantics<parallel>], iteration_bounds = array<i64: 1, 1>, scalar_prefetch = 0 : i64, scratch_operands = 0 : i64, tpu.core_type = #tpu.core_type<tc>, window_params = [{transform_indices = @transform_0, window_bounds = array<i64: 16, 64>}, {transform_indices = @transform_1, window_bounds = array<i64: 64, 32>}, {transform_indices = @transform_2, window_bounds = array<i64: 1, 32>}, {transform_indices = @transform_3, window_bounds = array<i64: 16, 32>}]} {
    %c0 = arith.constant 0 : index
    %c0_0 = arith.constant 0 : index
    %0 = vector.load %arg2[%c0, %c0_0] : memref<16x64xf32, #tpu.memory_space<vmem>>, vector<16x64xf32>
    %1 = arith.truncf %0 : vector<16x64xf32> to vector<16x64xbf16>
    %c0_1 = arith.constant 0 : index
    %c0_2 = arith.constant 0 : index
    %2 = vector.load %arg3[%c0_1, %c0_2] : memref<64x32xbf16, #tpu.memory_space<vmem>>, vector<64x32xbf16>
    %cst = arith.constant dense<0.000000e+00> : vector<16x32xf32>
    %3 = tpu.matmul %1, %2, %cst {dimension_numbers = #tpu.dot_dimension_numbers<[1], [0], [0], [1], [0, 0, 1, 1], [], []>} : vector<16x64xbf16>, vector<64x32xbf16>, vector<16x32xf32> -> vector<16x32xf32>
    %c0_3 = arith.constant 0 : index
    %c0_4 = arith.constant 0 : index
    %4 = vector.load %arg4[%c0_3, %c0_4] : memref<1x32xf32, #tpu.memory_space<vmem>>, vector<1x32xf32>
    %5 = vector.broadcast %4 : vector<1x32xf32> to vector<16x32xf32>
    %6 = arith.addf %3, %5 : vector<16x32xf32>
    %c0_5 = arith.constant 0 : index
    %c0_6 = arith.constant 0 : index
    %7 = vector.load %arg5[%c0_5, %c0_6] : memref<16x32xf32, #tpu.memory_space<vmem>>, vector<16x32xf32>
    tpu.vector_store %arg5[%c0_5, %c0_6], %6 {strides = array<i32>} : memref<16x32xf32, #tpu.memory_space<vmem>>, vector<16x32xf32>,
    return
  }
  func.func @transform_0(%arg0: i32, %arg1: i32) -> (i32, i32) {
    %c0_i32 = arith.constant 0 : i32
    %c0_i32_0 = arith.constant 0 : i32
    return %arg0, %c0_i32 : i32, i32
  }
  func.func @transform_1(%arg0: i32, %arg1: i32) -> (i32, i32) {
    %c0_i32 = arith.constant 0 : i32
    %c0_i32_0 = arith.constant 0 : i32
    return %c0_i32, %arg1 : i32, i32
  }
  func.func @transform_2(%arg0: i32, %arg1: i32) -> (i32, i32) {
    %c0_i32 = arith.constant 0 : i32
    %c0_i32_0 = arith.constant 0 : i32
    return %c0_i32, %arg1 : i32, i32
  }
  func.func @transform_3(%arg0: i32, %arg1: i32) -> (i32, i32) {
    %c0_i32 = arith.constant 0 : i32
    return %arg0, %arg1 : i32, i32
  }
}

module attributes {stable_mosaic.version = 11 : i64} {
  func.func @_add_ln_kernel(%arg0: i32, %arg1: memref<16x32xf32, #tpu.memory_space<vmem>>, %arg2: memref<16x32xf32, #tpu.memory_space<vmem>>, %arg3: memref<1x32xf32, #tpu.memory_space<vmem>>, %arg4: memref<1x32xf32, #tpu.memory_space<vmem>>, %arg5: memref<16x32xf32, #tpu.memory_space<vmem>>) attributes {dimension_semantics = [#tpu.dimension_semantics<parallel>], iteration_bounds = array<i64: 1>, scalar_prefetch = 0 : i64, scratch_operands = 0 : i64, tpu.core_type = #tpu.core_type<tc>, window_params = [{transform_indices = @transform_0, window_bounds = array<i64: 16, 32>}, {transform_indices = @transform_1, window_bounds = array<i64: 16, 32>}, {pipeline_mode = #tpu.pipeline_mode<synchronous>, transform_indices = @transform_2, window_bounds = array<i64: 1, 32>}, {pipeline_mode = #tpu.pipeline_mode<synchronous>, transform_indices = @transform_3, window_bounds = array<i64: 1, 32>}, {transform_indices = @transform_4, window_bounds = array<i64: 16, 32>}]} {
    %c0 = arith.constant 0 : index
    %c0_0 = arith.constant 0 : index
    %0 = vector.load %arg1[%c0, %c0_0] : memref<16x32xf32, #tpu.memory_space<vmem>>, vector<16x32xf32>
    %c0_1 = arith.constant 0 : index
    %c0_2 = arith.constant 0 : index
    %1 = vector.load %arg2[%c0_1, %c0_2] : memref<16x32xf32, #tpu.memory_space<vmem>>, vector<16x32xf32>
    %2 = arith.addf %0, %1 : vector<16x32xf32>
    %cst = arith.constant dense<0.000000e+00> : vector<16xf32>
    %3 = vector.multi_reduction <add>, %2, %cst [1] : vector<16x32xf32> to vector<16xf32>
    %4 = vector.shape_cast %3 : vector<16xf32> to vector<16x1xf32>
    %cst_3 = arith.constant 3.200000e+01 : f32
    %5 = vector.broadcast %cst_3 : f32 to vector<16x1xf32>
    %6 = arith.divf %4, %5 : vector<16x1xf32>
    %7 = vector.broadcast %6 : vector<16x1xf32> to vector<16x32xf32>
    %8 = arith.subf %2, %7 : vector<16x32xf32>
    %9 = arith.mulf %8, %8 : vector<16x32xf32>
    %cst_4 = arith.constant dense<0.000000e+00> : vector<16xf32>
    %10 = vector.multi_reduction <add>, %9, %cst_4 [1] : vector<16x32xf32> to vector<16xf32>
    %11 = vector.shape_cast %10 : vector<16xf32> to vector<16x1xf32>
    %cst_5 = arith.constant 3.200000e+01 : f32
    %12 = vector.broadcast %cst_5 : f32 to vector<16x1xf32>
    %13 = arith.divf %11, %12 : vector<16x1xf32>
    %cst_6 = arith.constant 9.99999974E-6 : f32
    %14 = vector.broadcast %cst_6 : f32 to vector<16x1xf32>
    %15 = arith.addf %13, %14 : vector<16x1xf32>
    %16 = math.rsqrt %15 : vector<16x1xf32>
    %17 = vector.broadcast %16 : vector<16x1xf32> to vector<16x32xf32>
    %18 = arith.mulf %8, %17 : vector<16x32xf32>
    %c0_7 = arith.constant 0 : index
    %c0_8 = arith.constant 0 : index
    %19 = vector.load %arg3[%c0_7, %c0_8] : memref<1x32xf32, #tpu.memory_space<vmem>>, vector<1x32xf32>
    %20 = vector.broadcast %19 : vector<1x32xf32> to vector<16x32xf32>
    %21 = arith.mulf %18, %20 : vector<16x32xf32>
    %c0_9 = arith.constant 0 : index
    %c0_10 = arith.constant 0 : index
    %22 = vector.load %arg4[%c0_9, %c0_10] : memref<1x32xf32, #tpu.memory_space<vmem>>, vector<1x32xf32>
    %23 = vector.broadcast %22 : vector<1x32xf32> to vector<16x32xf32>
    %24 = arith.addf %21, %23 : vector<16x32xf32>
    %c0_11 = arith.constant 0 : index
    %c0_12 = arith.constant 0 : index
    %25 = vector.load %arg5[%c0_11, %c0_12] : memref<16x32xf32, #tpu.memory_space<vmem>>, vector<16x32xf32>
    tpu.vector_store %arg5[%c0_11, %c0_12], %24 {strides = array<i32>} : memref<16x32xf32, #tpu.memory_space<vmem>>, vector<16x32xf32>,
    return
  }
  func.func @transform_0(%arg0: i32) -> (i32, i32) {
    %c0_i32 = arith.constant 0 : i32
    %c0_i32_0 = arith.constant 0 : i32
    return %arg0, %c0_i32 : i32, i32
  }
  func.func @transform_1(%arg0: i32) -> (i32, i32) {
    %c0_i32 = arith.constant 0 : i32
    %c0_i32_0 = arith.constant 0 : i32
    return %arg0, %c0_i32 : i32, i32
  }
  func.func @transform_2(%arg0: i32) -> (i32, i32) {
    %c0_i32 = arith.constant 0 : i32
    %c0_i32_0 = arith.constant 0 : i32
    %c0_i32_1 = arith.constant 0 : i32
    return %c0_i32, %c0_i32_0 : i32, i32
  }
  func.func @transform_3(%arg0: i32) -> (i32, i32) {
    %c0_i32 = arith.constant 0 : i32
    %c0_i32_0 = arith.constant 0 : i32
    %c0_i32_1 = arith.constant 0 : i32
    return %c0_i32, %c0_i32_0 : i32, i32
  }
  func.func @transform_4(%arg0: i32) -> (i32, i32) {
    %c0_i32 = arith.constant 0 : i32
    %c0_i32_0 = arith.constant 0 : i32
    return %arg0, %c0_i32 : i32, i32
  }
}

</mosaic_0001>

<llo_original>
// kernel: decoder_gat_layer_forward.13
$region0: #{decoder_gat_layer_forward.13}
  #allocation0 [shape = 'u32[]', space=smem, size = 0x4, offset = 0x4, fixed_abs, tag = 'smem constant byte address 0x4 - core index']
  #allocation1 [shape = 'u32[144,128]{1,0:T(1,128)}', space=vmem, size = 0x12000, scoped, tag = 'internal scratch']
  %s0 = inlined_call_operand.vmem [shape: f32[16,32], index: 0, kind: input, shape index: {}]
  %s1 = inlined_call_operand.vmem [shape: bf16[32,96], index: 1, kind: input, shape index: {}]
  %s2 = inlined_call_operand.vmem [shape: f32[1,96], index: 2, kind: input, shape index: {}]
  %s3 = inlined_call_operand.vmem [shape: f32[16,96], index: 3, kind: output, shape index: {}]
  %s4 = sld [smem:[#allocation0]]
  $region22: #{decoder_gat_layer_forward.13} parent=0
    _
  %s6 = ssub.s32 1, %s4
  %s7 = scalar_select 0, %s6, %s4
  // Predicated region
  $region2: #{decoder_gat_layer_forward.13} parent=0 // pred_check
    _
  $region3: #{decoder_gat_layer_forward.13} parent=0 // pred_check_branch
    %9 = sbr.rel (0) target = $region5
  $region4: #{decoder_gat_layer_forward.13} parent=0 // pred_region
    _
  $region5: #{decoder_gat_layer_forward.13} parent=0 // pred_fallthru
    _
  // Predicated region
  $region6: #{decoder_gat_layer_forward.13} parent=0 // pred_check
    _
  $region7: #{decoder_gat_layer_forward.13} parent=0 // pred_check_branch
    %11 = sbr.rel (0) target = $region9
  $region8: #{decoder_gat_layer_forward.13} parent=0 // pred_region
    _
  $region9: #{decoder_gat_layer_forward.13} parent=0 // pred_fallthru
    _
  // Predicated region
  $region10: #{decoder_gat_layer_forward.13} parent=0 // pred_check
    _
  $region11: #{decoder_gat_layer_forward.13} parent=0 // pred_check_branch
    %13 = sbr.rel (0) target = $region13
  $region12: #{decoder_gat_layer_forward.13} parent=0 // pred_region
    _
  $region13: #{decoder_gat_layer_forward.13} parent=0 // pred_fallthru
    _
  %v15 = vld [vmem:[%s0] sm:$0xff]
  %v16 = vld [vmem:[%s0 + $0x8] sm:$0xff]
  %v17 = vpack.c.bf16 %v16, %v15
  %v18 = vld [vmem:[%s1] sm:$0xf]
  %v19 = vld [vmem:[%s1 + $0x4] sm:$0xf]
  %v20 = vld [vmem:[%s1 + $0x8] sm:$0xf]
  %v21 = vld [vmem:[%s1 + $0xc] sm:$0xf]
  %v22 = vld [vmem:[%s2] sm:$0x1]
  %v24 = vlaneseq
  %v25 = vshrl.u32 %v24, 7
  %v26 = vsub.s32 0, %v25
  %v27 = vrot.slane %v22, %v26
  %v33 = vunpack.c.l.b16 %v18
  %v34 = vunpack.c.l.b16 %v19
  %v35 = vunpack.c.l.b16 %v20
  %v36 = vunpack.c.l.b16 %v21
  %v37 = vpack.c.b16 %v34, %v33
  %v38 = vpack.c.b16 %v36, %v35
  %vm41 = vcmask 261120
  %v43 = vsel %vm41, %v17, 0
  %45 = vmatprep.subr.bf16.mxu0 0
  %46 = vmatpush1.bf16.msra.mxu0 0
  %47 = vmatprep.subr.bf16.mxu0 0
  %48 = vmatpush1.bf16.msra.mxu0 0
  %49 = vmatprep.subr.bf16.mxu0 0
  %50 = vmatpush1.bf16.msra.mxu0 0
  %51 = vmatprep.subr.bf16.mxu0 0
  %52 = vmatpush1.bf16.msra.mxu0 0
  %53 = vmatprep.subr.bf16.mxu0 0
  %54 = vmatpush1.bf16.msra.mxu0 0
  %55 = vmatprep.subr.bf16.mxu0 0
  %56 = vmatpush1.bf16.msra.mxu0 0
  %57 = vmatprep.subr.bf16.mxu0 0
  %58 = vmatpush1.bf16.msra.mxu0 %v38
  %59 = vmatprep.subr.bf16.mxu0 0
  %60 = vmatpush1.bf16.msra.mxu0 %v37
  %61 = vmatprep.subr.bf16.mxu0 0
  %62 = vmatpush2.bf16.msra.mxu0 0
  %63 = vmatprep.subr.bf16.mxu0 0
  %64 = vmatpush2.bf16.msra.mxu0 0
  %65 = vmatprep.subr.bf16.mxu0 0
  %66 = vmatpush2.bf16.msra.mxu0 0
  %67 = vmatprep.subr.bf16.mxu0 0
  %68 = vmatpush2.bf16.msra.mxu0 0
  %69 = vmatprep.subr.bf16.mxu0 0
  %70 = vmatpush2.bf16.msra.mxu0 0
  %71 = vmatprep.subr.bf16.mxu0 0
  %72 = vmatpush2.bf16.msra.mxu0 0
  %73 = vmatprep.subr.bf16.mxu0 0
  %74 = vmatpush2.bf16.msra.mxu0 0
  %75 = vmatprep.subr.bf16.mxu0 0
  %76 = vmatpush2.bf16.msra.mxu0 0
  %77 = vmatprep.mubr.bf16.mxu0 0
  %78 = vmatmul.mubr.bf16.gmra.mxu0 %v43
  %v79 = vpop.f32.mrf.mxu0
  %v80 = vadd.f32 %v27, %v79
  %v81 = vpop.f32.mrf.mxu0
  %v82 = vpop.f32.mrf.mxu0
  %v83 = vadd.f32 %v27, %v82
  %v84 = vpop.f32.mrf.mxu0
  %85 = vdwg.mxu0
  %vm86 = vcmask 785408
  %87 = vst.msk [vmem:[%s3] sm:$0xff] %vm86, %v80
  %88 = vst.msk [vmem:[%s3 + $0x8] sm:$0xff] %vm86, %v83
  // Predicated region
  $region14: #{decoder_gat_layer_forward.13} parent=0 // pred_check
    _
  $region15: #{decoder_gat_layer_forward.13} parent=0 // pred_check_branch
    %90 = sbr.rel (0) target = $region17
  $region16: #{decoder_gat_layer_forward.13} parent=0 // pred_region
    _
  $region17: #{decoder_gat_layer_forward.13} parent=0 // pred_fallthru
    _
  // Predicated region
  $region18: #{decoder_gat_layer_forward.13} parent=0 // pred_check
    _
  $region19: #{decoder_gat_layer_forward.13} parent=0 // pred_check_branch
    %92 = sbr.rel (0) target = $region21
  $region20: #{decoder_gat_layer_forward.13} parent=0 // pred_region
    _
  $region21: #{decoder_gat_layer_forward.13} parent=0 // pred_fallthru
    _

// kernel: decoder_gat_layer_forward.15
$region0: #{decoder_gat_layer_forward.15}
  #allocation0 [shape = 'u32[]', space=smem, size = 0x4, offset = 0x4, fixed_abs, tag = 'smem constant byte address 0x4 - core index']
  #allocation1 [shape = 'u32[144,128]{1,0:T(1,128)}', space=vmem, size = 0x12000, scoped, tag = 'internal scratch']
  %s0 = inlined_call_operand.vmem [shape: f32[16,32], index: 0, kind: input, shape index: {}]
  %s1 = inlined_call_operand.vmem [shape: bf16[32,32], index: 1, kind: input, shape index: {}]
  %s2 = inlined_call_operand.vmem [shape: f32[1,32], index: 2, kind: input, shape index: {}]
  %s3 = inlined_call_operand.vmem [shape: f32[16,32], index: 3, kind: output, shape index: {}]
  %s4 = sld [smem:[#allocation0]]
  $region22: #{decoder_gat_layer_forward.15} parent=0
    _
  %s6 = ssub.s32 1, %s4
  %s7 = scalar_select 0, %s6, %s4
  // Predicated region
  $region2: #{decoder_gat_layer_forward.15} parent=0 // pred_check
    _
  $region3: #{decoder_gat_layer_forward.15} parent=0 // pred_check_branch
    %9 = sbr.rel (0) target = $region5
  $region4: #{decoder_gat_layer_forward.15} parent=0 // pred_region
    _
  $region5: #{decoder_gat_layer_forward.15} parent=0 // pred_fallthru
    _
  // Predicated region
  $region6: #{decoder_gat_layer_forward.15} parent=0 // pred_check
    _
  $region7: #{decoder_gat_layer_forward.15} parent=0 // pred_check_branch
    %11 = sbr.rel (0) target = $region9
  $region8: #{decoder_gat_layer_forward.15} parent=0 // pred_region
    _
  $region9: #{decoder_gat_layer_forward.15} parent=0 // pred_fallthru
    _
  // Predicated region
  $region10: #{decoder_gat_layer_forward.15} parent=0 // pred_check
    _
  $region11: #{decoder_gat_layer_forward.15} parent=0 // pred_check_branch
    %13 = sbr.rel (0) target = $region13
  $region12: #{decoder_gat_layer_forward.15} parent=0 // pred_region
    _
  $region13: #{decoder_gat_layer_forward.15} parent=0 // pred_fallthru
    _
  %v15 = vld [vmem:[%s0] sm:$0xff]
  %v16 = vld [vmem:[%s0 + $0x8] sm:$0xff]
  %v17 = vpack.c.bf16 %v16, %v15
  %v18 = vld [vmem:[%s1] sm:$0xf]
  %v19 = vld [vmem:[%s1 + $0x4] sm:$0xf]
  %v20 = vld [vmem:[%s1 + $0x8] sm:$0xf]
  %v21 = vld [vmem:[%s1 + $0xc] sm:$0xf]
  %v22 = vld [vmem:[%s2] sm:$0x1]
  %v24 = vlaneseq
  %v25 = vshrl.u32 %v24, 7
  %v26 = vsub.s32 0, %v25
  %v27 = vrot.slane %v22, %v26
  %v33 = vunpack.c.l.b16 %v18
  %v34 = vunpack.c.l.b16 %v19
  %v35 = vunpack.c.l.b16 %v20
  %v36 = vunpack.c.l.b16 %v21
  %v37 = vpack.c.b16 %v34, %v33
  %v38 = vpack.c.b16 %v36, %v35
  %vm41 = vcmask 261120
  %v43 = vsel %vm41, %v17, 0
  %45 = vmatprep.subr.bf16.mxu0 0
  %46 = vmatpush1.bf16.msra.mxu0 0
  %47 = vmatprep.subr.bf16.mxu0 0
  %48 = vmatpush1.bf16.msra.mxu0 0
  %49 = vmatprep.subr.bf16.mxu0 0
  %50 = vmatpush1.bf16.msra.mxu0 0
  %51 = vmatprep.subr.bf16.mxu0 0
  %52 = vmatpush1.bf16.msra.mxu0 0
  %53 = vmatprep.subr.bf16.mxu0 0
  %54 = vmatpush1.bf16.msra.mxu0 0
  %55 = vmatprep.subr.bf16.mxu0 0
  %56 = vmatpush1.bf16.msra.mxu0 0
  %57 = vmatprep.subr.bf16.mxu0 0
  %58 = vmatpush1.bf16.msra.mxu0 %v38
  %59 = vmatprep.subr.bf16.mxu0 0
  %60 = vmatpush1.bf16.msra.mxu0 %v37
  %61 = vmatprep.subr.bf16.mxu0 0
  %62 = vmatpush2.bf16.msra.mxu0 0
  %63 = vmatprep.subr.bf16.mxu0 0
  %64 = vmatpush2.bf16.msra.mxu0 0
  %65 = vmatprep.subr.bf16.mxu0 0
  %66 = vmatpush2.bf16.msra.mxu0 0
  %67 = vmatprep.subr.bf16.mxu0 0
  %68 = vmatpush2.bf16.msra.mxu0 0
  %69 = vmatprep.subr.bf16.mxu0 0
  %70 = vmatpush2.bf16.msra.mxu0 0
  %71 = vmatprep.subr.bf16.mxu0 0
  %72 = vmatpush2.bf16.msra.mxu0 0
  %73 = vmatprep.subr.bf16.mxu0 0
  %74 = vmatpush2.bf16.msra.mxu0 0
  %75 = vmatprep.subr.bf16.mxu0 0
  %76 = vmatpush2.bf16.msra.mxu0 0
  %77 = vmatprep.mubr.bf16.mxu0 0
  %78 = vmatmul.mubr.bf16.gmra.mxu0 %v43
  %v79 = vpop.f32.mrf.mxu0
  %v80 = vadd.f32 %v27, %v79
  %v81 = vpop.f32.mrf.mxu0
  %v82 = vpop.f32.mrf.mxu0
  %v83 = vadd.f32 %v27, %v82
  %v84 = vpop.f32.mrf.mxu0
  %85 = vdwg.mxu0
  %86 = vst.msk [vmem:[%s3] sm:$0xff] %vm41, %v80
  %87 = vst.msk [vmem:[%s3 + $0x8] sm:$0xff] %vm41, %v83
  // Predicated region
  $region14: #{decoder_gat_layer_forward.15} parent=0 // pred_check
    _
  $region15: #{decoder_gat_layer_forward.15} parent=0 // pred_check_branch
    %89 = sbr.rel (0) target = $region17
  $region16: #{decoder_gat_layer_forward.15} parent=0 // pred_region
    _
  $region17: #{decoder_gat_layer_forward.15} parent=0 // pred_fallthru
    _
  // Predicated region
  $region18: #{decoder_gat_layer_forward.15} parent=0 // pred_check
    _
  $region19: #{decoder_gat_layer_forward.15} parent=0 // pred_check_branch
    %91 = sbr.rel (0) target = $region21
  $region20: #{decoder_gat_layer_forward.15} parent=0 // pred_region
    _
  $region21: #{decoder_gat_layer_forward.15} parent=0 // pred_fallthru
    _

// kernel: decoder_gat_layer_forward.16
$region0: #{decoder_gat_layer_forward.16}
  #allocation0 [shape = 'u32[]', space=smem, size = 0x4, offset = 0x4, fixed_abs, tag = 'smem constant byte address 0x4 - core index']
  #allocation1 [shape = 'u32[144,128]{1,0:T(1,128)}', space=vmem, size = 0x12000, scoped, tag = 'internal scratch']
  %s0 = inlined_call_operand.vmem [shape: f32[16,32], index: 0, kind: input, shape index: {}]
  %s1 = inlined_call_operand.vmem [shape: f32[16,32], index: 1, kind: input, shape index: {}]
  %s2 = inlined_call_operand.vmem [shape: f32[1,32], index: 2, kind: input, shape index: {}]
  %s3 = inlined_call_operand.vmem [shape: f32[1,32], index: 3, kind: input, shape index: {}]
  %s4 = inlined_call_operand.vmem [shape: f32[16,32], index: 4, kind: output, shape index: {}]
  %s5 = sld [smem:[#allocation0]]
  $region26: #{decoder_gat_layer_forward.16} parent=0
    _
  %s7 = ssub.s32 1, %s5
  %s8 = scalar_select 0, %s7, %s5
  // Predicated region
  $region2: #{decoder_gat_layer_forward.16} parent=0 // pred_check
    _
  $region3: #{decoder_gat_layer_forward.16} parent=0 // pred_check_branch
    %10 = sbr.rel (0) target = $region5
  $region4: #{decoder_gat_layer_forward.16} parent=0 // pred_region
    _
  $region5: #{decoder_gat_layer_forward.16} parent=0 // pred_fallthru
    _
  // Predicated region
  $region6: #{decoder_gat_layer_forward.16} parent=0 // pred_check
    _
  $region7: #{decoder_gat_layer_forward.16} parent=0 // pred_check_branch
    %12 = sbr.rel (0) target = $region9
  $region8: #{decoder_gat_layer_forward.16} parent=0 // pred_region
    _
  $region9: #{decoder_gat_layer_forward.16} parent=0 // pred_fallthru
    _
  // Predicated region
  $region10: #{decoder_gat_layer_forward.16} parent=0 // pred_check
    _
  $region11: #{decoder_gat_layer_forward.16} parent=0 // pred_check_branch
    %14 = sbr.rel (0) target = $region13
  $region12: #{decoder_gat_layer_forward.16} parent=0 // pred_region
    _
  $region13: #{decoder_gat_layer_forward.16} parent=0 // pred_fallthru
    _
  // Predicated region
  $region14: #{decoder_gat_layer_forward.16} parent=0 // pred_check
    _
  $region15: #{decoder_gat_layer_forward.16} parent=0 // pred_check_branch
    %16 = sbr.rel (0) target = $region17
  $region16: #{decoder_gat_layer_forward.16} parent=0 // pred_region
    _
  $region17: #{decoder_gat_layer_forward.16} parent=0 // pred_fallthru
    _
  %v17 = vld [vmem:[%s0] sm:$0xff]
  %v18 = vld [vmem:[%s0 + $0x8] sm:$0xff]
  %v19 = vld [vmem:[%s1] sm:$0xff]
  %v20 = vld [vmem:[%s1 + $0x8] sm:$0xff]
  %v21 = vadd.f32 %v17, %v19
  %v22 = vadd.f32 %v18, %v20
  %vm23 = vcmask 261120
  %v24 = vsel %vm23, %v21, 0.0
  %25 = vadd.xlane.f32.xlu0 %v24
  %v26 = vpop.xlane.xlu0 %25
  %v27 = vsel %vm23, %v22, 0.0
  %28 = vadd.xlane.f32.xlu0 %v27
  %v29 = vpop.xlane.xlu0 %28
  %v30 = vrcp.pop 32.0
  %v31 = vmul.f32 %v26, %v30
  %v32 = vmul.f32 %v29, %v30
  %v33 = vsub.f32 %v21, %v31
  %v34 = vsub.f32 %v22, %v32
  %v35 = vmul.f32 %v33, %v33
  %v36 = vmul.f32 %v34, %v34
  %v37 = vsel %vm23, %v35, 0.0
  %38 = vadd.xlane.f32.xlu0 %v37
  %v39 = vpop.xlane.xlu0 %38
  %v40 = vsel %vm23, %v36, 0.0
  %41 = vadd.xlane.f32.xlu0 %v40
  %v42 = vpop.xlane.xlu0 %41
  %v43 = vmul.f32 %v39, %v30
  %v44 = vmul.f32 %v42, %v30
  %v45 = vadd.f32 %v43, 1e-05
  %v46 = vadd.f32 %v44, 1e-05
  %v47 = vrsqrt.pop %v45
  %v48 = vrsqrt.pop %v46
  %v49 = vmul.f32 %v33, %v47
  %v50 = vmul.f32 %v34, %v48
  %v51 = vld [vmem:[%s2] sm:$0x1]
  %v53 = vlaneseq
  %v54 = vshrl.u32 %v53, 7
  %v55 = vsub.s32 0, %v54
  %v56 = vrot.slane %v51, %v55
  %v58 = vmul.f32 %v49, %v56
  %v59 = vmul.f32 %v50, %v56
  %v60 = vld [vmem:[%s3] sm:$0x1]
  %v62 = vlaneseq
  %v63 = vshrl.u32 %v62, 7
  %v64 = vsub.s32 0, %v63
  %v65 = vrot.slane %v60, %v64
  %v67 = vadd.f32 %v58, %v65
  %v68 = vadd.f32 %v59, %v65
  %69 = vst.msk [vmem:[%s4] sm:$0xff] %vm23, %v67
  %70 = vst.msk [vmem:[%s4 + $0x8] sm:$0xff] %vm23, %v68
  // Predicated region
  $region18: #{decoder_gat_layer_forward.16} parent=0 // pred_check
    _
  $region19: #{decoder_gat_layer_forward.16} parent=0 // pred_check_branch
    %72 = sbr.rel (0) target = $region21
  $region20: #{decoder_gat_layer_forward.16} parent=0 // pred_region
    _
  $region21: #{decoder_gat_layer_forward.16} parent=0 // pred_fallthru
    _
  // Predicated region
  $region22: #{decoder_gat_layer_forward.16} parent=0 // pred_check
    _
  $region23: #{decoder_gat_layer_forward.16} parent=0 // pred_check_branch
    %74 = sbr.rel (0) target = $region25
  $region24: #{decoder_gat_layer_forward.16} parent=0 // pred_region
    _
  $region25: #{decoder_gat_layer_forward.16} parent=0 // pred_fallthru
    _

// kernel: decoder_gat_layer_forward.14
$region0: #{decoder_gat_layer_forward.14}
  #allocation0 [shape = 'u32[]', space=smem, size = 0x4, offset = 0x4, fixed_abs, tag = 'smem constant byte address 0x4 - core index']
  #allocation1 [shape = 'u32[144,128]{1,0:T(1,128)}', space=vmem, size = 0x12000, scoped, tag = 'internal scratch']
  %s0 = inlined_call_operand.vmem [shape: bf16[2,2,8,16], index: 0, kind: input, shape index: {}]
  %s1 = inlined_call_operand.vmem [shape: bf16[2,2,8,16], index: 1, kind: input, shape index: {}]
  %s2 = inlined_call_operand.vmem [shape: bf16[2,2,8,16], index: 2, kind: input, shape index: {}]
  %s3 = inlined_call_operand.vmem [shape: f32[2,1,8], index: 3, kind: input, shape index: {}]
  %s4 = inlined_call_operand.vmem [shape: f32[2,8,32], index: 4, kind: output, shape index: {0}]
  %s5 = inlined_call_operand.hbm [shape: f32[2,2,8,8], index: 5, kind: output, shape index: {1}]
  %6 = xla_tuple %s4, %s5
  %s7 = sld [smem:[#allocation0]]
  $region57: #{decoder_gat_layer_forward.14} parent=0
    _
  %s9 = ssub.s32 1, %s7
  %s10 = scalar_select 0, %s9, %s7
  $region1: #{decoder_gat_layer_forward.14} parent=0
    #allocation2 [shape = 'u8[16384]{0}', space=vmem, size = 0x4000, scoped, tag = 'output window, operand 1']
    #allocation3 [shape = 's32[2]{0}', space=sflag, size = 0x8, scoped, tag = 'scoped memory for decoder_gat_layer_forward.14']
    %11 = vsyncpa [#allocation3], 0
    %s12 = scalar_lea.sflag [#allocation3], 1
    %13 = vsyncpa %s12, 0
    loop: start=0, step=1, limit=4
    $region2: #{decoder_gat_layer_forward.14} parent=1 // loop_pre_header
      _
    $region3: #{decoder_gat_layer_forward.14} parent=1 // loop_header
      %s15 = sphi 0, %s19
      %p16 = scmp.ge.s32.totalorder %s15, 4
      %s22 = sphi 0, %s34
      %s23 = sphi 0, %s30
      %s24 = sphi 0, %s22
      %s25 = sphi 0, %s23
      %s26 = sphi 0, %s24
      %s27 = sphi 0, %s25
      %s39 = sphi 0, %s41
      %s42 = sphi 0, %s39
      %s43 = sphi 0, %s42
      %s59 = sphi 0, %s43
      %s65 = sphi 0, %s67
      %s68 = sphi 0, %s65
      %s69 = sphi 0, %s68
      %s85 = sphi 0, %s69
      %s91 = sphi 0, %s93
      %s94 = sphi 0, %s91
      %s95 = sphi 0, %s94
      %s111 = sphi 0, %s95
      %s117 = sphi 0, %s119
      %s120 = sphi 0, %s117
      %s121 = sphi 0, %s120
      %s137 = sphi 0, %s121
      %s145 = sphi 0, %s147
      %s148 = sphi 0, %s145
      %s149 = sphi 0, %s148
      %s165 = sphi 0, %s149
      %s173 = sphi 0, %s175
      %s176 = sphi 0, %s173
      %s177 = sphi 0, %s176
      %s193 = sphi 0, %s177
    $region4: #{decoder_gat_layer_forward.14} parent=1 // loop_header_branch
      %18 = sbr.rel (%p16) target = $region8
    $region5: #{decoder_gat_layer_forward.14} parent=1 // loop_body
      %s20 = ssub.s32 %s15, 1
      %s21 = ssub.s32 %s15, 2
      %s28 = sadd.s32 1, %s23
      %p29 = scmp.ge.s32.totalorder %s28, 1
      %s30 = scalar_select %p29, 0, %s28
      %s31 = sadd.s32 1, %s22
      %s32 = scalar_select %p29, %s31, %s22
      %p33 = scmp.ge.s32.totalorder %s32, 2
      %s34 = scalar_select %p33, 0, %s32
      %s35 = ssub.s32 %s22, %s34
      %s36 = ssub.s32 %s23, %s30
      %s37 = sor.u32 %s35, %s36
      %p38 = scmp.eq.s32.totalorder %s37, 0
      %s40 = sadd.s32 %s39, 1
      %s41 = scalar_select %p38, %s39, %s40
      %p44 = pneg %p38
      %p45 = scmp.eq.s32.totalorder %s15, 1
      %p46 = por %p44, %p45
      %p47 = scmp.ne.s32.totalorder %s39, %s42
      %p48 = scmp.eq.s32.totalorder %s15, 0
      %p49 = por %p47, %p48
      %p50 = scmp.ne.s32.totalorder %s39, %s42
      %p51 = scmp.eq.s32.totalorder %s20, 1
      %p52 = por %p50, %p51
      %p53 = scmp.ne.s32.totalorder %s42, %s43
      %p54 = scmp.eq.s32.totalorder %s20, 0
      %p55 = por %p53, %p54
      %p56 = scmp.ne.s32.totalorder %s42, %s43
      %p57 = scmp.eq.s32.totalorder %s21, 1
      %p58 = por %p56, %p57
      %p60 = scmp.ne.s32.totalorder %s43, %s59
      %p61 = scmp.eq.s32.totalorder %s21, 0
      %p62 = por %p60, %p61
      %s63 = ssub.s32 %s22, %s34
      %p64 = scmp.eq.s32.totalorder %s63, 0
      %s66 = sadd.s32 %s65, 1
      %s67 = scalar_select %p64, %s65, %s66
      %p70 = pneg %p64
      %p71 = scmp.eq.s32.totalorder %s15, 1
      %p72 = por %p70, %p71
      %p73 = scmp.ne.s32.totalorder %s65, %s68
      %p74 = scmp.eq.s32.totalorder %s15, 0
      %p75 = por %p73, %p74
      %p76 = scmp.ne.s32.totalorder %s65, %s68
      %p77 = scmp.eq.s32.totalorder %s20, 1
      %p78 = por %p76, %p77
      %p79 = scmp.ne.s32.totalorder %s68, %s69
      %p80 = scmp.eq.s32.totalorder %s20, 0
      %p81 = por %p79, %p80
      %p82 = scmp.ne.s32.totalorder %s68, %s69
      %p83 = scmp.eq.s32.totalorder %s21, 1
      %p84 = por %p82, %p83
      %p86 = scmp.ne.s32.totalorder %s69, %s85
      %p87 = scmp.eq.s32.totalorder %s21, 0
      %p88 = por %p86, %p87
      %s89 = ssub.s32 %s22, %s34
      %p90 = scmp.eq.s32.totalorder %s89, 0
      %s92 = sadd.s32 %s91, 1
      %s93 = scalar_select %p90, %s91, %s92
      %p96 = pneg %p90
      %p97 = scmp.eq.s32.totalorder %s15, 1
      %p98 = por %p96, %p97
      %p99 = scmp.ne.s32.totalorder %s91, %s94
      %p100 = scmp.eq.s32.totalorder %s15, 0
      %p101 = por %p99, %p100
      %p102 = scmp.ne.s32.totalorder %s91, %s94
      %p103 = scmp.eq.s32.totalorder %s20, 1
      %p104 = por %p102, %p103
      %p105 = scmp.ne.s32.totalorder %s94, %s95
      %p106 = scmp.eq.s32.totalorder %s20, 0
      %p107 = por %p105, %p106
      %p108 = scmp.ne.s32.totalorder %s94, %s95
      %p109 = scmp.eq.s32.totalorder %s21, 1
      %p110 = por %p108, %p109
      %p112 = scmp.ne.s32.totalorder %s95, %s111
      %p113 = scmp.eq.s32.totalorder %s21, 0
      %p114 = por %p112, %p113
      %s115 = ssub.s32 %s22, %s34
      %p116 = scmp.eq.s32.totalorder %s115, 0
      %s118 = sadd.s32 %s117, 1
      %s119 = scalar_select %p116, %s117, %s118
      %p122 = pneg %p116
      %p123 = scmp.eq.s32.totalorder %s15, 1
      %p124 = por %p122, %p123
      %p125 = scmp.ne.s32.totalorder %s117, %s120
      %p126 = scmp.eq.s32.totalorder %s15, 0
      %p127 = por %p125, %p126
      %p128 = scmp.ne.s32.totalorder %s117, %s120
      %p129 = scmp.eq.s32.totalorder %s20, 1
      %p130 = por %p128, %p129
      %p131 = scmp.ne.s32.totalorder %s120, %s121
      %p132 = scmp.eq.s32.totalorder %s20, 0
      %p133 = por %p131, %p132
      %p134 = scmp.ne.s32.totalorder %s120, %s121
      %p135 = scmp.eq.s32.totalorder %s21, 1
      %p136 = por %p134, %p135
      %p138 = scmp.ne.s32.totalorder %s121, %s137
      %p139 = scmp.eq.s32.totalorder %s21, 0
      %p140 = por %p138, %p139
      %s141 = ssub.s32 %s22, %s34
      %s142 = ssub.s32 %s23, %s30
      %s143 = sor.u32 %s141, %s142
      %p144 = scmp.eq.s32.totalorder %s143, 0
      %s146 = sadd.s32 %s145, 1
      %s147 = scalar_select %p144, %s145, %s146
      %p150 = pneg %p144
      %p151 = scmp.eq.s32.totalorder %s15, 1
      %p152 = por %p150, %p151
      %p153 = scmp.ne.s32.totalorder %s145, %s148
      %p154 = scmp.eq.s32.totalorder %s15, 0
      %p155 = por %p153, %p154
      %p156 = scmp.ne.s32.totalorder %s145, %s148
      %p157 = scmp.eq.s32.totalorder %s20, 1
      %p158 = por %p156, %p157
      %p159 = scmp.ne.s32.totalorder %s148, %s149
      %p160 = scmp.eq.s32.totalorder %s20, 0
      %p161 = por %p159, %p160
      %p162 = scmp.ne.s32.totalorder %s148, %s149
      %p163 = scmp.eq.s32.totalorder %s21, 1
      %p164 = por %p162, %p163
      %p166 = scmp.ne.s32.totalorder %s149, %s165
      %p167 = scmp.eq.s32.totalorder %s21, 0
      %p168 = por %p166, %p167
      %s169 = ssub.s32 %s22, %s34
      %s170 = ssub.s32 %s23, %s30
      %s171 = sor.u32 %s169, %s170
      %p172 = scmp.eq.s32.totalorder %s171, 0
      %s174 = sadd.s32 %s173, 1
      %s175 = scalar_select %p172, %s173, %s174
      %p178 = pneg %p172
      %p179 = scmp.eq.s32.totalorder %s15, 1
      %p180 = por %p178, %p179
      %p181 = scmp.ne.s32.totalorder %s173, %s176
      %p182 = scmp.eq.s32.totalorder %s15, 0
      %p183 = por %p181, %p182
      %p184 = scmp.ne.s32.totalorder %s173, %s176
      %p185 = scmp.eq.s32.totalorder %s20, 1
      %p186 = por %p184, %p185
      %p187 = scmp.ne.s32.totalorder %s176, %s177
      %p188 = scmp.eq.s32.totalorder %s20, 0
      %p189 = por %p187, %p188
      %p190 = scmp.ne.s32.totalorder %s176, %s177
      %p191 = scmp.eq.s32.totalorder %s21, 1
      %p192 = por %p190, %p191
      %p194 = scmp.ne.s32.totalorder %s177, %s193
      %p195 = scmp.eq.s32.totalorder %s21, 0
      %p196 = por %p194, %p195
      %p197 = scmp.le.s32.totalorder 1, %s15
      %p198 = scmp.lt.s32.totalorder %s15, 3
      %p199 = pnand %p197, %p198
      %p200 = pneg %p199
      // Predicated region
      $region9: #{decoder_gat_layer_forward.14} parent=5 // pred_check
        _
      $region10: #{decoder_gat_layer_forward.14} parent=5 // pred_check_branch
        %202 = sbr.rel (%p199) target = $region12
      $region11: #{decoder_gat_layer_forward.14} parent=5 // pred_region
        %s203 = ssub.s32 %s15, 1
      $region12: #{decoder_gat_layer_forward.14} parent=5 // pred_fallthru
        _
      %p204 = scmp.lt.s32.totalorder %s15, 2
      // Predicated region
      $region13: #{decoder_gat_layer_forward.14} parent=5 // pred_check
        %p205 = pneg %p204
      $region14: #{decoder_gat_layer_forward.14} parent=5 // pred_check_branch
        %207 = sbr.rel (%p205) target = $region16
      $region15: #{decoder_gat_layer_forward.14} parent=5 // pred_region
        // Predicated region
        $region17: #{decoder_gat_layer_forward.14} parent=15 // pred_check
          %p208 = pneg %p49
        $region18: #{decoder_gat_layer_forward.14} parent=15 // pred_check_branch
          %210 = sbr.rel (%p208) target = $region20
        $region19: #{decoder_gat_layer_forward.14} parent=15 // pred_region
          %p211 = scmp.lt.s32.totalorder %s22, 1
          %s212 = scalar_select %p211, %s22, 1
          %p213 = scmp.lt.s32.totalorder %s23, 0
          %s214 = scalar_select %p213, %s23, 0
          %s215 = smul.addr %s212, 2
          %s216 = sadd.s32 %s214, %s215
          %s217 = smul.addr %s216, 4
          %s218 = scalar_lea.vmem %s0, %s217
        $region20: #{decoder_gat_layer_forward.14} parent=15 // pred_fallthru
          _
        // Predicated region
        $region21: #{decoder_gat_layer_forward.14} parent=15 // pred_check
          %p219 = pneg %p75
        $region22: #{decoder_gat_layer_forward.14} parent=15 // pred_check_branch
          %221 = sbr.rel (%p219) target = $region24
        $region23: #{decoder_gat_layer_forward.14} parent=15 // pred_region
          %p222 = scmp.lt.s32.totalorder %s22, 1
          %s223 = scalar_select %p222, %s22, 1
          %s224 = smul.addr %s223, 2
          %s225 = smul.addr %s224, 4
          %s226 = scalar_lea.vmem %s1, %s225
        $region24: #{decoder_gat_layer_forward.14} parent=15 // pred_fallthru
          _
        // Predicated region
        $region25: #{decoder_gat_layer_forward.14} parent=15 // pred_check
          %p227 = pneg %p101
        $region26: #{decoder_gat_layer_forward.14} parent=15 // pred_check_branch
          %229 = sbr.rel (%p227) target = $region28
        $region27: #{decoder_gat_layer_forward.14} parent=15 // pred_region
          %p230 = scmp.lt.s32.totalorder %s22, 1
          %s231 = scalar_select %p230, %s22, 1
          %s232 = smul.addr %s231, 2
          %s233 = smul.addr %s232, 4
          %s234 = scalar_lea.vmem %s2, %s233
        $region28: #{decoder_gat_layer_forward.14} parent=15 // pred_fallthru
          _
        // Predicated region
        $region29: #{decoder_gat_layer_forward.14} parent=15 // pred_check
          %p235 = pneg %p127
        $region30: #{decoder_gat_layer_forward.14} parent=15 // pred_check_branch
          %237 = sbr.rel (%p235) target = $region32
        $region31: #{decoder_gat_layer_forward.14} parent=15 // pred_region
          %p238 = scmp.lt.s32.totalorder %s22, 1
          %s239 = scalar_select %p238, %s22, 1
          %s240 = scalar_lea.vmem %s3, %s239
        $region32: #{decoder_gat_layer_forward.14} parent=15 // pred_fallthru
          _
      $region16: #{decoder_gat_layer_forward.14} parent=5 // pred_fallthru
        _
      %p241 = scmp.le.s32.totalorder 1, %s15
      %p242 = scmp.lt.s32.totalorder %s15, 3
      %p243 = pnand %p241, %p242
      %p244 = pneg %p243
      // Predicated region
      $region33: #{decoder_gat_layer_forward.14} parent=5 // pred_check
        _
      $region34: #{decoder_gat_layer_forward.14} parent=5 // pred_check_branch
        %246 = sbr.rel (%p243) target = $region36
      $region35: #{decoder_gat_layer_forward.14} parent=5 // pred_region
        %s247 = ssub.s32 %s15, 1
        %p248 = scmp.lt.s32.totalorder %s24, 1
        %s249 = scalar_select %p248, %s24, 1
        %p250 = scmp.lt.s32.totalorder %s25, 0
        %s251 = scalar_select %p250, %s25, 0
        %s252 = smul.addr %s249, 2
        %s253 = sadd.s32 %s251, %s252
        %s254 = smul.addr %s253, 4
        %s255 = scalar_lea.vmem %s0, %s254
        %p256 = pneg %p55
        %p257 = pneg %p52
        %p258 = scmp.lt.s32.totalorder %s24, 1
        %s259 = scalar_select %p258, %s24, 1
        %s260 = smul.addr %s259, 2
        %s261 = smul.addr %s260, 4
        %s262 = scalar_lea.vmem %s1, %s261
        %p263 = pneg %p81
        %p264 = pneg %p78
        %p265 = scmp.lt.s32.totalorder %s24, 1
        %s266 = scalar_select %p265, %s24, 1
        %s267 = smul.addr %s266, 2
        %s268 = smul.addr %s267, 4
        %s269 = scalar_lea.vmem %s2, %s268
        %p270 = pneg %p107
        %p271 = pneg %p104
        %p272 = scmp.lt.s32.totalorder %s24, 1
        %s273 = scalar_select %p272, %s24, 1
        %s274 = scalar_lea.vmem %s3, %s273
        %p275 = pneg %p133
        %p276 = pneg %p130
        %p277 = pneg %p161
        %p278 = pneg %p158
        %p279 = scmp.lt.s32.totalorder %s24, 1
        %s280 = scalar_select %p279, %s24, 1
        %p281 = scmp.lt.s32.totalorder %s25, 0
        %s282 = scalar_select %p281, %s25, 0
        %s283 = sadd.s32 %s282, %s280
        %s284 = smul.addr %s283, 8
        %s285 = scalar_lea.vmem %s4, %s284
        %p286 = pneg %p189
        %p287 = pneg %p186
        %s288 = sand.u32 %s176, 1
        %s289 = scalar_lea.sflag [#allocation3], %s288
        %s290 = sand.u32 %s176, 1
        %s291 = smul.addr %s290, 16
        %s292 = scalar_lea.vmem [#allocation2], %s291
        %p293 = scmp.lt.s32.totalorder %s24, 1
        %s294 = scalar_select %p293, %s24, 1
        %p295 = scmp.lt.s32.totalorder %s25, 0
        %s296 = scalar_select %p295, %s25, 0
        %s297 = smul.addr %s294, 2
        %s298 = sadd.s32 %s296, %s297
        %s299 = smul.addr %s298, 4
        %s300 = scalar_lea.vmem %s0, %s299
        %p301 = scmp.lt.s32.totalorder %s24, 1
        %s302 = scalar_select %p301, %s24, 1
        %s303 = smul.addr %s302, 2
        %s304 = smul.addr %s303, 4
        %s305 = scalar_lea.vmem %s1, %s304
        %p306 = scmp.lt.s32.totalorder %s24, 1
        %s307 = scalar_select %p306, %s24, 1
        %s308 = smul.addr %s307, 2
        %s309 = smul.addr %s308, 4
        %s310 = scalar_lea.vmem %s2, %s309
        %p311 = scmp.lt.s32.totalorder %s24, 1
        %s312 = scalar_select %p311, %s24, 1
        %s313 = scalar_lea.vmem %s3, %s312
        %p314 = scmp.lt.s32.totalorder %s24, 1
        %s315 = scalar_select %p314, %s24, 1
        %p316 = scmp.lt.s32.totalorder %s25, 0
        %s317 = scalar_select %p316, %s25, 0
        %s318 = sadd.s32 %s317, %s315
        %s319 = smul.addr %s318, 8
        %s320 = scalar_lea.vmem %s4, %s319
        %v322 = vld [vmem:[%s313] sm:$0x1]
        %vm323 = vcmp.gt.f32.partialorder %v322, 0.0
        %v324 = vsel %vm323, -inf, 0.0
        %v325 = vlaneseq
        %v326 = vshrl.u32 %v325, 7
        %s327 = smul.u32 %s25, 8
        %v328 = vstv %s327
        %v329 = vadd.s32 %v326, %v328
        %v330 = vlaneseq
        %v331 = vand.u32 %v330, 127
        %vm332 = vcmp.gt.s32.totalorder %v331, %v329
        %v333 = vsel %vm332, -inf, 0.0
        %v335 = vlaneseq
        %v336 = vshrl.u32 %v335, 7
        %v337 = vsub.s32 0, %v336
        %v338 = vrot.slane %v324, %v337
        %v340 = vadd.f32 %v333, %v338
        %v341 = vld [vmem:[%s300] sm:$0xf]
        %v342 = vld [vmem:[%s305] sm:$0xf]
        %vm343 = vcmask 130048
        %v345 = vsel %vm343, %v341, 0
        %v348 = vsel %vm343, %v342, 0
        %350 = vmatprep.subr.bf16.mxu0 0
        %351 = vmatpush1.bf16.xpose.msra.mxu0 0
        %352 = vmatprep.subr.bf16.mxu0 0
        %353 = vmatpush1.bf16.xpose.msra.mxu0 0
        %354 = vmatprep.subr.bf16.mxu0 0
        %355 = vmatpush1.bf16.xpose.msra.mxu0 0
        %356 = vmatprep.subr.bf16.mxu0 0
        %357 = vmatpush1.bf16.xpose.msra.mxu0 0
        %358 = vmatprep.subr.bf16.mxu0 0
        %359 = vmatpush1.bf16.xpose.msra.mxu0 0
        %360 = vmatprep.subr.bf16.mxu0 0
        %361 = vmatpush1.bf16.xpose.msra.mxu0 0
        %362 = vmatprep.subr.bf16.mxu0 0
        %363 = vmatpush1.bf16.xpose.msra.mxu0 0
        %364 = vmatprep.subr.bf16.mxu0 0
        %365 = vmatpush1.bf16.xpose.msra.mxu0 %v348
        %366 = vmatprep.subr.bf16.mxu0 0
        %367 = vmatpush2.bf16.xpose.msra.mxu0 0
        %368 = vmatprep.subr.bf16.mxu0 0
        %369 = vmatpush2.bf16.xpose.msra.mxu0 0
        %370 = vmatprep.subr.bf16.mxu0 0
        %371 = vmatpush2.bf16.xpose.msra.mxu0 0
        %372 = vmatprep.subr.bf16.mxu0 0
        %373 = vmatpush2.bf16.xpose.msra.mxu0 0
        %374 = vmatprep.subr.bf16.mxu0 0
        %375 = vmatpush2.bf16.xpose.msra.mxu0 0
        %376 = vmatprep.subr.bf16.mxu0 0
        %377 = vmatpush2.bf16.xpose.msra.mxu0 0
        %378 = vmatprep.subr.bf16.mxu0 0
        %379 = vmatpush2.bf16.xpose.msra.mxu0 0
        %380 = vmatprep.subr.bf16.mxu0 0
        %381 = vmatpush2.bf16.xpose.msra.mxu0 0
        %382 = vmatprep.mubr.bf16.mxu0 0
        %383 = vmatmul.mubr.bf16.gmra.mxu0 %v345
        %v384 = vpop.f32.mrf.mxu0
        %v385 = vadd.f32 %v340, %v384
        %v386 = vpop.f32.mrf.mxu0
        %v387 = vpop.f32.mrf.mxu0
        %v388 = vpop.f32.mrf.mxu0
        %389 = vdwg.mxu0
        %vm390 = vcmask 64512
        %v391 = vsel %vm390, %v385, -inf
        %392 = vmax.xlane.f32.xlu0 %v391
        %v393 = vpop.xlane.xlu0 %392
        %v394 = vmax.f32 %v393, -1e+30
        %v395 = vsub.f32 %v385, %v394
        %v396 = vmul.f32 %v395, 1.442695
        %v397 = vpow.pop %v396
        %v398 = vsel %vm390, %v397, 0.0
        %399 = vadd.xlane.f32.xlu0 %v398
        %v400 = vpop.xlane.xlu0 %399
        %v401 = vmax.f32 %v400, 1e-30
        %v402 = vrcp.pop %v401
        %v403 = vmul.f32 %v397, %v402
        %404 = vst.msk [vmem:[%s292] sm:$0xff] %vm390, %v403
        %v405 = vpack.c.bf16 %v403, %v403
        %v406 = vld [vmem:[%s310] sm:$0xf]
        %v408 = vsel %vm390, %v405, 0
        %vm410 = vcmask 1043456
        %v412 = vsel %vm410, %v406, 0
        %414 = vmatprep.subr.bf16.mxu0 0
        %415 = vmatpush1.bf16.msra.mxu0 0
        %416 = vmatprep.subr.bf16.mxu0 0
        %417 = vmatpush1.bf16.msra.mxu0 0
        %418 = vmatprep.subr.bf16.mxu0 0
        %419 = vmatpush1.bf16.msra.mxu0 0
        %420 = vmatprep.subr.bf16.mxu0 0
        %421 = vmatpush1.bf16.msra.mxu0 0
        %422 = vmatprep.subr.bf16.mxu0 0
        %423 = vmatpush1.bf16.msra.mxu0 0
        %424 = vmatprep.subr.bf16.mxu0 0
        %425 = vmatpush1.bf16.msra.mxu0 0
        %426 = vmatprep.subr.bf16.mxu0 0
        %427 = vmatpush1.bf16.msra.mxu0 0
        %428 = vmatprep.subr.bf16.mxu0 0
        %429 = vmatpush1.bf16.msra.mxu0 %v412
        %430 = vmatprep.subr.bf16.mxu0 0
        %431 = vmatpush2.bf16.msra.mxu0 0
        %432 = vmatprep.subr.bf16.mxu0 0
        %433 = vmatpush2.bf16.msra.mxu0 0
        %434 = vmatprep.subr.bf16.mxu0 0
        %435 = vmatpush2.bf16.msra.mxu0 0
        %436 = vmatprep.subr.bf16.mxu0 0
        %437 = vmatpush2.bf16.msra.mxu0 0
        %438 = vmatprep.subr.bf16.mxu0 0
        %439 = vmatpush2.bf16.msra.mxu0 0
        %440 = vmatprep.subr.bf16.mxu0 0
        %441 = vmatpush2.bf16.msra.mxu0 0
        %442 = vmatprep.subr.bf16.mxu0 0
        %443 = vmatpush2.bf16.msra.mxu0 0
        %444 = vmatprep.subr.bf16.mxu0 0
        %445 = vmatpush2.bf16.msra.mxu0 0
        %446 = vmatprep.mubr.bf16.mxu0 0
        %447 = vmatmul.mubr.bf16.gmra.mxu0 %v408
        %v448 = vpop.f32.mrf.mxu0
        %v449 = vadd.f32 0.0, %v448
        %v450 = vpop.f32.mrf.mxu0
        %v451 = vpop.f32.mrf.mxu0
        %v452 = vpop.f32.mrf.mxu0
        %453 = vdwg.mxu0
        %s454 = scalar_lea.vmem %s300, 4
        %v455 = vld [vmem:[%s454] sm:$0xf]
        %s456 = scalar_lea.vmem %s305, 4
        %v457 = vld [vmem:[%s456] sm:$0xf]
        %v459 = vsel %vm343, %v455, 0
        %v462 = vsel %vm343, %v457, 0
        %464 = vmatprep.subr.bf16.mxu0 0
        %465 = vmatpush1.bf16.xpose.msra.mxu0 0
        %466 = vmatprep.subr.bf16.mxu0 0
        %467 = vmatpush1.bf16.xpose.msra.mxu0 0
        %468 = vmatprep.subr.bf16.mxu0 0
        %469 = vmatpush1.bf16.xpose.msra.mxu0 0
        %470 = vmatprep.subr.bf16.mxu0 0
        %471 = vmatpush1.bf16.xpose.msra.mxu0 0
        %472 = vmatprep.subr.bf16.mxu0 0
        %473 = vmatpush1.bf16.xpose.msra.mxu0 0
        %474 = vmatprep.subr.bf16.mxu0 0
        %475 = vmatpush1.bf16.xpose.msra.mxu0 0
        %476 = vmatprep.subr.bf16.mxu0 0
        %477 = vmatpush1.bf16.xpose.msra.mxu0 0
        %478 = vmatprep.subr.bf16.mxu0 0
        %479 = vmatpush1.bf16.xpose.msra.mxu0 %v462
        %480 = vmatprep.subr.bf16.mxu0 0
        %481 = vmatpush2.bf16.xpose.msra.mxu0 0
        %482 = vmatprep.subr.bf16.mxu0 0
        %483 = vmatpush2.bf16.xpose.msra.mxu0 0
        %484 = vmatprep.subr.bf16.mxu0 0
        %485 = vmatpush2.bf16.xpose.msra.mxu0 0
        %486 = vmatprep.subr.bf16.mxu0 0
        %487 = vmatpush2.bf16.xpose.msra.mxu0 0
        %488 = vmatprep.subr.bf16.mxu0 0
        %489 = vmatpush2.bf16.xpose.msra.mxu0 0
        %490 = vmatprep.subr.bf16.mxu0 0
        %491 = vmatpush2.bf16.xpose.msra.mxu0 0
        %492 = vmatprep.subr.bf16.mxu0 0
        %493 = vmatpush2.bf16.xpose.msra.mxu0 0
        %494 = vmatprep.subr.bf16.mxu0 0
        %495 = vmatpush2.bf16.xpose.msra.mxu0 0
        %496 = vmatprep.mubr.bf16.mxu0 0
        %497 = vmatmul.mubr.bf16.gmra.mxu0 %v459
        %v498 = vpop.f32.mrf.mxu0
        %v499 = vadd.f32 %v340, %v498
        %v500 = vpop.f32.mrf.mxu0
        %v501 = vpop.f32.mrf.mxu0
        %v502 = vpop.f32.mrf.mxu0
        %503 = vdwg.mxu0
        %v504 = vsel %vm390, %v499, -inf
        %505 = vmax.xlane.f32.xlu0 %v504
        %v506 = vpop.xlane.xlu0 %505
        %v507 = vmax.f32 %v506, -1e+30
        %v508 = vsub.f32 %v499, %v507
        %v509 = vmul.f32 %v508, 1.442695
        %v510 = vpow.pop %v509
        %v511 = vsel %vm390, %v510, 0.0
        %512 = vadd.xlane.f32.xlu0 %v511
        %v513 = vpop.xlane.xlu0 %512
        %v514 = vmax.f32 %v513, 1e-30
        %v515 = vrcp.pop %v514
        %v516 = vmul.f32 %v510, %v515
        %s517 = scalar_lea.vmem %s292, 8 [#allocation2]
        %518 = vst.msk [vmem:[%s517] sm:$0xff] %vm390, %v516
        %v519 = vpack.c.bf16 %v516, %v516
        %s520 = scalar_lea.vmem %s310, 4
        %v521 = vld [vmem:[%s520] sm:$0xf]
        %v523 = vsel %vm390, %v519, 0
        %v526 = vsel %vm410, %v521, 0
        %528 = vmatprep.subr.bf16.mxu0 0
        %529 = vmatpush1.bf16.msra.mxu0 0
        %530 = vmatprep.subr.bf16.mxu0 0
        %531 = vmatpush1.bf16.msra.mxu0 0
        %532 = vmatprep.subr.bf16.mxu0 0
        %533 = vmatpush1.bf16.msra.mxu0 0
        %534 = vmatprep.subr.bf16.mxu0 0
        %535 = vmatpush1.bf16.msra.mxu0 0
        %536 = vmatprep.subr.bf16.mxu0 0
        %537 = vmatpush1.bf16.msra.mxu0 0
        %538 = vmatprep.subr.bf16.mxu0 0
        %539 = vmatpush1.bf16.msra.mxu0 0
        %540 = vmatprep.subr.bf16.mxu0 0
        %541 = vmatpush1.bf16.msra.mxu0 0
        %542 = vmatprep.subr.bf16.mxu0 0
        %543 = vmatpush1.bf16.msra.mxu0 %v526
        %544 = vmatprep.subr.bf16.mxu0 0
        %545 = vmatpush2.bf16.msra.mxu0 0
        %546 = vmatprep.subr.bf16.mxu0 0
        %547 = vmatpush2.bf16.msra.mxu0 0
        %548 = vmatprep.subr.bf16.mxu0 0
        %549 = vmatpush2.bf16.msra.mxu0 0
        %550 = vmatprep.subr.bf16.mxu0 0
        %551 = vmatpush2.bf16.msra.mxu0 0
        %552 = vmatprep.subr.bf16.mxu0 0
        %553 = vmatpush2.bf16.msra.mxu0 0
        %554 = vmatprep.subr.bf16.mxu0 0
        %555 = vmatpush2.bf16.msra.mxu0 0
        %556 = vmatprep.subr.bf16.mxu0 0
        %557 = vmatpush2.bf16.msra.mxu0 0
        %558 = vmatprep.subr.bf16.mxu0 0
        %559 = vmatpush2.bf16.msra.mxu0 0
        %560 = vmatprep.mubr.bf16.mxu0 0
        %561 = vmatmul.mubr.bf16.gmra.mxu0 %v523
        %v562 = vpop.f32.mrf.mxu0
        %v563 = vadd.f32 0.0, %v562
        %v564 = vpop.f32.mrf.mxu0
        %v565 = vpop.f32.mrf.mxu0
        %v566 = vpop.f32.mrf.mxu0
        %567 = vdwg.mxu0
        %569 = vrot.lane.b32.xlu0 %v563, 16
        %v570 = vpop.permute.xlu0 %569
        %v572 = vsel %vm343, %v449, %v570
        %vm573 = vcmask 261120
        %574 = vst.msk [vmem:[%s320] sm:$0xff] %vm573, %v572
        %p575 = scmp.lt.s32.totalorder %s24, 1
        %s576 = scalar_select %p575, %s24, 1
        %p577 = scmp.lt.s32.totalorder %s25, 0
        %s578 = scalar_select %p577, %s25, 0
        %s579 = sadd.s32 %s578, %s576
        %s580 = smul.addr %s579, 8
        %s581 = scalar_lea.vmem %s4, %s580
        %s582 = sand.u32 %s176, 1
        %s583 = scalar_lea.sflag [#allocation3], %s582
        %s584 = sand.u32 %s176, 1
        %s585 = smul.addr %s584, 16
        %s586 = scalar_lea.vmem [#allocation2], %s585
        // Predicated region
        $region37: #{decoder_gat_layer_forward.14} parent=35 // pred_check
          %p587 = pneg %p158
        $region38: #{decoder_gat_layer_forward.14} parent=35 // pred_check_branch
          %589 = sbr.rel (%p587) target = $region40
        $region39: #{decoder_gat_layer_forward.14} parent=35 // pred_region
          _
        $region40: #{decoder_gat_layer_forward.14} parent=35 // pred_fallthru
          _
        // Predicated region
        $region41: #{decoder_gat_layer_forward.14} parent=35 // pred_check
          %p590 = pneg %p186
        $region42: #{decoder_gat_layer_forward.14} parent=35 // pred_check_branch
          %592 = sbr.rel (%p590) target = $region44
        $region43: #{decoder_gat_layer_forward.14} parent=35 // pred_region
          %s594 = ssub.s32 256, 256
          %595 = vsyncadd %s583, %s594
          %s596 = smul.addr %s24, 2
          %s597 = sadd.s32 %s25, %s596
          %s598 = smul.addr %s597, 128
          %s599 = scalar_lea.hbm %s5, %s598
          %s600 = sshll.u32 %s586, 4
          %s601 = int_to_ptr.vmem [resolvable:$true] %s600
          %606 = dma.vmem_to_hbm [thread:$0]  %s601, 256, %s599, %s583, 128, 128, 8
        $region44: #{decoder_gat_layer_forward.14} parent=35 // pred_fallthru
          _
      $region36: #{decoder_gat_layer_forward.14} parent=5 // pred_fallthru
        _
      %p607 = scmp.le.s32.totalorder 2, %s15
      // Predicated region
      $region45: #{decoder_gat_layer_forward.14} parent=5 // pred_check
        %p608 = pneg %p607
      $region46: #{decoder_gat_layer_forward.14} parent=5 // pred_check_branch
        %610 = sbr.rel (%p608) target = $region48
      $region47: #{decoder_gat_layer_forward.14} parent=5 // pred_region
        %s611 = ssub.s32 %s15, 2
        // Predicated region
        $region49: #{decoder_gat_layer_forward.14} parent=47 // pred_check
          %p612 = pneg %p164
        $region50: #{decoder_gat_layer_forward.14} parent=47 // pred_check_branch
          %614 = sbr.rel (%p612) target = $region52
        $region51: #{decoder_gat_layer_forward.14} parent=47 // pred_region
          %p615 = scmp.lt.s32.totalorder %s26, 1
          %s616 = scalar_select %p615, %s26, 1
          %p617 = scmp.lt.s32.totalorder %s27, 0
          %s618 = scalar_select %p617, %s27, 0
          %s619 = sadd.s32 %s618, %s616
          %s620 = smul.addr %s619, 8
          %s621 = scalar_lea.vmem %s4, %s620
        $region52: #{decoder_gat_layer_forward.14} parent=47 // pred_fallthru
          _
        // Predicated region
        $region53: #{decoder_gat_layer_forward.14} parent=47 // pred_check
          %p622 = pneg %p192
        $region54: #{decoder_gat_layer_forward.14} parent=47 // pred_check_branch
          %624 = sbr.rel (%p622) target = $region56
        $region55: #{decoder_gat_layer_forward.14} parent=47 // pred_region
          %s625 = sand.u32 %s177, 1
          %s626 = scalar_lea.sflag [#allocation3], %s625
          %s627 = sand.u32 %s177, 1
          %s628 = smul.addr %s627, 16
          %s629 = scalar_lea.vmem [#allocation2], %s628
          %630 = dma.done %s626, 256
        $region56: #{decoder_gat_layer_forward.14} parent=47 // pred_fallthru
          _
      $region48: #{decoder_gat_layer_forward.14} parent=5 // pred_fallthru
        _
    $region6: #{decoder_gat_layer_forward.14} parent=1 // loop_footer
      %s19 = sadd.s32 1, %s15
    $region7: #{decoder_gat_layer_forward.14} parent=1 // loop_footer_branch
      %14 = sbr.rel target = $region3
    $region8: #{decoder_gat_layer_forward.14} parent=1 // loop_exit
      _
    %631 = vsyncpa [#allocation3], 1
    %s632 = scalar_lea.sflag [#allocation3], 1
    %633 = vsyncpa %s632, 1

// kernel: decoder_gat_layer_forward.17
$region0: #{decoder_gat_layer_forward.17}
  #allocation0 [shape = 'u32[]', space=smem, size = 0x4, offset = 0x4, fixed_abs, tag = 'smem constant byte address 0x4 - core index']
  #allocation1 [shape = 'u32[144,128]{1,0:T(1,128)}', space=vmem, size = 0x12000, scoped, tag = 'internal scratch']
  %s0 = inlined_call_operand.vmem [shape: f32[16,32], index: 0, kind: input, shape index: {}]
  %s1 = inlined_call_operand.vmem [shape: bf16[32,2], index: 1, kind: input, shape index: {}]
  %s2 = inlined_call_operand.vmem [shape: f32[1,2], index: 2, kind: input, shape index: {}]
  %s3 = inlined_call_operand.vmem [shape: f32[16,2], index: 3, kind: output, shape index: {}]
  %s4 = sld [smem:[#allocation0]]
  $region22: #{decoder_gat_layer_forward.17} parent=0
    _
  %s6 = ssub.s32 1, %s4
  %s7 = scalar_select 0, %s6, %s4
  // Predicated region
  $region2: #{decoder_gat_layer_forward.17} parent=0 // pred_check
    _
  $region3: #{decoder_gat_layer_forward.17} parent=0 // pred_check_branch
    %9 = sbr.rel (0) target = $region5
  $region4: #{decoder_gat_layer_forward.17} parent=0 // pred_region
    _
  $region5: #{decoder_gat_layer_forward.17} parent=0 // pred_fallthru
    _
  // Predicated region
  $region6: #{decoder_gat_layer_forward.17} parent=0 // pred_check
    _
  $region7: #{decoder_gat_layer_forward.17} parent=0 // pred_check_branch
    %11 = sbr.rel (0) target = $region9
  $region8: #{decoder_gat_layer_forward.17} parent=0 // pred_region
    _
  $region9: #{decoder_gat_layer_forward.17} parent=0 // pred_fallthru
    _
  // Predicated region
  $region10: #{decoder_gat_layer_forward.17} parent=0 // pred_check
    _
  $region11: #{decoder_gat_layer_forward.17} parent=0 // pred_check_branch
    %13 = sbr.rel (0) target = $region13
  $region12: #{decoder_gat_layer_forward.17} parent=0 // pred_region
    _
  $region13: #{decoder_gat_layer_forward.17} parent=0 // pred_fallthru
    _
  %v15 = vld [vmem:[%s0] sm:$0xff]
  %v16 = vld [vmem:[%s0 + $0x8] sm:$0xff]
  %v17 = vpack.c.bf16 %v16, %v15
  %v18 = vld [vmem:[%s1] sm:$0xf]
  %v19 = vld [vmem:[%s1 + $0x4] sm:$0xf]
  %v20 = vld [vmem:[%s1 + $0x8] sm:$0xf]
  %v21 = vld [vmem:[%s1 + $0xc] sm:$0xf]
  %v22 = vld [vmem:[%s2] sm:$0x1]
  %v24 = vlaneseq
  %v25 = vshrl.u32 %v24, 7
  %v26 = vsub.s32 0, %v25
  %v27 = vrot.slane %v22, %v26
  %v33 = vunpack.c.l.b16 %v18
  %v34 = vunpack.c.l.b16 %v19
  %v35 = vunpack.c.l.b16 %v20
  %v36 = vunpack.c.l.b16 %v21
  %v37 = vpack.c.b16 %v34, %v33
  %v38 = vpack.c.b16 %v36, %v35
  %vm41 = vcmask 261120
  %v43 = vsel %vm41, %v17, 0
  %45 = vmatprep.subr.bf16.mxu0 0
  %46 = vmatpush1.bf16.msra.mxu0 0
  %47 = vmatprep.subr.bf16.mxu0 0
  %48 = vmatpush1.bf16.msra.mxu0 0
  %49 = vmatprep.subr.bf16.mxu0 0
  %50 = vmatpush1.bf16.msra.mxu0 0
  %51 = vmatprep.subr.bf16.mxu0 0
  %52 = vmatpush1.bf16.msra.mxu0 0
  %53 = vmatprep.subr.bf16.mxu0 0
  %54 = vmatpush1.bf16.msra.mxu0 0
  %55 = vmatprep.subr.bf16.mxu0 0
  %56 = vmatpush1.bf16.msra.mxu0 0
  %57 = vmatprep.subr.bf16.mxu0 0
  %58 = vmatpush1.bf16.msra.mxu0 %v38
  %59 = vmatprep.subr.bf16.mxu0 0
  %60 = vmatpush1.bf16.msra.mxu0 %v37
  %61 = vmatprep.subr.bf16.mxu0 0
  %62 = vmatpush2.bf16.msra.mxu0 0
  %63 = vmatprep.subr.bf16.mxu0 0
  %64 = vmatpush2.bf16.msra.mxu0 0
  %65 = vmatprep.subr.bf16.mxu0 0
  %66 = vmatpush2.bf16.msra.mxu0 0
  %67 = vmatprep.subr.bf16.mxu0 0
  %68 = vmatpush2.bf16.msra.mxu0 0
  %69 = vmatprep.subr.bf16.mxu0 0
  %70 = vmatpush2.bf16.msra.mxu0 0
  %71 = vmatprep.subr.bf16.mxu0 0
  %72 = vmatpush2.bf16.msra.mxu0 0
  %73 = vmatprep.subr.bf16.mxu0 0
  %74 = vmatpush2.bf16.msra.mxu0 0
  %75 = vmatprep.subr.bf16.mxu0 0
  %76 = vmatpush2.bf16.msra.mxu0 0
  %77 = vmatprep.mubr.bf16.mxu0 0
  %78 = vmatmul.mubr.bf16.gmra.mxu0 %v43
  %v79 = vpop.f32.mrf.mxu0
  %v80 = vadd.f32 %v27, %v79
  %v81 = vpop.f32.mrf.mxu0
  %v82 = vpop.f32.mrf.mxu0
  %v83 = vadd.f32 %v27, %v82
  %v84 = vpop.f32.mrf.mxu0
  %85 = vdwg.mxu0
  %vm86 = vcmask 15360
  %87 = vst.msk [vmem:[%s3] sm:$0xff] %vm86, %v80
  %88 = vst.msk [vmem:[%s3 + $0x8] sm:$0xff] %vm86, %v83
  // Predicated region
  $region14: #{decoder_gat_layer_forward.17} parent=0 // pred_check
    _
  $region15: #{decoder_gat_layer_forward.17} parent=0 // pred_check_branch
    %90 = sbr.rel (0) target = $region17
  $region16: #{decoder_gat_layer_forward.17} parent=0 // pred_region
    _
  $region17: #{decoder_gat_layer_forward.17} parent=0 // pred_fallthru
    _
  // Predicated region
  $region18: #{decoder_gat_layer_forward.17} parent=0 // pred_check
    _
  $region19: #{decoder_gat_layer_forward.17} parent=0 // pred_check_branch
    %92 = sbr.rel (0) target = $region21
  $region20: #{decoder_gat_layer_forward.17} parent=0 // pred_region
    _
  $region21: #{decoder_gat_layer_forward.17} parent=0 // pred_fallthru
    _

// kernel: decoder_gat_layer_forward.19
$region0: #{decoder_gat_layer_forward.19}
  #allocation0 [shape = 'u32[]', space=smem, size = 0x4, offset = 0x4, fixed_abs, tag = 'smem constant byte address 0x4 - core index']
  #allocation1 [shape = 'u32[144,128]{1,0:T(1,128)}', space=vmem, size = 0x12000, scoped, tag = 'internal scratch']
  %s0 = inlined_call_operand.vmem [shape: f32[16,32], index: 0, kind: input, shape index: {}]
  %s1 = inlined_call_operand.vmem [shape: bf16[32,20], index: 1, kind: input, shape index: {}]
  %s2 = inlined_call_operand.vmem [shape: f32[1,20], index: 2, kind: input, shape index: {}]
  %s3 = inlined_call_operand.vmem [shape: f32[16,20], index: 3, kind: output, shape index: {}]
  %s4 = sld [smem:[#allocation0]]
  $region22: #{decoder_gat_layer_forward.19} parent=0
    _
  %s6 = ssub.s32 1, %s4
  %s7 = scalar_select 0, %s6, %s4
  // Predicated region
  $region2: #{decoder_gat_layer_forward.19} parent=0 // pred_check
    _
  $region3: #{decoder_gat_layer_forward.19} parent=0 // pred_check_branch
    %9 = sbr.rel (0) target = $region5
  $region4: #{decoder_gat_layer_forward.19} parent=0 // pred_region
    _
  $region5: #{decoder_gat_layer_forward.19} parent=0 // pred_fallthru
    _
  // Predicated region
  $region6: #{decoder_gat_layer_forward.19} parent=0 // pred_check
    _
  $region7: #{decoder_gat_layer_forward.19} parent=0 // pred_check_branch
    %11 = sbr.rel (0) target = $region9
  $region8: #{decoder_gat_layer_forward.19} parent=0 // pred_region
    _
  $region9: #{decoder_gat_layer_forward.19} parent=0 // pred_fallthru
    _
  // Predicated region
  $region10: #{decoder_gat_layer_forward.19} parent=0 // pred_check
    _
  $region11: #{decoder_gat_layer_forward.19} parent=0 // pred_check_branch
    %13 = sbr.rel (0) target = $region13
  $region12: #{decoder_gat_layer_forward.19} parent=0 // pred_region
    _
  $region13: #{decoder_gat_layer_forward.19} parent=0 // pred_fallthru
    _
  %v15 = vld [vmem:[%s0] sm:$0xff]
  %v16 = vld [vmem:[%s0 + $0x8] sm:$0xff]
  %v17 = vpack.c.bf16 %v16, %v15
  %v18 = vld [vmem:[%s1] sm:$0xf]
  %v19 = vld [vmem:[%s1 + $0x4] sm:$0xf]
  %v20 = vld [vmem:[%s1 + $0x8] sm:$0xf]
  %v21 = vld [vmem:[%s1 + $0xc] sm:$0xf]
  %v22 = vld [vmem:[%s2] sm:$0x1]
  %v24 = vlaneseq
  %v25 = vshrl.u32 %v24, 7
  %v26 = vsub.s32 0, %v25
  %v27 = vrot.slane %v22, %v26
  %v33 = vunpack.c.l.b16 %v18
  %v34 = vunpack.c.l.b16 %v19
  %v35 = vunpack.c.l.b16 %v20
  %v36 = vunpack.c.l.b16 %v21
  %v37 = vpack.c.b16 %v34, %v33
  %v38 = vpack.c.b16 %v36, %v35
  %vm41 = vcmask 261120
  %v43 = vsel %vm41, %v17, 0
  %45 = vmatprep.subr.bf16.mxu0 0
  %46 = vmatpush1.bf16.msra.mxu0 0
  %47 = vmatprep.subr.bf16.mxu0 0
  %48 = vmatpush1.bf16.msra.mxu0 0
  %49 = vmatprep.subr.bf16.mxu0 0
  %50 = vmatpush1.bf16.msra.mxu0 0
  %51 = vmatprep.subr.bf16.mxu0 0
  %52 = vmatpush1.bf16.msra.mxu0 0
  %53 = vmatprep.subr.bf16.mxu0 0
  %54 = vmatpush1.bf16.msra.mxu0 0
  %55 = vmatprep.subr.bf16.mxu0 0
  %56 = vmatpush1.bf16.msra.mxu0 0
  %57 = vmatprep.subr.bf16.mxu0 0
  %58 = vmatpush1.bf16.msra.mxu0 %v38
  %59 = vmatprep.subr.bf16.mxu0 0
  %60 = vmatpush1.bf16.msra.mxu0 %v37
  %61 = vmatprep.subr.bf16.mxu0 0
  %62 = vmatpush2.bf16.msra.mxu0 0
  %63 = vmatprep.subr.bf16.mxu0 0
  %64 = vmatpush2.bf16.msra.mxu0 0
  %65 = vmatprep.subr.bf16.mxu0 0
  %66 = vmatpush2.bf16.msra.mxu0 0
  %67 = vmatprep.subr.bf16.mxu0 0
  %68 = vmatpush2.bf16.msra.mxu0 0
  %69 = vmatprep.subr.bf16.mxu0 0
  %70 = vmatpush2.bf16.msra.mxu0 0
  %71 = vmatprep.subr.bf16.mxu0 0
  %72 = vmatpush2.bf16.msra.mxu0 0
  %73 = vmatprep.subr.bf16.mxu0 0
  %74 = vmatpush2.bf16.msra.mxu0 0
  %75 = vmatprep.subr.bf16.mxu0 0
  %76 = vmatpush2.bf16.msra.mxu0 0
  %77 = vmatprep.mubr.bf16.mxu0 0
  %78 = vmatmul.mubr.bf16.gmra.mxu0 %v43
  %v79 = vpop.f32.mrf.mxu0
  %v80 = vadd.f32 %v27, %v79
  %v81 = vpop.f32.mrf.mxu0
  %v82 = vpop.f32.mrf.mxu0
  %v83 = vadd.f32 %v27, %v82
  %v84 = vpop.f32.mrf.mxu0
  %85 = vdwg.mxu0
  %vm86 = vcmask 162816
  %87 = vst.msk [vmem:[%s3] sm:$0xff] %vm86, %v80
  %88 = vst.msk [vmem:[%s3 + $0x8] sm:$0xff] %vm86, %v83
  // Predicated region
  $region14: #{decoder_gat_layer_forward.19} parent=0 // pred_check
    _
  $region15: #{decoder_gat_layer_forward.19} parent=0 // pred_check_branch
    %90 = sbr.rel (0) target = $region17
  $region16: #{decoder_gat_layer_forward.19} parent=0 // pred_region
    _
  $region17: #{decoder_gat_layer_forward.19} parent=0 // pred_fallthru
    _
  // Predicated region
  $region18: #{decoder_gat_layer_forward.19} parent=0 // pred_check
    _
  $region19: #{decoder_gat_layer_forward.19} parent=0 // pred_check_branch
    %92 = sbr.rel (0) target = $region21
  $region20: #{decoder_gat_layer_forward.19} parent=0 // pred_region
    _
  $region21: #{decoder_gat_layer_forward.19} parent=0 // pred_fallthru
    _

// kernel: decoder_gat_layer_forward.18
$region0: #{decoder_gat_layer_forward.18}
  #allocation0 [shape = 'u32[]', space=smem, size = 0x4, offset = 0x4, fixed_abs, tag = 'smem constant byte address 0x4 - core index']
  #allocation1 [shape = 'u32[144,128]{1,0:T(1,128)}', space=vmem, size = 0x12000, scoped, tag = 'internal scratch']
  %s0 = inlined_call_operand.vmem [shape: f32[16,32], index: 0, kind: input, shape index: {}]
  %s1 = inlined_call_operand.vmem [shape: bf16[32,34], index: 1, kind: input, shape index: {}]
  %s2 = inlined_call_operand.vmem [shape: f32[1,34], index: 2, kind: input, shape index: {}]
  %s3 = inlined_call_operand.vmem [shape: f32[16,34], index: 3, kind: output, shape index: {}]
  %s4 = sld [smem:[#allocation0]]
  $region22: #{decoder_gat_layer_forward.18} parent=0
    _
  %s6 = ssub.s32 1, %s4
  %s7 = scalar_select 0, %s6, %s4
  // Predicated region
  $region2: #{decoder_gat_layer_forward.18} parent=0 // pred_check
    _
  $region3: #{decoder_gat_layer_forward.18} parent=0 // pred_check_branch
    %9 = sbr.rel (0) target = $region5
  $region4: #{decoder_gat_layer_forward.18} parent=0 // pred_region
    _
  $region5: #{decoder_gat_layer_forward.18} parent=0 // pred_fallthru
    _
  // Predicated region
  $region6: #{decoder_gat_layer_forward.18} parent=0 // pred_check
    _
  $region7: #{decoder_gat_layer_forward.18} parent=0 // pred_check_branch
    %11 = sbr.rel (0) target = $region9
  $region8: #{decoder_gat_layer_forward.18} parent=0 // pred_region
    _
  $region9: #{decoder_gat_layer_forward.18} parent=0 // pred_fallthru
    _
  // Predicated region
  $region10: #{decoder_gat_layer_forward.18} parent=0 // pred_check
    _
  $region11: #{decoder_gat_layer_forward.18} parent=0 // pred_check_branch
    %13 = sbr.rel (0) target = $region13
  $region12: #{decoder_gat_layer_forward.18} parent=0 // pred_region
    _
  $region13: #{decoder_gat_layer_forward.18} parent=0 // pred_fallthru
    _
  %v15 = vld [vmem:[%s0] sm:$0xff]
  %v16 = vld [vmem:[%s0 + $0x8] sm:$0xff]
  %v17 = vpack.c.bf16 %v16, %v15
  %v18 = vld [vmem:[%s1] sm:$0xf]
  %v19 = vld [vmem:[%s1 + $0x4] sm:$0xf]
  %v20 = vld [vmem:[%s1 + $0x8] sm:$0xf]
  %v21 = vld [vmem:[%s1 + $0xc] sm:$0xf]
  %v22 = vld [vmem:[%s2] sm:$0x1]
  %v24 = vlaneseq
  %v25 = vshrl.u32 %v24, 7
  %v26 = vsub.s32 0, %v25
  %v27 = vrot.slane %v22, %v26
  %v33 = vunpack.c.l.b16 %v18
  %v34 = vunpack.c.l.b16 %v19
  %v35 = vunpack.c.l.b16 %v20
  %v36 = vunpack.c.l.b16 %v21
  %v37 = vpack.c.b16 %v34, %v33
  %v38 = vpack.c.b16 %v36, %v35
  %vm41 = vcmask 261120
  %v43 = vsel %vm41, %v17, 0
  %45 = vmatprep.subr.bf16.mxu0 0
  %46 = vmatpush1.bf16.msra.mxu0 0
  %47 = vmatprep.subr.bf16.mxu0 0
  %48 = vmatpush1.bf16.msra.mxu0 0
  %49 = vmatprep.subr.bf16.mxu0 0
  %50 = vmatpush1.bf16.msra.mxu0 0
  %51 = vmatprep.subr.bf16.mxu0 0
  %52 = vmatpush1.bf16.msra.mxu0 0
  %53 = vmatprep.subr.bf16.mxu0 0
  %54 = vmatpush1.bf16.msra.mxu0 0
  %55 = vmatprep.subr.bf16.mxu0 0
  %56 = vmatpush1.bf16.msra.mxu0 0
  %57 = vmatprep.subr.bf16.mxu0 0
  %58 = vmatpush1.bf16.msra.mxu0 %v38
  %59 = vmatprep.subr.bf16.mxu0 0
  %60 = vmatpush1.bf16.msra.mxu0 %v37
  %61 = vmatprep.subr.bf16.mxu0 0
  %62 = vmatpush2.bf16.msra.mxu0 0
  %63 = vmatprep.subr.bf16.mxu0 0
  %64 = vmatpush2.bf16.msra.mxu0 0
  %65 = vmatprep.subr.bf16.mxu0 0
  %66 = vmatpush2.bf16.msra.mxu0 0
  %67 = vmatprep.subr.bf16.mxu0 0
  %68 = vmatpush2.bf16.msra.mxu0 0
  %69 = vmatprep.subr.bf16.mxu0 0
  %70 = vmatpush2.bf16.msra.mxu0 0
  %71 = vmatprep.subr.bf16.mxu0 0
  %72 = vmatpush2.bf16.msra.mxu0 0
  %73 = vmatprep.subr.bf16.mxu0 0
  %74 = vmatpush2.bf16.msra.mxu0 0
  %75 = vmatprep.subr.bf16.mxu0 0
  %76 = vmatpush2.bf16.msra.mxu0 0
  %77 = vmatprep.mubr.bf16.mxu0 0
  %78 = vmatmul.mubr.bf16.gmra.mxu0 %v43
  %v79 = vpop.f32.mrf.mxu0
  %v80 = vadd.f32 %v27, %v79
  %v81 = vpop.f32.mrf.mxu0
  %v82 = vpop.f32.mrf.mxu0
  %v83 = vadd.f32 %v27, %v82
  %v84 = vpop.f32.mrf.mxu0
  %85 = vdwg.mxu0
  %vm86 = vcmask 277504
  %87 = vst.msk [vmem:[%s3] sm:$0xff] %vm86, %v80
  %88 = vst.msk [vmem:[%s3 + $0x8] sm:$0xff] %vm86, %v83
  // Predicated region
  $region14: #{decoder_gat_layer_forward.18} parent=0 // pred_check
    _
  $region15: #{decoder_gat_layer_forward.18} parent=0 // pred_check_branch
    %90 = sbr.rel (0) target = $region17
  $region16: #{decoder_gat_layer_forward.18} parent=0 // pred_region
    _
  $region17: #{decoder_gat_layer_forward.18} parent=0 // pred_fallthru
    _
  // Predicated region
  $region18: #{decoder_gat_layer_forward.18} parent=0 // pred_check
    _
  $region19: #{decoder_gat_layer_forward.18} parent=0 // pred_check_branch
    %92 = sbr.rel (0) target = $region21
  $region20: #{decoder_gat_layer_forward.18} parent=0 // pred_region
    _
  $region21: #{decoder_gat_layer_forward.18} parent=0 // pred_fallthru
    _

// kernel: decoder_gat_layer_forward.23
$region0: #{decoder_gat_layer_forward.23}
  #allocation0 [shape = 'u32[]', space=smem, size = 0x4, offset = 0x4, fixed_abs, tag = 'smem constant byte address 0x4 - core index']
  #allocation1 [shape = 'u32[144,128]{1,0:T(1,128)}', space=vmem, size = 0x12000, scoped, tag = 'internal scratch']
  %s0 = inlined_call_operand.vmem [shape: f32[16,32], index: 0, kind: input, shape index: {}]
  %s1 = inlined_call_operand.vmem [shape: bf16[32,64], index: 1, kind: input, shape index: {}]
  %s2 = inlined_call_operand.vmem [shape: f32[1,64], index: 2, kind: input, shape index: {}]
  %s3 = inlined_call_operand.vmem [shape: f32[16,64], index: 3, kind: output, shape index: {}]
  %s4 = sld [smem:[#allocation0]]
  $region22: #{decoder_gat_layer_forward.23} parent=0
    _
  %s6 = ssub.s32 1, %s4
  %s7 = scalar_select 0, %s6, %s4
  // Predicated region
  $region2: #{decoder_gat_layer_forward.23} parent=0 // pred_check
    _
  $region3: #{decoder_gat_layer_forward.23} parent=0 // pred_check_branch
    %9 = sbr.rel (0) target = $region5
  $region4: #{decoder_gat_layer_forward.23} parent=0 // pred_region
    _
  $region5: #{decoder_gat_layer_forward.23} parent=0 // pred_fallthru
    _
  // Predicated region
  $region6: #{decoder_gat_layer_forward.23} parent=0 // pred_check
    _
  $region7: #{decoder_gat_layer_forward.23} parent=0 // pred_check_branch
    %11 = sbr.rel (0) target = $region9
  $region8: #{decoder_gat_layer_forward.23} parent=0 // pred_region
    _
  $region9: #{decoder_gat_layer_forward.23} parent=0 // pred_fallthru
    _
  // Predicated region
  $region10: #{decoder_gat_layer_forward.23} parent=0 // pred_check
    _
  $region11: #{decoder_gat_layer_forward.23} parent=0 // pred_check_branch
    %13 = sbr.rel (0) target = $region13
  $region12: #{decoder_gat_layer_forward.23} parent=0 // pred_region
    _
  $region13: #{decoder_gat_layer_forward.23} parent=0 // pred_fallthru
    _
  %v15 = vld [vmem:[%s0] sm:$0xff]
  %v16 = vld [vmem:[%s0 + $0x8] sm:$0xff]
  %v17 = vpack.c.bf16 %v16, %v15
  %v18 = vld [vmem:[%s1] sm:$0xf]
  %v19 = vld [vmem:[%s1 + $0x4] sm:$0xf]
  %v20 = vld [vmem:[%s1 + $0x8] sm:$0xf]
  %v21 = vld [vmem:[%s1 + $0xc] sm:$0xf]
  %v22 = vld [vmem:[%s2] sm:$0x1]
  %v24 = vlaneseq
  %v25 = vshrl.u32 %v24, 7
  %v26 = vsub.s32 0, %v25
  %v27 = vrot.slane %v22, %v26
  %v33 = vunpack.c.l.b16 %v18
  %v34 = vunpack.c.l.b16 %v19
  %v35 = vunpack.c.l.b16 %v20
  %v36 = vunpack.c.l.b16 %v21
  %v37 = vpack.c.b16 %v34, %v33
  %v38 = vpack.c.b16 %v36, %v35
  %vm41 = vcmask 261120
  %v43 = vsel %vm41, %v17, 0
  %45 = vmatprep.subr.bf16.mxu0 0
  %46 = vmatpush1.bf16.msra.mxu0 0
  %47 = vmatprep.subr.bf16.mxu0 0
  %48 = vmatpush1.bf16.msra.mxu0 0
  %49 = vmatprep.subr.bf16.mxu0 0
  %50 = vmatpush1.bf16.msra.mxu0 0
  %51 = vmatprep.subr.bf16.mxu0 0
  %52 = vmatpush1.bf16.msra.mxu0 0
  %53 = vmatprep.subr.bf16.mxu0 0
  %54 = vmatpush1.bf16.msra.mxu0 0
  %55 = vmatprep.subr.bf16.mxu0 0
  %56 = vmatpush1.bf16.msra.mxu0 0
  %57 = vmatprep.subr.bf16.mxu0 0
  %58 = vmatpush1.bf16.msra.mxu0 %v38
  %59 = vmatprep.subr.bf16.mxu0 0
  %60 = vmatpush1.bf16.msra.mxu0 %v37
  %61 = vmatprep.subr.bf16.mxu0 0
  %62 = vmatpush2.bf16.msra.mxu0 0
  %63 = vmatprep.subr.bf16.mxu0 0
  %64 = vmatpush2.bf16.msra.mxu0 0
  %65 = vmatprep.subr.bf16.mxu0 0
  %66 = vmatpush2.bf16.msra.mxu0 0
  %67 = vmatprep.subr.bf16.mxu0 0
  %68 = vmatpush2.bf16.msra.mxu0 0
  %69 = vmatprep.subr.bf16.mxu0 0
  %70 = vmatpush2.bf16.msra.mxu0 0
  %71 = vmatprep.subr.bf16.mxu0 0
  %72 = vmatpush2.bf16.msra.mxu0 0
  %73 = vmatprep.subr.bf16.mxu0 0
  %74 = vmatpush2.bf16.msra.mxu0 0
  %75 = vmatprep.subr.bf16.mxu0 0
  %76 = vmatpush2.bf16.msra.mxu0 0
  %77 = vmatprep.mubr.bf16.mxu0 0
  %78 = vmatmul.mubr.bf16.gmra.mxu0 %v43
  %v79 = vpop.f32.mrf.mxu0
  %v80 = vadd.f32 %v27, %v79
  %v81 = vpop.f32.mrf.mxu0
  %v82 = vpop.f32.mrf.mxu0
  %v83 = vadd.f32 %v27, %v82
  %v84 = vpop.f32.mrf.mxu0
  %85 = vdwg.mxu0
  %v86 = vmul.f32 %v80, %v80
  %v87 = vmul.f32 %v83, %v83
  %v88 = vmul.f32 %v80, %v86
  %v89 = vmul.f32 %v83, %v87
  %v90 = vmul.f32 %v88, 0.044715
  %v91 = vmul.f32 %v89, 0.044715
  %v92 = vadd.f32 %v80, %v90
  %v93 = vadd.f32 %v83, %v91
  %v94 = vmul.f32 %v92, 0.7978846
  %v95 = vmul.f32 %v93, 0.7978846
  %v96 = vtanh.pop %v94
  %v97 = vtanh.pop %v95
  %v98 = vadd.f32 %v96, 1.0
  %v99 = vadd.f32 %v97, 1.0
  %v100 = vmul.f32 %v98, 0.5
  %v101 = vmul.f32 %v99, 0.5
  %v102 = vmul.f32 %v80, %v100
  %v103 = vmul.f32 %v83, %v101
  %vm104 = vcmask 523264
  %105 = vst.msk [vmem:[%s3] sm:$0xff] %vm104, %v102
  %106 = vst.msk [vmem:[%s3 + $0x8] sm:$0xff] %vm104, %v103
  // Predicated region
  $region14: #{decoder_gat_layer_forward.23} parent=0 // pred_check
    _
  $region15: #{decoder_gat_layer_forward.23} parent=0 // pred_check_branch
    %108 = sbr.rel (0) target = $region17
  $region16: #{decoder_gat_layer_forward.23} parent=0 // pred_region
    _
  $region17: #{decoder_gat_layer_forward.23} parent=0 // pred_fallthru
    _
  // Predicated region
  $region18: #{decoder_gat_layer_forward.23} parent=0 // pred_check
    _
  $region19: #{decoder_gat_layer_forward.23} parent=0 // pred_check_branch
    %110 = sbr.rel (0) target = $region21
  $region20: #{decoder_gat_layer_forward.23} parent=0 // pred_region
    _
  $region21: #{decoder_gat_layer_forward.23} parent=0 // pred_fallthru
    _

// kernel: decoder_gat_layer_forward.20
$region0: #{decoder_gat_layer_forward.20}
  #allocation0 [shape = 'u32[]', space=smem, size = 0x4, offset = 0x4, fixed_abs, tag = 'smem constant byte address 0x4 - core index']
  #allocation1 [shape = 'u32[144,128]{1,0:T(1,128)}', space=vmem, size = 0x12000, scoped, tag = 'internal scratch']
  %s0 = inlined_call_operand.vmem [shape: f32[2,2,8,1], index: 0, kind: input, shape index: {}]
  %s1 = inlined_call_operand.vmem [shape: f32[2,2,1,8], index: 1, kind: input, shape index: {}]
  %s2 = inlined_call_operand.vmem [shape: bf16[2,2,8,16], index: 2, kind: input, shape index: {}]
  %s3 = inlined_call_operand.vmem [shape: f32[2,1,8], index: 3, kind: input, shape index: {}]
  %s4 = inlined_call_operand.vmem [shape: f32[2,8,32], index: 4, kind: output, shape index: {}]
  %s5 = sld [smem:[#allocation0]]
  $region49: #{decoder_gat_layer_forward.20} parent=0
    _
  %s7 = ssub.s32 1, %s5
  %s8 = scalar_select 0, %s7, %s5
  loop: start=0, step=1, limit=4
  $region2: #{decoder_gat_layer_forward.20} parent=0 // loop_pre_header
    _
  $region3: #{decoder_gat_layer_forward.20} parent=0 // loop_header
    %s10 = sphi 0, %s14
    %p11 = scmp.ge.s32.totalorder %s10, 4
    %s17 = sphi 0, %s29
    %s18 = sphi 0, %s25
    %s19 = sphi 0, %s17
    %s20 = sphi 0, %s18
    %s21 = sphi 0, %s19
    %s22 = sphi 0, %s20
    %s34 = sphi 0, %s36
    %s37 = sphi 0, %s34
    %s38 = sphi 0, %s37
    %s54 = sphi 0, %s38
    %s60 = sphi 0, %s62
    %s63 = sphi 0, %s60
    %s64 = sphi 0, %s63
    %s80 = sphi 0, %s64
    %s86 = sphi 0, %s88
    %s89 = sphi 0, %s86
    %s90 = sphi 0, %s89
    %s106 = sphi 0, %s90
    %s112 = sphi 0, %s114
    %s115 = sphi 0, %s112
    %s116 = sphi 0, %s115
    %s132 = sphi 0, %s116
    %s140 = sphi 0, %s142
    %s143 = sphi 0, %s140
    %s144 = sphi 0, %s143
    %s160 = sphi 0, %s144
  $region4: #{decoder_gat_layer_forward.20} parent=0 // loop_header_branch
    %13 = sbr.rel (%p11) target = $region8
  $region5: #{decoder_gat_layer_forward.20} parent=0 // loop_body
    %s15 = ssub.s32 %s10, 1
    %s16 = ssub.s32 %s10, 2
    %s23 = sadd.s32 1, %s18
    %p24 = scmp.ge.s32.totalorder %s23, 1
    %s25 = scalar_select %p24, 0, %s23
    %s26 = sadd.s32 1, %s17
    %s27 = scalar_select %p24, %s26, %s17
    %p28 = scmp.ge.s32.totalorder %s27, 2
    %s29 = scalar_select %p28, 0, %s27
    %s30 = ssub.s32 %s17, %s29
    %s31 = ssub.s32 %s18, %s25
    %s32 = sor.u32 %s30, %s31
    %p33 = scmp.eq.s32.totalorder %s32, 0
    %s35 = sadd.s32 %s34, 1
    %s36 = scalar_select %p33, %s34, %s35
    %p39 = pneg %p33
    %p40 = scmp.eq.s32.totalorder %s10, 1
    %p41 = por %p39, %p40
    %p42 = scmp.ne.s32.totalorder %s34, %s37
    %p43 = scmp.eq.s32.totalorder %s10, 0
    %p44 = por %p42, %p43
    %p45 = scmp.ne.s32.totalorder %s34, %s37
    %p46 = scmp.eq.s32.totalorder %s15, 1
    %p47 = por %p45, %p46
    %p48 = scmp.ne.s32.totalorder %s37, %s38
    %p49 = scmp.eq.s32.totalorder %s15, 0
    %p50 = por %p48, %p49
    %p51 = scmp.ne.s32.totalorder %s37, %s38
    %p52 = scmp.eq.s32.totalorder %s16, 1
    %p53 = por %p51, %p52
    %p55 = scmp.ne.s32.totalorder %s38, %s54
    %p56 = scmp.eq.s32.totalorder %s16, 0
    %p57 = por %p55, %p56
    %s58 = ssub.s32 %s17, %s29
    %p59 = scmp.eq.s32.totalorder %s58, 0
    %s61 = sadd.s32 %s60, 1
    %s62 = scalar_select %p59, %s60, %s61
    %p65 = pneg %p59
    %p66 = scmp.eq.s32.totalorder %s10, 1
    %p67 = por %p65, %p66
    %p68 = scmp.ne.s32.totalorder %s60, %s63
    %p69 = scmp.eq.s32.totalorder %s10, 0
    %p70 = por %p68, %p69
    %p71 = scmp.ne.s32.totalorder %s60, %s63
    %p72 = scmp.eq.s32.totalorder %s15, 1
    %p73 = por %p71, %p72
    %p74 = scmp.ne.s32.totalorder %s63, %s64
    %p75 = scmp.eq.s32.totalorder %s15, 0
    %p76 = por %p74, %p75
    %p77 = scmp.ne.s32.totalorder %s63, %s64
    %p78 = scmp.eq.s32.totalorder %s16, 1
    %p79 = por %p77, %p78
    %p81 = scmp.ne.s32.totalorder %s64, %s80
    %p82 = scmp.eq.s32.totalorder %s16, 0
    %p83 = por %p81, %p82
    %s84 = ssub.s32 %s17, %s29
    %p85 = scmp.eq.s32.totalorder %s84, 0
    %s87 = sadd.s32 %s86, 1
    %s88 = scalar_select %p85, %s86, %s87
    %p91 = pneg %p85
    %p92 = scmp.eq.s32.totalorder %s10, 1
    %p93 = por %p91, %p92
    %p94 = scmp.ne.s32.totalorder %s86, %s89
    %p95 = scmp.eq.s32.totalorder %s10, 0
    %p96 = por %p94, %p95
    %p97 = scmp.ne.s32.totalorder %s86, %s89
    %p98 = scmp.eq.s32.totalorder %s15, 1
    %p99 = por %p97, %p98
    %p100 = scmp.ne.s32.totalorder %s89, %s90
    %p101 = scmp.eq.s32.totalorder %s15, 0
    %p102 = por %p100, %p101
    %p103 = scmp.ne.s32.totalorder %s89, %s90
    %p104 = scmp.eq.s32.totalorder %s16, 1
    %p105 = por %p103, %p104
    %p107 = scmp.ne.s32.totalorder %s90, %s106
    %p108 = scmp.eq.s32.totalorder %s16, 0
    %p109 = por %p107, %p108
    %s110 = ssub.s32 %s17, %s29
    %p111 = scmp.eq.s32.totalorder %s110, 0
    %s113 = sadd.s32 %s112, 1
    %s114 = scalar_select %p111, %s112, %s113
    %p117 = pneg %p111
    %p118 = scmp.eq.s32.totalorder %s10, 1
    %p119 = por %p117, %p118
    %p120 = scmp.ne.s32.totalorder %s112, %s115
    %p121 = scmp.eq.s32.totalorder %s10, 0
    %p122 = por %p120, %p121
    %p123 = scmp.ne.s32.totalorder %s112, %s115
    %p124 = scmp.eq.s32.totalorder %s15, 1
    %p125 = por %p123, %p124
    %p126 = scmp.ne.s32.totalorder %s115, %s116
    %p127 = scmp.eq.s32.totalorder %s15, 0
    %p128 = por %p126, %p127
    %p129 = scmp.ne.s32.totalorder %s115, %s116
    %p130 = scmp.eq.s32.totalorder %s16, 1
    %p131 = por %p129, %p130
    %p133 = scmp.ne.s32.totalorder %s116, %s132
    %p134 = scmp.eq.s32.totalorder %s16, 0
    %p135 = por %p133, %p134
    %s136 = ssub.s32 %s17, %s29
    %s137 = ssub.s32 %s18, %s25
    %s138 = sor.u32 %s136, %s137
    %p139 = scmp.eq.s32.totalorder %s138, 0
    %s141 = sadd.s32 %s140, 1
    %s142 = scalar_select %p139, %s140, %s141
    %p145 = pneg %p139
    %p146 = scmp.eq.s32.totalorder %s10, 1
    %p147 = por %p145, %p146
    %p148 = scmp.ne.s32.totalorder %s140, %s143
    %p149 = scmp.eq.s32.totalorder %s10, 0
    %p150 = por %p148, %p149
    %p151 = scmp.ne.s32.totalorder %s140, %s143
    %p152 = scmp.eq.s32.totalorder %s15, 1
    %p153 = por %p151, %p152
    %p154 = scmp.ne.s32.totalorder %s143, %s144
    %p155 = scmp.eq.s32.totalorder %s15, 0
    %p156 = por %p154, %p155
    %p157 = scmp.ne.s32.totalorder %s143, %s144
    %p158 = scmp.eq.s32.totalorder %s16, 1
    %p159 = por %p157, %p158
    %p161 = scmp.ne.s32.totalorder %s144, %s160
    %p162 = scmp.eq.s32.totalorder %s16, 0
    %p163 = por %p161, %p162
    %p164 = scmp.le.s32.totalorder 1, %s10
    %p165 = scmp.lt.s32.totalorder %s10, 3
    %p166 = pnand %p164, %p165
    %p167 = pneg %p166
    // Predicated region
    $region9: #{decoder_gat_layer_forward.20} parent=5 // pred_check
      _
    $region10: #{decoder_gat_layer_forward.20} parent=5 // pred_check_branch
      %169 = sbr.rel (%p166) target = $region12
    $region11: #{decoder_gat_layer_forward.20} parent=5 // pred_region
      %s170 = ssub.s32 %s10, 1
    $region12: #{decoder_gat_layer_forward.20} parent=5 // pred_fallthru
      _
    %p171 = scmp.lt.s32.totalorder %s10, 2
    // Predicated region
    $region13: #{decoder_gat_layer_forward.20} parent=5 // pred_check
      %p172 = pneg %p171
    $region14: #{decoder_gat_layer_forward.20} parent=5 // pred_check_branch
      %174 = sbr.rel (%p172) target = $region16
    $region15: #{decoder_gat_layer_forward.20} parent=5 // pred_region
      // Predicated region
      $region17: #{decoder_gat_layer_forward.20} parent=15 // pred_check
        %p175 = pneg %p44
      $region18: #{decoder_gat_layer_forward.20} parent=15 // pred_check_branch
        %177 = sbr.rel (%p175) target = $region20
      $region19: #{decoder_gat_layer_forward.20} parent=15 // pred_region
        %p178 = scmp.lt.s32.totalorder %s17, 1
        %s179 = scalar_select %p178, %s17, 1
        %p180 = scmp.lt.s32.totalorder %s18, 0
        %s181 = scalar_select %p180, %s18, 0
        %s182 = smul.addr %s179, 2
        %s183 = sadd.s32 %s181, %s182
        %s184 = smul.addr %s183, 8
        %s185 = scalar_lea.vmem %s0, %s184
      $region20: #{decoder_gat_layer_forward.20} parent=15 // pred_fallthru
        _
      // Predicated region
      $region21: #{decoder_gat_layer_forward.20} parent=15 // pred_check
        %p186 = pneg %p70
      $region22: #{decoder_gat_layer_forward.20} parent=15 // pred_check_branch
        %188 = sbr.rel (%p186) target = $region24
      $region23: #{decoder_gat_layer_forward.20} parent=15 // pred_region
        %p189 = scmp.lt.s32.totalorder %s17, 1
        %s190 = scalar_select %p189, %s17, 1
        %s191 = smul.addr %s190, 2
        %s192 = scalar_lea.vmem %s1, %s191
      $region24: #{decoder_gat_layer_forward.20} parent=15 // pred_fallthru
        _
      // Predicated region
      $region25: #{decoder_gat_layer_forward.20} parent=15 // pred_check
        %p193 = pneg %p96
      $region26: #{decoder_gat_layer_forward.20} parent=15 // pred_check_branch
        %195 = sbr.rel (%p193) target = $region28
      $region27: #{decoder_gat_layer_forward.20} parent=15 // pred_region
        %p196 = scmp.lt.s32.totalorder %s17, 1
        %s197 = scalar_select %p196, %s17, 1
        %s198 = smul.addr %s197, 2
        %s199 = smul.addr %s198, 4
        %s200 = scalar_lea.vmem %s2, %s199
      $region28: #{decoder_gat_layer_forward.20} parent=15 // pred_fallthru
        _
      // Predicated region
      $region29: #{decoder_gat_layer_forward.20} parent=15 // pred_check
        %p201 = pneg %p122
      $region30: #{decoder_gat_layer_forward.20} parent=15 // pred_check_branch
        %203 = sbr.rel (%p201) target = $region32
      $region31: #{decoder_gat_layer_forward.20} parent=15 // pred_region
        %p204 = scmp.lt.s32.totalorder %s17, 1
        %s205 = scalar_select %p204, %s17, 1
        %s206 = scalar_lea.vmem %s3, %s205
      $region32: #{decoder_gat_layer_forward.20} parent=15 // pred_fallthru
        _
    $region16: #{decoder_gat_layer_forward.20} parent=5 // pred_fallthru
      _
    %p207 = scmp.le.s32.totalorder 1, %s10
    %p208 = scmp.lt.s32.totalorder %s10, 3
    %p209 = pnand %p207, %p208
    %p210 = pneg %p209
    // Predicated region
    $region33: #{decoder_gat_layer_forward.20} parent=5 // pred_check
      _
    $region34: #{decoder_gat_layer_forward.20} parent=5 // pred_check_branch
      %212 = sbr.rel (%p209) target = $region36
    $region35: #{decoder_gat_layer_forward.20} parent=5 // pred_region
      %s213 = ssub.s32 %s10, 1
      %p214 = scmp.lt.s32.totalorder %s19, 1
      %s215 = scalar_select %p214, %s19, 1
      %p216 = scmp.lt.s32.totalorder %s20, 0
      %s217 = scalar_select %p216, %s20, 0
      %s218 = smul.addr %s215, 2
      %s219 = sadd.s32 %s217, %s218
      %s220 = smul.addr %s219, 8
      %s221 = scalar_lea.vmem %s0, %s220
      %p222 = pneg %p50
      %p223 = pneg %p47
      %p224 = scmp.lt.s32.totalorder %s19, 1
      %s225 = scalar_select %p224, %s19, 1
      %s226 = smul.addr %s225, 2
      %s227 = scalar_lea.vmem %s1, %s226
      %p228 = pneg %p76
      %p229 = pneg %p73
      %p230 = scmp.lt.s32.totalorder %s19, 1
      %s231 = scalar_select %p230, %s19, 1
      %s232 = smul.addr %s231, 2
      %s233 = smul.addr %s232, 4
      %s234 = scalar_lea.vmem %s2, %s233
      %p235 = pneg %p102
      %p236 = pneg %p99
      %p237 = scmp.lt.s32.totalorder %s19, 1
      %s238 = scalar_select %p237, %s19, 1
      %s239 = scalar_lea.vmem %s3, %s238
      %p240 = pneg %p128
      %p241 = pneg %p125
      %p242 = pneg %p156
      %p243 = pneg %p153
      %p244 = scmp.lt.s32.totalorder %s19, 1
      %s245 = scalar_select %p244, %s19, 1
      %p246 = scmp.lt.s32.totalorder %s20, 0
      %s247 = scalar_select %p246, %s20, 0
      %s248 = sadd.s32 %s247, %s245
      %s249 = smul.addr %s248, 8
      %s250 = scalar_lea.vmem %s4, %s249
      %p251 = scmp.lt.s32.totalorder %s19, 1
      %s252 = scalar_select %p251, %s19, 1
      %p253 = scmp.lt.s32.totalorder %s20, 0
      %s254 = scalar_select %p253, %s20, 0
      %s255 = smul.addr %s252, 2
      %s256 = sadd.s32 %s254, %s255
      %s257 = smul.addr %s256, 8
      %s258 = scalar_lea.vmem %s0, %s257
      %p259 = scmp.lt.s32.totalorder %s19, 1
      %s260 = scalar_select %p259, %s19, 1
      %s261 = smul.addr %s260, 2
      %s262 = scalar_lea.vmem %s1, %s261
      %p263 = scmp.lt.s32.totalorder %s19, 1
      %s264 = scalar_select %p263, %s19, 1
      %s265 = smul.addr %s264, 2
      %s266 = smul.addr %s265, 4
      %s267 = scalar_lea.vmem %s2, %s266
      %p268 = scmp.lt.s32.totalorder %s19, 1
      %s269 = scalar_select %p268, %s19, 1
      %s270 = scalar_lea.vmem %s3, %s269
      %p271 = scmp.lt.s32.totalorder %s19, 1
      %s272 = scalar_select %p271, %s19, 1
      %p273 = scmp.lt.s32.totalorder %s20, 0
      %s274 = scalar_select %p273, %s20, 0
      %s275 = sadd.s32 %s274, %s272
      %s276 = smul.addr %s275, 8
      %s277 = scalar_lea.vmem %s4, %s276
      %v279 = vld [vmem:[%s270] sm:$0x1]
      %vm280 = vcmp.gt.f32.partialorder %v279, 0.0
      %v281 = vsel %vm280, -inf, 0.0
      %v282 = vld [vmem:[%s258] sm:$0xff]
      %v283 = vld [vmem:[%s262] sm:$0x1]
      %285 = vset.pattern.permute.xlu0 0
      %286 = vperm.xlu0 %285, %v282
      %v287 = vpop.permute.xlu0 %286
      %v290 = vlaneseq
      %v291 = vshrl.u32 %v290, 7
      %v292 = vsub.s32 0, %v291
      %v293 = vrot.slane %v283, %v292
      %v295 = vadd.f32 %v287, %v293
      %vm296 = vcmp.ge.f32.partialorder %v295, 0.0
      %v297 = vmul.f32 %v295, 0.01
      %v298 = vsel %vm296, %v295, %v297
      %v300 = vlaneseq
      %v301 = vshrl.u32 %v300, 7
      %v302 = vsub.s32 0, %v301
      %v303 = vrot.slane %v281, %v302
      %v305 = vadd.f32 %v298, %v303
      %vm306 = vcmask 64512
      %v307 = vsel %vm306, %v305, -inf
      %308 = vmax.xlane.f32.xlu0 %v307
      %v309 = vpop.xlane.xlu0 %308
      %v310 = vmax.f32 %v309, -1e+30
      %v311 = vsub.f32 %v305, %v310
      %v312 = vmul.f32 %v311, 1.442695
      %v313 = vpow.pop %v312
      %v314 = vsel %vm306, %v313, 0.0
      %315 = vadd.xlane.f32.xlu0 %v314
      %v316 = vpop.xlane.xlu0 %315
      %v317 = vmax.f32 %v316, 1e-30
      %v318 = vrcp.pop %v317
      %v319 = vmul.f32 %v313, %v318
      %v320 = vpack.c.bf16 %v319, %v319
      %v321 = vld [vmem:[%s267] sm:$0xf]
      %v323 = vsel %vm306, %v320, 0
      %vm325 = vcmask 1043456
      %v327 = vsel %vm325, %v321, 0
      %329 = vmatprep.subr.bf16.mxu0 0
      %330 = vmatpush1.bf16.msra.mxu0 0
      %331 = vmatprep.subr.bf16.mxu0 0
      %332 = vmatpush1.bf16.msra.mxu0 0
      %333 = vmatprep.subr.bf16.mxu0 0
      %334 = vmatpush1.bf16.msra.mxu0 0
      %335 = vmatprep.subr.bf16.mxu0 0
      %336 = vmatpush1.bf16.msra.mxu0 0
      %337 = vmatprep.subr.bf16.mxu0 0
      %338 = vmatpush1.bf16.msra.mxu0 0
      %339 = vmatprep.subr.bf16.mxu0 0
      %340 = vmatpush1.bf16.msra.mxu0 0
      %341 = vmatprep.subr.bf16.mxu0 0
      %342 = vmatpush1.bf16.msra.mxu0 0
      %343 = vmatprep.subr.bf16.mxu0 0
      %344 = vmatpush1.bf16.msra.mxu0 %v327
      %345 = vmatprep.subr.bf16.mxu0 0
      %346 = vmatpush2.bf16.msra.mxu0 0
      %347 = vmatprep.subr.bf16.mxu0 0
      %348 = vmatpush2.bf16.msra.mxu0 0
      %349 = vmatprep.subr.bf16.mxu0 0
      %350 = vmatpush2.bf16.msra.mxu0 0
      %351 = vmatprep.subr.bf16.mxu0 0
      %352 = vmatpush2.bf16.msra.mxu0 0
      %353 = vmatprep.subr.bf16.mxu0 0
      %354 = vmatpush2.bf16.msra.mxu0 0
      %355 = vmatprep.subr.bf16.mxu0 0
      %356 = vmatpush2.bf16.msra.mxu0 0
      %357 = vmatprep.subr.bf16.mxu0 0
      %358 = vmatpush2.bf16.msra.mxu0 0
      %359 = vmatprep.subr.bf16.mxu0 0
      %360 = vmatpush2.bf16.msra.mxu0 0
      %361 = vmatprep.mubr.bf16.mxu0 0
      %362 = vmatmul.mubr.bf16.gmra.mxu0 %v323
      %v363 = vpop.f32.mrf.mxu0
      %v364 = vadd.f32 0.0, %v363
      %v365 = vpop.f32.mrf.mxu0
      %v366 = vpop.f32.mrf.mxu0
      %v367 = vpop.f32.mrf.mxu0
      %368 = vdwg.mxu0
      %s369 = scalar_lea.vmem %s258, 8
      %v370 = vld [vmem:[%s369] sm:$0xff]
      %s371 = scalar_lea.vmem %s262, 1
      %v372 = vld [vmem:[%s371] sm:$0x1]
      %374 = vset.pattern.permute.xlu0 0
      %375 = vperm.xlu0 %374, %v370
      %v376 = vpop.permute.xlu0 %375
      %v379 = vlaneseq
      %v380 = vshrl.u32 %v379, 7
      %v381 = vsub.s32 0, %v380
      %v382 = vrot.slane %v372, %v381
      %v384 = vadd.f32 %v376, %v382
      %vm385 = vcmp.ge.f32.partialorder %v384, 0.0
      %v386 = vmul.f32 %v384, 0.01
      %v387 = vsel %vm385, %v384, %v386
      %v388 = vadd.f32 %v387, %v303
      %v389 = vsel %vm306, %v388, -inf
      %390 = vmax.xlane.f32.xlu0 %v389
      %v391 = vpop.xlane.xlu0 %390
      %v392 = vmax.f32 %v391, -1e+30
      %v393 = vsub.f32 %v388, %v392
      %v394 = vmul.f32 %v393, 1.442695
      %v395 = vpow.pop %v394
      %v396 = vsel %vm306, %v395, 0.0
      %397 = vadd.xlane.f32.xlu0 %v396
      %v398 = vpop.xlane.xlu0 %397
      %v399 = vmax.f32 %v398, 1e-30
      %v400 = vrcp.pop %v399
      %v401 = vmul.f32 %v395, %v400
      %v402 = vpack.c.bf16 %v401, %v401
      %s403 = scalar_lea.vmem %s267, 4
      %v404 = vld [vmem:[%s403] sm:$0xf]
      %v406 = vsel %vm306, %v402, 0
      %v409 = vsel %vm325, %v404, 0
      %411 = vmatprep.subr.bf16.mxu0 0
      %412 = vmatpush1.bf16.msra.mxu0 0
      %413 = vmatprep.subr.bf16.mxu0 0
      %414 = vmatpush1.bf16.msra.mxu0 0
      %415 = vmatprep.subr.bf16.mxu0 0
      %416 = vmatpush1.bf16.msra.mxu0 0
      %417 = vmatprep.subr.bf16.mxu0 0
      %418 = vmatpush1.bf16.msra.mxu0 0
      %419 = vmatprep.subr.bf16.mxu0 0
      %420 = vmatpush1.bf16.msra.mxu0 0
      %421 = vmatprep.subr.bf16.mxu0 0
      %422 = vmatpush1.bf16.msra.mxu0 0
      %423 = vmatprep.subr.bf16.mxu0 0
      %424 = vmatpush1.bf16.msra.mxu0 0
      %425 = vmatprep.subr.bf16.mxu0 0
      %426 = vmatpush1.bf16.msra.mxu0 %v409
      %427 = vmatprep.subr.bf16.mxu0 0
      %428 = vmatpush2.bf16.msra.mxu0 0
      %429 = vmatprep.subr.bf16.mxu0 0
      %430 = vmatpush2.bf16.msra.mxu0 0
      %431 = vmatprep.subr.bf16.mxu0 0
      %432 = vmatpush2.bf16.msra.mxu0 0
      %433 = vmatprep.subr.bf16.mxu0 0
      %434 = vmatpush2.bf16.msra.mxu0 0
      %435 = vmatprep.subr.bf16.mxu0 0
      %436 = vmatpush2.bf16.msra.mxu0 0
      %437 = vmatprep.subr.bf16.mxu0 0
      %438 = vmatpush2.bf16.msra.mxu0 0
      %439 = vmatprep.subr.bf16.mxu0 0
      %440 = vmatpush2.bf16.msra.mxu0 0
      %441 = vmatprep.subr.bf16.mxu0 0
      %442 = vmatpush2.bf16.msra.mxu0 0
      %443 = vmatprep.mubr.bf16.mxu0 0
      %444 = vmatmul.mubr.bf16.gmra.mxu0 %v406
      %v445 = vpop.f32.mrf.mxu0
      %v446 = vadd.f32 0.0, %v445
      %v447 = vpop.f32.mrf.mxu0
      %v448 = vpop.f32.mrf.mxu0
      %v449 = vpop.f32.mrf.mxu0
      %450 = vdwg.mxu0
      %452 = vrot.lane.b32.xlu0 %v446, 16
      %v453 = vpop.permute.xlu0 %452
      %vm455 = vcmask 130048
      %v456 = vsel %vm455, %v364, %v453
      %vm457 = vcmask 261120
      %458 = vst.msk [vmem:[%s277] sm:$0xff] %vm457, %v456
      %p459 = scmp.lt.s32.totalorder %s19, 1
      %s460 = scalar_select %p459, %s19, 1
      %p461 = scmp.lt.s32.totalorder %s20, 0
      %s462 = scalar_select %p461, %s20, 0
      %s463 = sadd.s32 %s462, %s460
      %s464 = smul.addr %s463, 8
      %s465 = scalar_lea.vmem %s4, %s464
      // Predicated region
      $region37: #{decoder_gat_layer_forward.20} parent=35 // pred_check
        %p466 = pneg %p153
      $region38: #{decoder_gat_layer_forward.20} parent=35 // pred_check_branch
        %468 = sbr.rel (%p466) target = $region40
      $region39: #{decoder_gat_layer_forward.20} parent=35 // pred_region
        _
      $region40: #{decoder_gat_layer_forward.20} parent=35 // pred_fallthru
        _
    $region36: #{decoder_gat_layer_forward.20} parent=5 // pred_fallthru
      _
    %p469 = scmp.le.s32.totalorder 2, %s10
    // Predicated region
    $region41: #{decoder_gat_layer_forward.20} parent=5 // pred_check
      %p470 = pneg %p469
    $region42: #{decoder_gat_layer_forward.20} parent=5 // pred_check_branch
      %472 = sbr.rel (%p470) target = $region44
    $region43: #{decoder_gat_layer_forward.20} parent=5 // pred_region
      %s473 = ssub.s32 %s10, 2
      // Predicated region
      $region45: #{decoder_gat_layer_forward.20} parent=43 // pred_check
        %p474 = pneg %p159
      $region46: #{decoder_gat_layer_forward.20} parent=43 // pred_check_branch
        %476 = sbr.rel (%p474) target = $region48
      $region47: #{decoder_gat_layer_forward.20} parent=43 // pred_region
        %p477 = scmp.lt.s32.totalorder %s21, 1
        %s478 = scalar_select %p477, %s21, 1
        %p479 = scmp.lt.s32.totalorder %s22, 0
        %s480 = scalar_select %p479, %s22, 0
        %s481 = sadd.s32 %s480, %s478
        %s482 = smul.addr %s481, 8
        %s483 = scalar_lea.vmem %s4, %s482
      $region48: #{decoder_gat_layer_forward.20} parent=43 // pred_fallthru
        _
    $region44: #{decoder_gat_layer_forward.20} parent=5 // pred_fallthru
      _
  $region6: #{decoder_gat_layer_forward.20} parent=0 // loop_footer
    %s14 = sadd.s32 1, %s10
  $region7: #{decoder_gat_layer_forward.20} parent=0 // loop_footer_branch
    %9 = sbr.rel target = $region3
  $region8: #{decoder_gat_layer_forward.20} parent=0 // loop_exit
    _

// kernel: decoder_gat_layer_forward.24
$region0: #{decoder_gat_layer_forward.24}
  #allocation0 [shape = 'u32[]', space=smem, size = 0x4, offset = 0x4, fixed_abs, tag = 'smem constant byte address 0x4 - core index']
  #allocation1 [shape = 'u32[144,128]{1,0:T(1,128)}', space=vmem, size = 0x12000, scoped, tag = 'internal scratch']
  %s0 = inlined_call_operand.vmem [shape: f32[16,64], index: 0, kind: input, shape index: {}]
  %s1 = inlined_call_operand.vmem [shape: bf16[64,32], index: 1, kind: input, shape index: {}]
  %s2 = inlined_call_operand.vmem [shape: f32[1,32], index: 2, kind: input, shape index: {}]
  %s3 = inlined_call_operand.vmem [shape: f32[16,32], index: 3, kind: output, shape index: {}]
  %s4 = sld [smem:[#allocation0]]
  $region22: #{decoder_gat_layer_forward.24} parent=0
    _
  %s6 = ssub.s32 1, %s4
  %s7 = scalar_select 0, %s6, %s4
  // Predicated region
  $region2: #{decoder_gat_layer_forward.24} parent=0 // pred_check
    _
  $region3: #{decoder_gat_layer_forward.24} parent=0 // pred_check_branch
    %9 = sbr.rel (0) target = $region5
  $region4: #{decoder_gat_layer_forward.24} parent=0 // pred_region
    _
  $region5: #{decoder_gat_layer_forward.24} parent=0 // pred_fallthru
    _
  // Predicated region
  $region6: #{decoder_gat_layer_forward.24} parent=0 // pred_check
    _
  $region7: #{decoder_gat_layer_forward.24} parent=0 // pred_check_branch
    %11 = sbr.rel (0) target = $region9
  $region8: #{decoder_gat_layer_forward.24} parent=0 // pred_region
    _
  $region9: #{decoder_gat_layer_forward.24} parent=0 // pred_fallthru
    _
  // Predicated region
  $region10: #{decoder_gat_layer_forward.24} parent=0 // pred_check
    _
  $region11: #{decoder_gat_layer_forward.24} parent=0 // pred_check_branch
    %13 = sbr.rel (0) target = $region13
  $region12: #{decoder_gat_layer_forward.24} parent=0 // pred_region
    _
  $region13: #{decoder_gat_layer_forward.24} parent=0 // pred_fallthru
    _
  %v15 = vld [vmem:[%s0] sm:$0xff]
  %v16 = vld [vmem:[%s0 + $0x8] sm:$0xff]
  %v17 = vpack.c.bf16 %v16, %v15
  %v18 = vld [vmem:[%s1] sm:$0xf]
  %v19 = vld [vmem:[%s1 + $0x4] sm:$0xf]
  %v20 = vld [vmem:[%s1 + $0x8] sm:$0xf]
  %v21 = vld [vmem:[%s1 + $0xc] sm:$0xf]
  %v22 = vld [vmem:[%s1 + $0x10] sm:$0xf]
  %v23 = vld [vmem:[%s1 + $0x14] sm:$0xf]
  %v24 = vld [vmem:[%s1 + $0x18] sm:$0xf]
  %v25 = vld [vmem:[%s1 + $0x1c] sm:$0xf]
  %v26 = vld [vmem:[%s2] sm:$0x1]
  %v28 = vlaneseq
  %v29 = vshrl.u32 %v28, 7
  %v30 = vsub.s32 0, %v29
  %v31 = vrot.slane %v26, %v30
  %v41 = vunpack.c.l.b16 %v18
  %v42 = vunpack.c.l.b16 %v19
  %v43 = vunpack.c.l.b16 %v20
  %v44 = vunpack.c.l.b16 %v21
  %v45 = vunpack.c.l.b16 %v22
  %v46 = vunpack.c.l.b16 %v23
  %v47 = vunpack.c.l.b16 %v24
  %v48 = vunpack.c.l.b16 %v25
  %v49 = vpack.c.b16 %v42, %v41
  %v50 = vpack.c.b16 %v44, %v43
  %v51 = vpack.c.b16 %v46, %v45
  %v52 = vpack.c.b16 %v48, %v47
  %vm57 = vcmask 523264
  %v59 = vsel %vm57, %v17, 0
  %61 = vmatprep.subr.bf16.mxu0 0
  %62 = vmatpush1.bf16.msra.mxu0 0
  %63 = vmatprep.subr.bf16.mxu0 0
  %64 = vmatpush1.bf16.msra.mxu0 0
  %65 = vmatprep.subr.bf16.mxu0 0
  %66 = vmatpush1.bf16.msra.mxu0 0
  %67 = vmatprep.subr.bf16.mxu0 0
  %68 = vmatpush1.bf16.msra.mxu0 0
  %69 = vmatprep.subr.bf16.mxu0 0
  %70 = vmatpush1.bf16.msra.mxu0 %v52
  %71 = vmatprep.subr.bf16.mxu0 0
  %72 = vmatpush1.bf16.msra.mxu0 %v51
  %73 = vmatprep.subr.bf16.mxu0 0
  %74 = vmatpush1.bf16.msra.mxu0 %v50
  %75 = vmatprep.subr.bf16.mxu0 0
  %76 = vmatpush1.bf16.msra.mxu0 %v49
  %77 = vmatprep.subr.bf16.mxu0 0
  %78 = vmatpush2.bf16.msra.mxu0 0
  %79 = vmatprep.subr.bf16.mxu0 0
  %80 = vmatpush2.bf16.msra.mxu0 0
  %81 = vmatprep.subr.bf16.mxu0 0
  %82 = vmatpush2.bf16.msra.mxu0 0
  %83 = vmatprep.subr.bf16.mxu0 0
  %84 = vmatpush2.bf16.msra.mxu0 0
  %85 = vmatprep.subr.bf16.mxu0 0
  %86 = vmatpush2.bf16.msra.mxu0 0
  %87 = vmatprep.subr.bf16.mxu0 0
  %88 = vmatpush2.bf16.msra.mxu0 0
  %89 = vmatprep.subr.bf16.mxu0 0
  %90 = vmatpush2.bf16.msra.mxu0 0
  %91 = vmatprep.subr.bf16.mxu0 0
  %92 = vmatpush2.bf16.msra.mxu0 0
  %93 = vmatprep.mubr.bf16.mxu0 0
  %94 = vmatmul.mubr.bf16.gmra.mxu0 %v59
  %v95 = vpop.f32.mrf.mxu0
  %v96 = vadd.f32 %v31, %v95
  %v97 = vpop.f32.mrf.mxu0
  %v98 = vpop.f32.mrf.mxu0
  %v99 = vadd.f32 %v31, %v98
  %v100 = vpop.f32.mrf.mxu0
  %101 = vdwg.mxu0
  %vm102 = vcmask 261120
  %103 = vst.msk [vmem:[%s3] sm:$0xff] %vm102, %v96
  %104 = vst.msk [vmem:[%s3 + $0x8] sm:$0xff] %vm102, %v99
  // Predicated region
  $region14: #{decoder_gat_layer_forward.24} parent=0 // pred_check
    _
  $region15: #{decoder_gat_layer_forward.24} parent=0 // pred_check_branch
    %106 = sbr.rel (0) target = $region17
  $region16: #{decoder_gat_layer_forward.24} parent=0 // pred_region
    _
  $region17: #{decoder_gat_layer_forward.24} parent=0 // pred_fallthru
    _
  // Predicated region
  $region18: #{decoder_gat_layer_forward.24} parent=0 // pred_check
    _
  $region19: #{decoder_gat_layer_forward.24} parent=0 // pred_check_branch
    %108 = sbr.rel (0) target = $region21
  $region20: #{decoder_gat_layer_forward.24} parent=0 // pred_region
    _
  $region21: #{decoder_gat_layer_forward.24} parent=0 // pred_fallthru
    _

// kernel: decoder_gat_layer_forward.25
$region0: #{decoder_gat_layer_forward.25}
  #allocation0 [shape = 'u32[]', space=smem, size = 0x4, offset = 0x4, fixed_abs, tag = 'smem constant byte address 0x4 - core index']
  #allocation1 [shape = 'u32[144,128]{1,0:T(1,128)}', space=vmem, size = 0x12000, scoped, tag = 'internal scratch']
  %s0 = inlined_call_operand.vmem [shape: f32[16,32], index: 0, kind: input, shape index: {}]
  %s1 = inlined_call_operand.vmem [shape: f32[16,32], index: 1, kind: input, shape index: {}]
  %s2 = inlined_call_operand.vmem [shape: f32[1,32], index: 2, kind: input, shape index: {}]
  %s3 = inlined_call_operand.vmem [shape: f32[1,32], index: 3, kind: input, shape index: {}]
  %s4 = inlined_call_operand.hbm [shape: f32[16,32], index: 4, kind: output, shape index: {}]
  %s5 = sld [smem:[#allocation0]]
  $region26: #{decoder_gat_layer_forward.25} parent=0
    _
  %s7 = ssub.s32 1, %s5
  %s8 = scalar_select 0, %s7, %s5
  $region1: #{decoder_gat_layer_forward.25} parent=0
    #allocation2 [shape = 'u8[8192]{0}', space=vmem, size = 0x2000, scoped, tag = 'output window, operand 0, single buffered']
    #allocation3 [shape = 's32[1]{0}', space=sflag, size = 0x4, scoped, tag = 'scoped memory for decoder_gat_layer_forward.25']
    %9 = vsyncpa [#allocation3], 0
    // Predicated region
    $region2: #{decoder_gat_layer_forward.25} parent=1 // pred_check
      _
    $region3: #{decoder_gat_layer_forward.25} parent=1 // pred_check_branch
      %11 = sbr.rel (0) target = $region5
    $region4: #{decoder_gat_layer_forward.25} parent=1 // pred_region
      _
    $region5: #{decoder_gat_layer_forward.25} parent=1 // pred_fallthru
      _
    // Predicated region
    $region6: #{decoder_gat_layer_forward.25} parent=1 // pred_check
      _
    $region7: #{decoder_gat_layer_forward.25} parent=1 // pred_check_branch
      %13 = sbr.rel (0) target = $region9
    $region8: #{decoder_gat_layer_forward.25} parent=1 // pred_region
      _
    $region9: #{decoder_gat_layer_forward.25} parent=1 // pred_fallthru
      _
    // Predicated region
    $region10: #{decoder_gat_layer_forward.25} parent=1 // pred_check
      _
    $region11: #{decoder_gat_layer_forward.25} parent=1 // pred_check_branch
      %15 = sbr.rel (0) target = $region13
    $region12: #{decoder_gat_layer_forward.25} parent=1 // pred_region
      _
    $region13: #{decoder_gat_layer_forward.25} parent=1 // pred_fallthru
      _
    // Predicated region
    $region14: #{decoder_gat_layer_forward.25} parent=1 // pred_check
      _
    $region15: #{decoder_gat_layer_forward.25} parent=1 // pred_check_branch
      %17 = sbr.rel (0) target = $region17
    $region16: #{decoder_gat_layer_forward.25} parent=1 // pred_region
      _
    $region17: #{decoder_gat_layer_forward.25} parent=1 // pred_fallthru
      _
    %v18 = vld [vmem:[%s0] sm:$0xff]
    %v19 = vld [vmem:[%s0 + $0x8] sm:$0xff]
    %v20 = vld [vmem:[%s1] sm:$0xff]
    %v21 = vld [vmem:[%s1 + $0x8] sm:$0xff]
    %v22 = vadd.f32 %v18, %v20
    %v23 = vadd.f32 %v19, %v21
    %vm24 = vcmask 261120
    %v25 = vsel %vm24, %v22, 0.0
    %26 = vadd.xlane.f32.xlu0 %v25
    %v27 = vpop.xlane.xlu0 %26
    %v28 = vsel %vm24, %v23, 0.0
    %29 = vadd.xlane.f32.xlu0 %v28
    %v30 = vpop.xlane.xlu0 %29
    %v31 = vrcp.pop 32.0
    %v32 = vmul.f32 %v27, %v31
    %v33 = vmul.f32 %v30, %v31
    %v34 = vsub.f32 %v22, %v32
    %v35 = vsub.f32 %v23, %v33
    %v36 = vmul.f32 %v34, %v34
    %v37 = vmul.f32 %v35, %v35
    %v38 = vsel %vm24, %v36, 0.0
    %39 = vadd.xlane.f32.xlu0 %v38
    %v40 = vpop.xlane.xlu0 %39
    %v41 = vsel %vm24, %v37, 0.0
    %42 = vadd.xlane.f32.xlu0 %v41
    %v43 = vpop.xlane.xlu0 %42
    %v44 = vmul.f32 %v40, %v31
    %v45 = vmul.f32 %v43, %v31
    %v46 = vadd.f32 %v44, 1e-05
    %v47 = vadd.f32 %v45, 1e-05
    %v48 = vrsqrt.pop %v46
    %v49 = vrsqrt.pop %v47
    %v50 = vmul.f32 %v34, %v48
    %v51 = vmul.f32 %v35, %v49
    %v52 = vld [vmem:[%s2] sm:$0x1]
    %v54 = vlaneseq
    %v55 = vshrl.u32 %v54, 7
    %v56 = vsub.s32 0, %v55
    %v57 = vrot.slane %v52, %v56
    %v59 = vmul.f32 %v50, %v57
    %v60 = vmul.f32 %v51, %v57
    %v61 = vld [vmem:[%s3] sm:$0x1]
    %v63 = vlaneseq
    %v64 = vshrl.u32 %v63, 7
    %v65 = vsub.s32 0, %v64
    %v66 = vrot.slane %v61, %v65
    %v68 = vadd.f32 %v59, %v66
    %v69 = vadd.f32 %v60, %v66
    %70 = vst.msk [vmem:[#allocation2] sm:$0xff] %vm24, %v68
    %71 = vst.msk [vmem:[#allocation2 + $0x8] sm:$0xff] %vm24, %v69
    // Predicated region
    $region18: #{decoder_gat_layer_forward.25} parent=1 // pred_check
      _
    $region19: #{decoder_gat_layer_forward.25} parent=1 // pred_check_branch
      %73 = sbr.rel (0) target = $region21
    $region20: #{decoder_gat_layer_forward.25} parent=1 // pred_region
      %s75 = ssub.s32 256, 256
      %76 = vsyncadd [#allocation3], %s75
      %s77 = sshll.u32 [#allocation2], 4
      %s78 = int_to_ptr.vmem [resolvable:$true] %s77
      %83 = dma.vmem_to_hbm [thread:$0]  %s78, 256, %s4, [#allocation3], 128, 128, 8
    $region21: #{decoder_gat_layer_forward.25} parent=1 // pred_fallthru
      _
    // Predicated region
    $region22: #{decoder_gat_layer_forward.25} parent=1 // pred_check
      _
    $region23: #{decoder_gat_layer_forward.25} parent=1 // pred_check_branch
      %85 = sbr.rel (0) target = $region25
    $region24: #{decoder_gat_layer_forward.25} parent=1 // pred_region
      %86 = dma.done [#allocation3], 256
    $region25: #{decoder_gat_layer_forward.25} parent=1 // pred_fallthru
      _
    %87 = vsyncpa [#allocation3], 1

</llo_original>
